<compile_context>
chip_gen: v7x
topology: tpu7x:2x2x1
jax: 0.10.0
libtpu: 0.0.40
codegen_flags: <defaults>
</compile_context>

<pallas_src>
import math

import jax
import jax.numpy as jnp
from jax.experimental import pallas as pl
from jax.experimental.pallas import tpu as pltpu


# ----------------------------- tiling heuristics -----------------------------

def _chunk_size(T, cap=32):
    """Largest divisor of T that is <= cap (bounds per-chunk VMEM footprint)."""
    if T <= cap:
        return T
    for c in range(cap, 0, -1):
        if T % c == 0:
            return c
    return 1


def _batch_tile(B, cap=32):
    """Multiple-of-8 divisor of B when possible ((8,128) block rule), else full B."""
    if B % 8 != 0:
        return B          # block dim equal to full array dim is always legal
    bt = 8
    while bt * 2 <= cap and B % (bt * 2) == 0:
        bt *= 2
    return bt


# ---------------- fused projection + bidirectional GRU layer kernel ----------------

def _make_bigru_kernel(n_in, C, bt, H, f_in, unroll):
    """n_in: number of input feature arrays (1 for layer 0, 2 for later layers)."""
    G = 3 * H

    def kernel(*refs):
        x_fwd = refs[:n_in]              # forward-time chunk stream(s)
        x_bwd = refs[n_in:2 * n_in]      # reverse-time chunk stream(s)
        (wih_f, wih_b, bih_f, bih_b, whh, bhh,
         out_f, out_b, h_ref, gif, gib) = refs[2 * n_in:]

        c = pl.program_id(1)             # T-chunk index (innermost, sequential)

        # New batch tile: zero the carried hidden state [h_f | h_b].
        @pl.when(c == 0)
        def _():
            h_ref[...] = jnp.zeros_like(h_ref)

        # ---- chunk input projection on the MXU (gi never round-trips HBM) ----
        def gates(x_refs, w, b):
            if n_in == 1:
                x = x_refs[0][...]
            else:
                # concat prev-layer fwd/bwd halves once per chunk (in VMEM, not HBM)
                x = jnp.concatenate([r[...] for r in x_refs], axis=-1)
            x2 = x.reshape(C * bt, f_in)
            g = jnp.dot(x2, w[...], preferred_element_type=jnp.float32) + b[...]
            return g.reshape(C, bt, G)

        gif[...] = gates(x_fwd, wih_f, bih_f)   # fwd gates, chunk time order
        gib[...] = gates(x_bwd, wih_b, bih_b)   # bwd gates, chunk (nc-1-c) time order

        # Resident recurrent weights (block-diag over the two directions).
        whh_v = whh[...]
        bhh_v = bhh[...]

        def cell(gi, gh, h):
            r = jax.nn.sigmoid(gi[:, :H] + gh[:, :H])
            z = jax.nn.sigmoid(gi[:, H:2 * H] + gh[:, H:2 * H])
            n = jnp.tanh(gi[:, 2 * H:] + r * gh[:, 2 * H:])
            return n + z * (h - n)               # == (1 - z) * n + z * h

        def step(k, h_cat):
            # ONE fused MXU matmul covers both directions per serial step.
            gh = jnp.dot(h_cat, whh_v, preferred_element_type=jnp.float32) + bhh_v
            h_f = cell(gif[k], gh[:, :G], h_cat[:, :H])
            h_b = cell(gib[C - 1 - k], gh[:, G:], h_cat[:, H:])
            out_f[k] = h_f.astype(out_f.dtype)
            out_b[C - 1 - k] = h_b.astype(out_b.dtype)   # stored in forward time order
            return jnp.concatenate([h_f, h_b], axis=-1)

        # TODO(synk): batch per-step stores into (8, .) slabs when B_tile < 8.
        h_ref[...] = jax.lax.fori_loop(0, C, step, h_ref[...], unroll=unroll)

    return kernel


def bigru_layer(inputs, wih_f, wih_b, bih_f, bih_b, whh_cat, bhh_cat):
    """One bidirectional GRU layer with the input projection fused in.

    inputs: tuple of time-major arrays — (x,) for layer 0 (shape (T,B,indim)) or
            (prev_f, prev_b) for later layers (each (T,B,H)).
    Returns (out_f, out_b), each (T, B, H), both in forward time order."""
    T, B = inputs[0].shape[:2]
    f_in = sum(a.shape[-1] for a in inputs)
    H = whh_cat.shape[0] // 2
    G = 3 * H
    n_in = len(inputs)

    C = _chunk_size(T)
    bt = _batch_tile(B)
    nc, nb = T // C, B // bt
    unroll = True if C <= 8 else 8

    def fwd_idx(b, c):
        return (c, b, 0)

    def bwd_idx(b, c, _nc=nc):
        return (_nc - 1 - c, b, 0)

    const2 = lambda b, c: (0, 0)

    x_specs = ([pl.BlockSpec((C, bt, a.shape[-1]), fwd_idx) for a in inputs]
               + [pl.BlockSpec((C, bt, a.shape[-1]), bwd_idx) for a in inputs])
    w_specs = [
        pl.BlockSpec((f_in, G), const2), pl.BlockSpec((f_in, G), const2),
        pl.BlockSpec((1, G), const2), pl.BlockSpec((1, G), const2),
        pl.BlockSpec((2 * H, 2 * G), const2), pl.BlockSpec((1, 2 * G), const2),
    ]
    out_specs = (pl.BlockSpec((C, bt, H), fwd_idx),
                 pl.BlockSpec((C, bt, H), bwd_idx))

    # Rough VMEM need; only raise the scoped limit when necessary (v5e default is 16 MiB),
    # capped below v7x's 64 MiB physical VMEM.
    vmem_need = 4 * (2 * 2 * sum(C * bt * a.shape[-1] for a in inputs)   # inputs, dbl-buf
                     + 2 * 2 * 2 * C * bt * H                            # outputs, dbl-buf
                     + 2 * (2 * f_in * G + 2 * H * 2 * G + 4 * G)        # resident weights
                     + bt * 2 * H + 2 * C * bt * G)                      # scratch
    vmem_limit = None if vmem_need < 12 * 2 ** 20 else min(2 * vmem_need, 48 * 2 ** 20)

    flops = (2 * T * B * f_in * 2 * G          # fused input projection (both directions)
             + 2 * T * B * 2 * H * 2 * G       # recurrent matmul per step
             + 30 * T * B * 2 * H)             # gate elementwise
    trans = 2 * T * B * G
    bytes_acc = 4 * (2 * T * B * f_in + 2 * T * B * H
                     + 2 * f_in * G + 4 * H * G + 6 * G)

    return pl.pallas_call(
        _make_bigru_kernel(n_in, C, bt, H, f_in, unroll),
        out_shape=(jax.ShapeDtypeStruct((T, B, H), jnp.float32),
                   jax.ShapeDtypeStruct((T, B, H), jnp.float32)),
        grid=(nb, nc),
        in_specs=x_specs + w_specs,
        out_specs=out_specs,
        scratch_shapes=[
            pltpu.VMEM((bt, 2 * H), jnp.float32),   # carried hidden  [h_f | h_b]
            pltpu.VMEM((C, bt, G), jnp.float32),    # fwd chunk input gates
            pltpu.VMEM((C, bt, G), jnp.float32),    # bwd chunk input gates
        ],
        compiler_params=pltpu.CompilerParams(
            dimension_semantics=("parallel", "arbitrary"),
            vmem_limit_bytes=vmem_limit),
        cost_estimate=pl.CostEstimate(
            flops=int(flops), transcendentals=int(trans), bytes_accessed=int(bytes_acc)),
    )(*(list(inputs) + list(inputs)),
      wih_f, wih_b, bih_f.reshape(1, G), bih_b.reshape(1, G),
      whh_cat, bhh_cat.reshape(1, 2 * G))


# --------------------------- parameter construction ----------------------------

def init_params(key, indim, hdim, nlayers):
    h_hdim = hdim // 2  # bidirectional=True

    def uniform(k, shape, bound):
        return jax.random.uniform(k, shape, jnp.float32, -bound, bound)

    k_emb_w, k_emb_b, key = jax.random.split(key, 3)
    eb = 1.0 / math.sqrt(indim)
    params = {
        # stored transposed: (indim, hdim) so kernels do x @ W
        "emb_w": uniform(k_emb_w, (indim, hdim), eb),
        "emb_b": uniform(k_emb_b, (hdim,), eb),
        "gru": [],
    }

    gb = 1.0 / math.sqrt(h_hdim)
    for layer in range(nlayers):
        in_l = hdim if layer == 0 else 2 * h_hdim  # == hdim in both cases
        layer_p = {}
        for direction in ("fwd", "bwd"):
            key, k1, k2, k3, k4 = jax.random.split(key, 5)
            layer_p[direction] = (
                uniform(k1, (in_l, 3 * h_hdim), gb),    # w_ih (transposed)
                uniform(k2, (h_hdim, 3 * h_hdim), gb),  # w_hh (transposed)
                uniform(k3, (3 * h_hdim,), gb),         # b_ih
                uniform(k4, (3 * h_hdim,), gb),         # b_hh
            )
        params["gru"].append(layer_p)
    return params


# ------------------------------ module forward ---------------------------------

def generic_rnn_forward(params, x):
    """x: (B, T, indim)  ->  (out (B, T, hdim), h_n (nlayers*2, B, hdim//2))."""
    B, T, indim = x.shape
    hdim = params["emb_w"].shape[1]
    H = hdim // 2

    # single boundary transpose to time-major (indim is tiny, this is cheap)
    x_tm = jnp.transpose(x, (1, 0, 2))   # (T, B, indim)

    h_n = []
    prev = (x_tm,)
    out_f = out_b = None
    for layer_idx, layer_p in enumerate(params["gru"]):
        wih_f, whh_f, bih_f, bhh_f = layer_p["fwd"]
        wih_b, whh_b, bih_b, bhh_b = layer_p["bwd"]

        if layer_idx == 0:
            # Fold embedding Linear into the layer-0 projection (exact algebra):
            # (x @ We + be) @ Wih + bih == x @ (We @ Wih) + (be @ Wih + bih)
            # TODO(synk): changes the fp rounding path vs nn.Linear->nn.GRU (same math).
            bih_f = params["emb_b"] @ wih_f + bih_f
            bih_b = params["emb_b"] @ wih_b + bih_b
            wih_f = params["emb_w"] @ wih_f
            wih_b = params["emb_w"] @ wih_b

        # Block-diagonal recurrent weight so ONE matmul per step serves both directions.
        zeros = jnp.zeros((H, 3 * H), jnp.float32)
        whh_cat = jnp.block([[whh_f, zeros], [zeros, whh_b]])   # (2H, 6H)
        bhh_cat = jnp.concatenate([bhh_f, bhh_b])               # (6H,)

        out_f, out_b = bigru_layer(prev, wih_f, wih_b, bih_f, bih_b, whh_cat, bhh_cat)
        h_n.append(out_f[-1])   # forward final hidden
        h_n.append(out_b[0])    # backward final hidden (last processed step)
        prev = (out_f, out_b)   # fwd/bwd halves stay separate (no per-layer HBM concat)

    out = jnp.concatenate([out_f, out_b], axis=-1)   # (T, B, hdim), once at the boundary
    out = jnp.transpose(out, (1, 0, 2))              # batch_first
    return out, jnp.stack(h_n, axis=0)


# ----------------------------- pure-JAX reference ------------------------------

def _ref_gru_direction(x_seq, w_ih, w_hh, b_ih, b_hh):
    H = w_hh.shape[0]

    def step(h, x_t):
        gi = x_t @ w_ih + b_ih
        gh = h @ w_hh + b_hh
        r = jax.nn.sigmoid(gi[:, :H] + gh[:, :H])
        z = jax.nn.sigmoid(gi[:, H:2 * H] + gh[:, H:2 * H])
        n = jnp.tanh(gi[:, 2 * H:] + r * gh[:, 2 * H:])
        h_new = (1.0 - z) * n + z * h
        return h_new, h_new

    h0 = jnp.zeros((x_seq.shape[1], H), jnp.float32)
    _, outs = jax.lax.scan(step, h0, x_seq)
    return outs


def ref_forward(params, x):
    B, T, indim = x.shape
    hdim = params["emb_w"].shape[1]
    emb = x.reshape(B * T, indim) @ params["emb_w"] + params["emb_b"]
    seq = jnp.transpose(emb.reshape(B, T, hdim), (1, 0, 2))
    h_n = []
    for layer_p in params["gru"]:
        out_f = _ref_gru_direction(seq, *layer_p["fwd"])
        out_b = _ref_gru_direction(seq[::-1], *layer_p["bwd"])[::-1]
        h_n.append(out_f[-1])
        h_n.append(out_b[0])
        seq = jnp.concatenate([out_f, out_b], axis=-1)
    return jnp.transpose(seq, (1, 0, 2)), jnp.stack(h_n, axis=0)


# ----------------------------------- main ---------------------------------------

if __name__ == "__main__":
    INDIM, HDIM, NLAYERS = 4, 32, 2
    B, T = 2, 8

    key = jax.random.PRNGKey(0)
    k_params, k_x = jax.random.split(key)
    params = init_params(k_params, INDIM, HDIM, NLAYERS)
    x = jax.random.normal(k_x, (B, T, INDIM), jnp.float32)

    forward = jax.jit(generic_rnn_forward)
    out, h_n = forward(params, x)
    out, h_n = jax.block_until_ready(out), jax.block_until_ready(h_n)

    assert out.shape == (B, T, HDIM)
    assert h_n.shape == (NLAYERS * 2, B, HDIM // 2)

    ref_out, ref_hn = ref_forward(params, x)
    assert jnp.allclose(out, ref_out, rtol=3e-2, atol=3e-2)
    assert jnp.allclose(h_n, ref_hn, rtol=3e-2, atol=3e-2)

    print("KERNEL_OK")
</pallas_src>

<mosaic_0001>
module attributes {stable_mosaic.version = 11 : i64} {
  func.func @kernel(%arg0: i32, %arg1: i32, %arg2: memref<8x2x4xf32, #tpu.memory_space<vmem>>, %arg3: memref<8x2x4xf32, #tpu.memory_space<vmem>>, %arg4: memref<4x48xf32, #tpu.memory_space<vmem>>, %arg5: memref<4x48xf32, #tpu.memory_space<vmem>>, %arg6: memref<1x48xf32, #tpu.memory_space<vmem>>, %arg7: memref<1x48xf32, #tpu.memory_space<vmem>>, %arg8: memref<32x96xf32, #tpu.memory_space<vmem>>, %arg9: memref<1x96xf32, #tpu.memory_space<vmem>>, %arg10: memref<8x2x16xf32, #tpu.memory_space<vmem>>, %arg11: memref<8x2x16xf32, #tpu.memory_space<vmem>>, %arg12: memref<2x32xf32, #tpu.memory_space<vmem>>, %arg13: memref<8x2x48xf32, #tpu.memory_space<vmem>>, %arg14: memref<8x2x48xf32, #tpu.memory_space<vmem>>) attributes {dimension_semantics = [#tpu.dimension_semantics<parallel>, #tpu.dimension_semantics<arbitrary>], iteration_bounds = array<i64: 1, 1>, scalar_prefetch = 0 : i64, scratch_operands = 3 : i64, tpu.core_type = #tpu.core_type<tc>, window_params = [{transform_indices = @transform_0, window_bounds = array<i64: 8, 2, 4>}, {transform_indices = @transform_1, window_bounds = array<i64: 8, 2, 4>}, {pipeline_mode = #tpu.pipeline_mode<synchronous>, transform_indices = @transform_2, window_bounds = array<i64: 4, 48>}, {pipeline_mode = #tpu.pipeline_mode<synchronous>, transform_indices = @transform_3, window_bounds = array<i64: 4, 48>}, {pipeline_mode = #tpu.pipeline_mode<synchronous>, transform_indices = @transform_4, window_bounds = array<i64: 1, 48>}, {pipeline_mode = #tpu.pipeline_mode<synchronous>, transform_indices = @transform_5, window_bounds = array<i64: 1, 48>}, {pipeline_mode = #tpu.pipeline_mode<synchronous>, transform_indices = @transform_6, window_bounds = array<i64: 32, 96>}, {pipeline_mode = #tpu.pipeline_mode<synchronous>, transform_indices = @transform_7, window_bounds = array<i64: 1, 96>}, {transform_indices = @transform_8, window_bounds = array<i64: 8, 2, 16>}, {transform_indices = @transform_9, window_bounds = array<i64: 8, 2, 16>}]} {
    %c0_i32 = arith.constant 0 : i32
    %0 = arith.cmpi eq, %arg1, %c0_i32 : i32
    %1 = arith.extui %0 : i1 to i32
    %c0_i32_0 = arith.constant 0 : i32
    %2 = arith.cmpi ne, %1, %c0_i32_0 : i32
    scf.if %2 {
      %cst_150 = arith.constant 0.000000e+00 : f32
      %601 = vector.broadcast %cst_150 : f32 to vector<2x32xf32>
      %c0_151 = arith.constant 0 : index
      %c0_152 = arith.constant 0 : index
      %602 = vector.load %arg12[%c0_151, %c0_152] : memref<2x32xf32, #tpu.memory_space<vmem>>, vector<2x32xf32>
      tpu.vector_store %arg12[%c0_151, %c0_152], %601 {strides = array<i32>} : memref<2x32xf32, #tpu.memory_space<vmem>>, vector<2x32xf32>,
    } else {
    }
    %c0 = arith.constant 0 : index
    %c0_1 = arith.constant 0 : index
    %c0_2 = arith.constant 0 : index
    %3 = vector.load %arg2[%c0, %c0_1, %c0_2] : memref<8x2x4xf32, #tpu.memory_space<vmem>>, vector<8x2x4xf32>
    %4 = vector.shape_cast %3 : vector<8x2x4xf32> to vector<16x4xf32>
    %c0_3 = arith.constant 0 : index
    %c0_4 = arith.constant 0 : index
    %5 = vector.load %arg4[%c0_3, %c0_4] : memref<4x48xf32, #tpu.memory_space<vmem>>, vector<4x48xf32>
    %cst = arith.constant dense<0.000000e+00> : vector<16x48xf32>
    %6 = tpu.matmul %4, %5, %cst {dimension_numbers = #tpu.dot_dimension_numbers<[1], [0], [0], [1], [0, 0, 1, 1], [], []>} : vector<16x4xf32>, vector<4x48xf32>, vector<16x48xf32> -> vector<16x48xf32>
    %c0_5 = arith.constant 0 : index
    %c0_6 = arith.constant 0 : index
    %7 = vector.load %arg6[%c0_5, %c0_6] : memref<1x48xf32, #tpu.memory_space<vmem>>, vector<1x48xf32>
    %8 = vector.broadcast %7 : vector<1x48xf32> to vector<16x48xf32>
    %9 = arith.addf %6, %8 : vector<16x48xf32>
    %10 = vector.shape_cast %9 : vector<16x48xf32> to vector<8x2x48xf32>
    %c0_7 = arith.constant 0 : index
    %c0_8 = arith.constant 0 : index
    %c0_9 = arith.constant 0 : index
    %11 = vector.load %arg13[%c0_7, %c0_8, %c0_9] : memref<8x2x48xf32, #tpu.memory_space<vmem>>, vector<8x2x48xf32>
    tpu.vector_store %arg13[%c0_7, %c0_8, %c0_9], %10 {strides = array<i32>} : memref<8x2x48xf32, #tpu.memory_space<vmem>>, vector<8x2x48xf32>,
    %c0_10 = arith.constant 0 : index
    %c0_11 = arith.constant 0 : index
    %c0_12 = arith.constant 0 : index
    %12 = vector.load %arg3[%c0_10, %c0_11, %c0_12] : memref<8x2x4xf32, #tpu.memory_space<vmem>>, vector<8x2x4xf32>
    %13 = vector.shape_cast %12 : vector<8x2x4xf32> to vector<16x4xf32>
    %c0_13 = arith.constant 0 : index
    %c0_14 = arith.constant 0 : index
    %14 = vector.load %arg5[%c0_13, %c0_14] : memref<4x48xf32, #tpu.memory_space<vmem>>, vector<4x48xf32>
    %cst_15 = arith.constant dense<0.000000e+00> : vector<16x48xf32>
    %15 = tpu.matmul %13, %14, %cst_15 {dimension_numbers = #tpu.dot_dimension_numbers<[1], [0], [0], [1], [0, 0, 1, 1], [], []>} : vector<16x4xf32>, vector<4x48xf32>, vector<16x48xf32> -> vector<16x48xf32>
    %c0_16 = arith.constant 0 : index
    %c0_17 = arith.constant 0 : index
    %16 = vector.load %arg7[%c0_16, %c0_17] : memref<1x48xf32, #tpu.memory_space<vmem>>, vector<1x48xf32>
    %17 = vector.broadcast %16 : vector<1x48xf32> to vector<16x48xf32>
    %18 = arith.addf %15, %17 : vector<16x48xf32>
    %19 = vector.shape_cast %18 : vector<16x48xf32> to vector<8x2x48xf32>
    %c0_18 = arith.constant 0 : index
    %c0_19 = arith.constant 0 : index
    %c0_20 = arith.constant 0 : index
    %20 = vector.load %arg14[%c0_18, %c0_19, %c0_20] : memref<8x2x48xf32, #tpu.memory_space<vmem>>, vector<8x2x48xf32>
    tpu.vector_store %arg14[%c0_18, %c0_19, %c0_20], %19 {strides = array<i32>} : memref<8x2x48xf32, #tpu.memory_space<vmem>>, vector<8x2x48xf32>,
    %c0_21 = arith.constant 0 : index
    %c0_22 = arith.constant 0 : index
    %21 = vector.load %arg8[%c0_21, %c0_22] : memref<32x96xf32, #tpu.memory_space<vmem>>, vector<32x96xf32>
    %c0_23 = arith.constant 0 : index
    %c0_24 = arith.constant 0 : index
    %22 = vector.load %arg9[%c0_23, %c0_24] : memref<1x96xf32, #tpu.memory_space<vmem>>, vector<1x96xf32>
    %c0_25 = arith.constant 0 : index
    %c0_26 = arith.constant 0 : index
    %23 = vector.load %arg12[%c0_25, %c0_26] : memref<2x32xf32, #tpu.memory_space<vmem>>, vector<2x32xf32>
    %c0_i32_27 = arith.constant 0 : i32
    %cst_28 = arith.constant dense<0.000000e+00> : vector<2x96xf32>
    %24 = tpu.matmul %23, %21, %cst_28 {dimension_numbers = #tpu.dot_dimension_numbers<[1], [0], [0], [1], [0, 0, 1, 1], [], []>} : vector<2x32xf32>, vector<32x96xf32>, vector<2x96xf32> -> vector<2x96xf32>
    %25 = vector.broadcast %22 : vector<1x96xf32> to vector<2x96xf32>
    %26 = arith.addf %24, %25 : vector<2x96xf32>
    %27 = arith.index_cast %c0_i32_27 : i32 to index
    %c0_29 = arith.constant 0 : index
    %c0_30 = arith.constant 0 : index
    %28 = vector.load %arg13[%27, %c0_29, %c0_30] : memref<8x2x48xf32, #tpu.memory_space<vmem>>, vector<1x2x48xf32>
    %29 = vector.shape_cast %28 : vector<1x2x48xf32> to vector<2x48xf32>
    %30 = vector.extract_strided_slice %26 {offsets = [0, 0], sizes = [2, 48], strides = [1, 1]} : vector<2x96xf32> to vector<2x48xf32>
    %31 = vector.extract_strided_slice %23 {offsets = [0, 0], sizes = [2, 16], strides = [1, 1]} : vector<2x32xf32> to vector<2x16xf32>
    %32 = vector.extract_strided_slice %29 {offsets = [0, 0], sizes = [2, 16], strides = [1, 1]} : vector<2x48xf32> to vector<2x16xf32>
    %33 = vector.extract_strided_slice %30 {offsets = [0, 0], sizes = [2, 16], strides = [1, 1]} : vector<2x48xf32> to vector<2x16xf32>
    %34 = arith.addf %32, %33 : vector<2x16xf32>
    %35 = arith.negf %34 : vector<2x16xf32>
    %36 = math.exp %35 : vector<2x16xf32>
    %cst_31 = arith.constant 1.000000e+00 : f32
    %37 = vector.broadcast %cst_31 : f32 to vector<2x16xf32>
    %38 = arith.addf %37, %36 : vector<2x16xf32>
    %39 = arith.divf %37, %38 : vector<2x16xf32>
    %40 = vector.extract_strided_slice %29 {offsets = [0, 16], sizes = [2, 16], strides = [1, 1]} : vector<2x48xf32> to vector<2x16xf32>
    %41 = vector.extract_strided_slice %30 {offsets = [0, 16], sizes = [2, 16], strides = [1, 1]} : vector<2x48xf32> to vector<2x16xf32>
    %42 = arith.addf %40, %41 : vector<2x16xf32>
    %43 = arith.negf %42 : vector<2x16xf32>
    %44 = math.exp %43 : vector<2x16xf32>
    %cst_32 = arith.constant 1.000000e+00 : f32
    %45 = vector.broadcast %cst_32 : f32 to vector<2x16xf32>
    %46 = arith.addf %45, %44 : vector<2x16xf32>
    %47 = arith.divf %45, %46 : vector<2x16xf32>
    %48 = vector.extract_strided_slice %29 {offsets = [0, 32], sizes = [2, 16], strides = [1, 1]} : vector<2x48xf32> to vector<2x16xf32>
    %49 = vector.extract_strided_slice %30 {offsets = [0, 32], sizes = [2, 16], strides = [1, 1]} : vector<2x48xf32> to vector<2x16xf32>
    %50 = arith.mulf %39, %49 : vector<2x16xf32>
    %51 = arith.addf %48, %50 : vector<2x16xf32>
    %52 = math.tanh %51 : vector<2x16xf32>
    %53 = arith.subf %31, %52 : vector<2x16xf32>
    %54 = arith.mulf %47, %53 : vector<2x16xf32>
    %55 = arith.addf %52, %54 : vector<2x16xf32>
    %c7_i32 = arith.constant 7 : i32
    %56 = arith.subi %c7_i32, %c0_i32_27 : i32
    %57 = arith.index_cast %56 : i32 to index
    %c0_33 = arith.constant 0 : index
    %c0_34 = arith.constant 0 : index
    %58 = vector.load %arg14[%57, %c0_33, %c0_34] : memref<8x2x48xf32, #tpu.memory_space<vmem>>, vector<1x2x48xf32>
    %59 = vector.shape_cast %58 : vector<1x2x48xf32> to vector<2x48xf32>
    %60 = vector.extract_strided_slice %26 {offsets = [0, 48], sizes = [2, 48], strides = [1, 1]} : vector<2x96xf32> to vector<2x48xf32>
    %61 = vector.extract_strided_slice %23 {offsets = [0, 16], sizes = [2, 16], strides = [1, 1]} : vector<2x32xf32> to vector<2x16xf32>
    %62 = vector.extract_strided_slice %59 {offsets = [0, 0], sizes = [2, 16], strides = [1, 1]} : vector<2x48xf32> to vector<2x16xf32>
    %63 = vector.extract_strided_slice %60 {offsets = [0, 0], sizes = [2, 16], strides = [1, 1]} : vector<2x48xf32> to vector<2x16xf32>
    %64 = arith.addf %62, %63 : vector<2x16xf32>
    %65 = arith.negf %64 : vector<2x16xf32>
    %66 = math.exp %65 : vector<2x16xf32>
    %cst_35 = arith.constant 1.000000e+00 : f32
    %67 = vector.broadcast %cst_35 : f32 to vector<2x16xf32>
    %68 = arith.addf %67, %66 : vector<2x16xf32>
    %69 = arith.divf %67, %68 : vector<2x16xf32>
    %70 = vector.extract_strided_slice %59 {offsets = [0, 16], sizes = [2, 16], strides = [1, 1]} : vector<2x48xf32> to vector<2x16xf32>
    %71 = vector.extract_strided_slice %60 {offsets = [0, 16], sizes = [2, 16], strides = [1, 1]} : vector<2x48xf32> to vector<2x16xf32>
    %72 = arith.addf %70, %71 : vector<2x16xf32>
    %73 = arith.negf %72 : vector<2x16xf32>
    %74 = math.exp %73 : vector<2x16xf32>
    %cst_36 = arith.constant 1.000000e+00 : f32
    %75 = vector.broadcast %cst_36 : f32 to vector<2x16xf32>
    %76 = arith.addf %75, %74 : vector<2x16xf32>
    %77 = arith.divf %75, %76 : vector<2x16xf32>
    %78 = vector.extract_strided_slice %59 {offsets = [0, 32], sizes = [2, 16], strides = [1, 1]} : vector<2x48xf32> to vector<2x16xf32>
    %79 = vector.extract_strided_slice %60 {offsets = [0, 32], sizes = [2, 16], strides = [1, 1]} : vector<2x48xf32> to vector<2x16xf32>
    %80 = arith.mulf %69, %79 : vector<2x16xf32>
    %81 = arith.addf %78, %80 : vector<2x16xf32>
    %82 = math.tanh %81 : vector<2x16xf32>
    %83 = arith.subf %61, %82 : vector<2x16xf32>
    %84 = arith.mulf %77, %83 : vector<2x16xf32>
    %85 = arith.addf %82, %84 : vector<2x16xf32>
    %86 = arith.index_cast %c0_i32_27 : i32 to index
    %c0_37 = arith.constant 0 : index
    %c0_38 = arith.constant 0 : index
    %87 = vector.load %arg10[%86, %c0_37, %c0_38] : memref<8x2x16xf32, #tpu.memory_space<vmem>>, vector<1x2x16xf32>
    %88 = vector.shape_cast %87 : vector<1x2x16xf32> to vector<2x16xf32>
    %89 = vector.shape_cast %55 : vector<2x16xf32> to vector<1x2x16xf32>
    tpu.vector_store %arg10[%86, %c0_37, %c0_38], %89 {strides = array<i32>} : memref<8x2x16xf32, #tpu.memory_space<vmem>>, vector<1x2x16xf32>,
    %c7_i32_39 = arith.constant 7 : i32
    %90 = arith.subi %c7_i32_39, %c0_i32_27 : i32
    %91 = arith.index_cast %90 : i32 to index
    %c0_40 = arith.constant 0 : index
    %c0_41 = arith.constant 0 : index
    %92 = vector.load %arg11[%91, %c0_40, %c0_41] : memref<8x2x16xf32, #tpu.memory_space<vmem>>, vector<1x2x16xf32>
    %93 = vector.shape_cast %92 : vector<1x2x16xf32> to vector<2x16xf32>
    %94 = vector.shape_cast %85 : vector<2x16xf32> to vector<1x2x16xf32>
    tpu.vector_store %arg11[%91, %c0_40, %c0_41], %94 {strides = array<i32>} : memref<8x2x16xf32, #tpu.memory_space<vmem>>, vector<1x2x16xf32>,
    %95 = tpu.concatenate %55, %85 in 1 : vector<2x16xf32>, vector<2x16xf32> -> vector<2x32xf32>
    %c1_i32 = arith.constant 1 : i32
    %cst_42 = arith.constant dense<0.000000e+00> : vector<2x96xf32>
    %96 = tpu.matmul %95, %21, %cst_42 {dimension_numbers = #tpu.dot_dimension_numbers<[1], [0], [0], [1], [0, 0, 1, 1], [], []>} : vector<2x32xf32>, vector<32x96xf32>, vector<2x96xf32> -> vector<2x96xf32>
    %97 = vector.broadcast %22 : vector<1x96xf32> to vector<2x96xf32>
    %98 = arith.addf %96, %97 : vector<2x96xf32>
    %99 = arith.index_cast %c1_i32 : i32 to index
    %c0_43 = arith.constant 0 : index
    %c0_44 = arith.constant 0 : index
    %100 = vector.load %arg13[%99, %c0_43, %c0_44] : memref<8x2x48xf32, #tpu.memory_space<vmem>>, vector<1x2x48xf32>
    %101 = vector.shape_cast %100 : vector<1x2x48xf32> to vector<2x48xf32>
    %102 = vector.extract_strided_slice %98 {offsets = [0, 0], sizes = [2, 48], strides = [1, 1]} : vector<2x96xf32> to vector<2x48xf32>
    %103 = vector.extract_strided_slice %95 {offsets = [0, 0], sizes = [2, 16], strides = [1, 1]} : vector<2x32xf32> to vector<2x16xf32>
    %104 = vector.extract_strided_slice %101 {offsets = [0, 0], sizes = [2, 16], strides = [1, 1]} : vector<2x48xf32> to vector<2x16xf32>
    %105 = vector.extract_strided_slice %102 {offsets = [0, 0], sizes = [2, 16], strides = [1, 1]} : vector<2x48xf32> to vector<2x16xf32>
    %106 = arith.addf %104, %105 : vector<2x16xf32>
    %107 = arith.negf %106 : vector<2x16xf32>
    %108 = math.exp %107 : vector<2x16xf32>
    %cst_45 = arith.constant 1.000000e+00 : f32
    %109 = vector.broadcast %cst_45 : f32 to vector<2x16xf32>
    %110 = arith.addf %109, %108 : vector<2x16xf32>
    %111 = arith.divf %109, %110 : vector<2x16xf32>
    %112 = vector.extract_strided_slice %101 {offsets = [0, 16], sizes = [2, 16], strides = [1, 1]} : vector<2x48xf32> to vector<2x16xf32>
    %113 = vector.extract_strided_slice %102 {offsets = [0, 16], sizes = [2, 16], strides = [1, 1]} : vector<2x48xf32> to vector<2x16xf32>
    %114 = arith.addf %112, %113 : vector<2x16xf32>
    %115 = arith.negf %114 : vector<2x16xf32>
    %116 = math.exp %115 : vector<2x16xf32>
    %cst_46 = arith.constant 1.000000e+00 : f32
    %117 = vector.broadcast %cst_46 : f32 to vector<2x16xf32>
    %118 = arith.addf %117, %116 : vector<2x16xf32>
    %119 = arith.divf %117, %118 : vector<2x16xf32>
    %120 = vector.extract_strided_slice %101 {offsets = [0, 32], sizes = [2, 16], strides = [1, 1]} : vector<2x48xf32> to vector<2x16xf32>
    %121 = vector.extract_strided_slice %102 {offsets = [0, 32], sizes = [2, 16], strides = [1, 1]} : vector<2x48xf32> to vector<2x16xf32>
    %122 = arith.mulf %111, %121 : vector<2x16xf32>
    %123 = arith.addf %120, %122 : vector<2x16xf32>
    %124 = math.tanh %123 : vector<2x16xf32>
    %125 = arith.subf %103, %124 : vector<2x16xf32>
    %126 = arith.mulf %119, %125 : vector<2x16xf32>
    %127 = arith.addf %124, %126 : vector<2x16xf32>
    %c7_i32_47 = arith.constant 7 : i32
    %128 = arith.subi %c7_i32_47, %c1_i32 : i32
    %129 = arith.index_cast %128 : i32 to index
    %c0_48 = arith.constant 0 : index
    %c0_49 = arith.constant 0 : index
    %130 = vector.load %arg14[%129, %c0_48, %c0_49] : memref<8x2x48xf32, #tpu.memory_space<vmem>>, vector<1x2x48xf32>
    %131 = vector.shape_cast %130 : vector<1x2x48xf32> to vector<2x48xf32>
    %132 = vector.extract_strided_slice %98 {offsets = [0, 48], sizes = [2, 48], strides = [1, 1]} : vector<2x96xf32> to vector<2x48xf32>
    %133 = vector.extract_strided_slice %95 {offsets = [0, 16], sizes = [2, 16], strides = [1, 1]} : vector<2x32xf32> to vector<2x16xf32>
    %134 = vector.extract_strided_slice %131 {offsets = [0, 0], sizes = [2, 16], strides = [1, 1]} : vector<2x48xf32> to vector<2x16xf32>
    %135 = vector.extract_strided_slice %132 {offsets = [0, 0], sizes = [2, 16], strides = [1, 1]} : vector<2x48xf32> to vector<2x16xf32>
    %136 = arith.addf %134, %135 : vector<2x16xf32>
    %137 = arith.negf %136 : vector<2x16xf32>
    %138 = math.exp %137 : vector<2x16xf32>
    %cst_50 = arith.constant 1.000000e+00 : f32
    %139 = vector.broadcast %cst_50 : f32 to vector<2x16xf32>
    %140 = arith.addf %139, %138 : vector<2x16xf32>
    %141 = arith.divf %139, %140 : vector<2x16xf32>
    %142 = vector.extract_strided_slice %131 {offsets = [0, 16], sizes = [2, 16], strides = [1, 1]} : vector<2x48xf32> to vector<2x16xf32>
    %143 = vector.extract_strided_slice %132 {offsets = [0, 16], sizes = [2, 16], strides = [1, 1]} : vector<2x48xf32> to vector<2x16xf32>
    %144 = arith.addf %142, %143 : vector<2x16xf32>
    %145 = arith.negf %144 : vector<2x16xf32>
    %146 = math.exp %145 : vector<2x16xf32>
    %cst_51 = arith.constant 1.000000e+00 : f32
    %147 = vector.broadcast %cst_51 : f32 to vector<2x16xf32>
    %148 = arith.addf %147, %146 : vector<2x16xf32>
    %149 = arith.divf %147, %148 : vector<2x16xf32>
    %150 = vector.extract_strided_slice %131 {offsets = [0, 32], sizes = [2, 16], strides = [1, 1]} : vector<2x48xf32> to vector<2x16xf32>
    %151 = vector.extract_strided_slice %132 {offsets = [0, 32], sizes = [2, 16], strides = [1, 1]} : vector<2x48xf32> to vector<2x16xf32>
    %152 = arith.mulf %141, %151 : vector<2x16xf32>
    %153 = arith.addf %150, %152 : vector<2x16xf32>
    %154 = math.tanh %153 : vector<2x16xf32>
    %155 = arith.subf %133, %154 : vector<2x16xf32>
    %156 = arith.mulf %149, %155 : vector<2x16xf32>
    %157 = arith.addf %154, %156 : vector<2x16xf32>
    %158 = arith.index_cast %c1_i32 : i32 to index
    %c0_52 = arith.constant 0 : index
    %c0_53 = arith.constant 0 : index
    %159 = vector.load %arg10[%158, %c0_52, %c0_53] : memref<8x2x16xf32, #tpu.memory_space<vmem>>, vector<1x2x16xf32>
    %160 = vector.shape_cast %159 : vector<1x2x16xf32> to vector<2x16xf32>
    %161 = vector.shape_cast %127 : vector<2x16xf32> to vector<1x2x16xf32>
    tpu.vector_store %arg10[%158, %c0_52, %c0_53], %161 {strides = array<i32>} : memref<8x2x16xf32, #tpu.memory_space<vmem>>, vector<1x2x16xf32>,
    %c7_i32_54 = arith.constant 7 : i32
    %162 = arith.subi %c7_i32_54, %c1_i32 : i32
    %163 = arith.index_cast %162 : i32 to index
    %c0_55 = arith.constant 0 : index
    %c0_56 = arith.constant 0 : index
    %164 = vector.load %arg11[%163, %c0_55, %c0_56] : memref<8x2x16xf32, #tpu.memory_space<vmem>>, vector<1x2x16xf32>
    %165 = vector.shape_cast %164 : vector<1x2x16xf32> to vector<2x16xf32>
    %166 = vector.shape_cast %157 : vector<2x16xf32> to vector<1x2x16xf32>
    tpu.vector_store %arg11[%163, %c0_55, %c0_56], %166 {strides = array<i32>} : memref<8x2x16xf32, #tpu.memory_space<vmem>>, vector<1x2x16xf32>,
    %167 = tpu.concatenate %127, %157 in 1 : vector<2x16xf32>, vector<2x16xf32> -> vector<2x32xf32>
    %c2_i32 = arith.constant 2 : i32
    %cst_57 = arith.constant dense<0.000000e+00> : vector<2x96xf32>
    %168 = tpu.matmul %167, %21, %cst_57 {dimension_numbers = #tpu.dot_dimension_numbers<[1], [0], [0], [1], [0, 0, 1, 1], [], []>} : vector<2x32xf32>, vector<32x96xf32>, vector<2x96xf32> -> vector<2x96xf32>
    %169 = vector.broadcast %22 : vector<1x96xf32> to vector<2x96xf32>
    %170 = arith.addf %168, %169 : vector<2x96xf32>
    %171 = arith.index_cast %c2_i32 : i32 to index
    %c0_58 = arith.constant 0 : index
    %c0_59 = arith.constant 0 : index
    %172 = vector.load %arg13[%171, %c0_58, %c0_59] : memref<8x2x48xf32, #tpu.memory_space<vmem>>, vector<1x2x48xf32>
    %173 = vector.shape_cast %172 : vector<1x2x48xf32> to vector<2x48xf32>
    %174 = vector.extract_strided_slice %170 {offsets = [0, 0], sizes = [2, 48], strides = [1, 1]} : vector<2x96xf32> to vector<2x48xf32>
    %175 = vector.extract_strided_slice %167 {offsets = [0, 0], sizes = [2, 16], strides = [1, 1]} : vector<2x32xf32> to vector<2x16xf32>
    %176 = vector.extract_strided_slice %173 {offsets = [0, 0], sizes = [2, 16], strides = [1, 1]} : vector<2x48xf32> to vector<2x16xf32>
    %177 = vector.extract_strided_slice %174 {offsets = [0, 0], sizes = [2, 16], strides = [1, 1]} : vector<2x48xf32> to vector<2x16xf32>
    %178 = arith.addf %176, %177 : vector<2x16xf32>
    %179 = arith.negf %178 : vector<2x16xf32>
    %180 = math.exp %179 : vector<2x16xf32>
    %cst_60 = arith.constant 1.000000e+00 : f32
    %181 = vector.broadcast %cst_60 : f32 to vector<2x16xf32>
    %182 = arith.addf %181, %180 : vector<2x16xf32>
    %183 = arith.divf %181, %182 : vector<2x16xf32>
    %184 = vector.extract_strided_slice %173 {offsets = [0, 16], sizes = [2, 16], strides = [1, 1]} : vector<2x48xf32> to vector<2x16xf32>
    %185 = vector.extract_strided_slice %174 {offsets = [0, 16], sizes = [2, 16], strides = [1, 1]} : vector<2x48xf32> to vector<2x16xf32>
    %186 = arith.addf %184, %185 : vector<2x16xf32>
    %187 = arith.negf %186 : vector<2x16xf32>
    %188 = math.exp %187 : vector<2x16xf32>
    %cst_61 = arith.constant 1.000000e+00 : f32
    %189 = vector.broadcast %cst_61 : f32 to vector<2x16xf32>
    %190 = arith.addf %189, %188 : vector<2x16xf32>
    %191 = arith.divf %189, %190 : vector<2x16xf32>
    %192 = vector.extract_strided_slice %173 {offsets = [0, 32], sizes = [2, 16], strides = [1, 1]} : vector<2x48xf32> to vector<2x16xf32>
    %193 = vector.extract_strided_slice %174 {offsets = [0, 32], sizes = [2, 16], strides = [1, 1]} : vector<2x48xf32> to vector<2x16xf32>
    %194 = arith.mulf %183, %193 : vector<2x16xf32>
    %195 = arith.addf %192, %194 : vector<2x16xf32>
    %196 = math.tanh %195 : vector<2x16xf32>
    %197 = arith.subf %175, %196 : vector<2x16xf32>
    %198 = arith.mulf %191, %197 : vector<2x16xf32>
    %199 = arith.addf %196, %198 : vector<2x16xf32>
    %c7_i32_62 = arith.constant 7 : i32
    %200 = arith.subi %c7_i32_62, %c2_i32 : i32
    %201 = arith.index_cast %200 : i32 to index
    %c0_63 = arith.constant 0 : index
    %c0_64 = arith.constant 0 : index
    %202 = vector.load %arg14[%201, %c0_63, %c0_64] : memref<8x2x48xf32, #tpu.memory_space<vmem>>, vector<1x2x48xf32>
    %203 = vector.shape_cast %202 : vector<1x2x48xf32> to vector<2x48xf32>
    %204 = vector.extract_strided_slice %170 {offsets = [0, 48], sizes = [2, 48], strides = [1, 1]} : vector<2x96xf32> to vector<2x48xf32>
    %205 = vector.extract_strided_slice %167 {offsets = [0, 16], sizes = [2, 16], strides = [1, 1]} : vector<2x32xf32> to vector<2x16xf32>
    %206 = vector.extract_strided_slice %203 {offsets = [0, 0], sizes = [2, 16], strides = [1, 1]} : vector<2x48xf32> to vector<2x16xf32>
    %207 = vector.extract_strided_slice %204 {offsets = [0, 0], sizes = [2, 16], strides = [1, 1]} : vector<2x48xf32> to vector<2x16xf32>
    %208 = arith.addf %206, %207 : vector<2x16xf32>
    %209 = arith.negf %208 : vector<2x16xf32>
    %210 = math.exp %209 : vector<2x16xf32>
    %cst_65 = arith.constant 1.000000e+00 : f32
    %211 = vector.broadcast %cst_65 : f32 to vector<2x16xf32>
    %212 = arith.addf %211, %210 : vector<2x16xf32>
    %213 = arith.divf %211, %212 : vector<2x16xf32>
    %214 = vector.extract_strided_slice %203 {offsets = [0, 16], sizes = [2, 16], strides = [1, 1]} : vector<2x48xf32> to vector<2x16xf32>
    %215 = vector.extract_strided_slice %204 {offsets = [0, 16], sizes = [2, 16], strides = [1, 1]} : vector<2x48xf32> to vector<2x16xf32>
    %216 = arith.addf %214, %215 : vector<2x16xf32>
    %217 = arith.negf %216 : vector<2x16xf32>
    %218 = math.exp %217 : vector<2x16xf32>
    %cst_66 = arith.constant 1.000000e+00 : f32
    %219 = vector.broadcast %cst_66 : f32 to vector<2x16xf32>
    %220 = arith.addf %219, %218 : vector<2x16xf32>
    %221 = arith.divf %219, %220 : vector<2x16xf32>
    %222 = vector.extract_strided_slice %203 {offsets = [0, 32], sizes = [2, 16], strides = [1, 1]} : vector<2x48xf32> to vector<2x16xf32>
    %223 = vector.extract_strided_slice %204 {offsets = [0, 32], sizes = [2, 16], strides = [1, 1]} : vector<2x48xf32> to vector<2x16xf32>
    %224 = arith.mulf %213, %223 : vector<2x16xf32>
    %225 = arith.addf %222, %224 : vector<2x16xf32>
    %226 = math.tanh %225 : vector<2x16xf32>
    %227 = arith.subf %205, %226 : vector<2x16xf32>
    %228 = arith.mulf %221, %227 : vector<2x16xf32>
    %229 = arith.addf %226, %228 : vector<2x16xf32>
    %230 = arith.index_cast %c2_i32 : i32 to index
    %c0_67 = arith.constant 0 : index
    %c0_68 = arith.constant 0 : index
    %231 = vector.load %arg10[%230, %c0_67, %c0_68] : memref<8x2x16xf32, #tpu.memory_space<vmem>>, vector<1x2x16xf32>
    %232 = vector.shape_cast %231 : vector<1x2x16xf32> to vector<2x16xf32>
    %233 = vector.shape_cast %199 : vector<2x16xf32> to vector<1x2x16xf32>
    tpu.vector_store %arg10[%230, %c0_67, %c0_68], %233 {strides = array<i32>} : memref<8x2x16xf32, #tpu.memory_space<vmem>>, vector<1x2x16xf32>,
    %c7_i32_69 = arith.constant 7 : i32
    %234 = arith.subi %c7_i32_69, %c2_i32 : i32
    %235 = arith.index_cast %234 : i32 to index
    %c0_70 = arith.constant 0 : index
    %c0_71 = arith.constant 0 : index
    %236 = vector.load %arg11[%235, %c0_70, %c0_71] : memref<8x2x16xf32, #tpu.memory_space<vmem>>, vector<1x2x16xf32>
    %237 = vector.shape_cast %236 : vector<1x2x16xf32> to vector<2x16xf32>
    %238 = vector.shape_cast %229 : vector<2x16xf32> to vector<1x2x16xf32>
    tpu.vector_store %arg11[%235, %c0_70, %c0_71], %238 {strides = array<i32>} : memref<8x2x16xf32, #tpu.memory_space<vmem>>, vector<1x2x16xf32>,
    %239 = tpu.concatenate %199, %229 in 1 : vector<2x16xf32>, vector<2x16xf32> -> vector<2x32xf32>
    %c3_i32 = arith.constant 3 : i32
    %cst_72 = arith.constant dense<0.000000e+00> : vector<2x96xf32>
    %240 = tpu.matmul %239, %21, %cst_72 {dimension_numbers = #tpu.dot_dimension_numbers<[1], [0], [0], [1], [0, 0, 1, 1], [], []>} : vector<2x32xf32>, vector<32x96xf32>, vector<2x96xf32> -> vector<2x96xf32>
    %241 = vector.broadcast %22 : vector<1x96xf32> to vector<2x96xf32>
    %242 = arith.addf %240, %241 : vector<2x96xf32>
    %243 = arith.index_cast %c3_i32 : i32 to index
    %c0_73 = arith.constant 0 : index
    %c0_74 = arith.constant 0 : index
    %244 = vector.load %arg13[%243, %c0_73, %c0_74] : memref<8x2x48xf32, #tpu.memory_space<vmem>>, vector<1x2x48xf32>
    %245 = vector.shape_cast %244 : vector<1x2x48xf32> to vector<2x48xf32>
    %246 = vector.extract_strided_slice %242 {offsets = [0, 0], sizes = [2, 48], strides = [1, 1]} : vector<2x96xf32> to vector<2x48xf32>
    %247 = vector.extract_strided_slice %239 {offsets = [0, 0], sizes = [2, 16], strides = [1, 1]} : vector<2x32xf32> to vector<2x16xf32>
    %248 = vector.extract_strided_slice %245 {offsets = [0, 0], sizes = [2, 16], strides = [1, 1]} : vector<2x48xf32> to vector<2x16xf32>
    %249 = vector.extract_strided_slice %246 {offsets = [0, 0], sizes = [2, 16], strides = [1, 1]} : vector<2x48xf32> to vector<2x16xf32>
    %250 = arith.addf %248, %249 : vector<2x16xf32>
    %251 = arith.negf %250 : vector<2x16xf32>
    %252 = math.exp %251 : vector<2x16xf32>
    %cst_75 = arith.constant 1.000000e+00 : f32
    %253 = vector.broadcast %cst_75 : f32 to vector<2x16xf32>
    %254 = arith.addf %253, %252 : vector<2x16xf32>
    %255 = arith.divf %253, %254 : vector<2x16xf32>
    %256 = vector.extract_strided_slice %245 {offsets = [0, 16], sizes = [2, 16], strides = [1, 1]} : vector<2x48xf32> to vector<2x16xf32>
    %257 = vector.extract_strided_slice %246 {offsets = [0, 16], sizes = [2, 16], strides = [1, 1]} : vector<2x48xf32> to vector<2x16xf32>
    %258 = arith.addf %256, %257 : vector<2x16xf32>
    %259 = arith.negf %258 : vector<2x16xf32>
    %260 = math.exp %259 : vector<2x16xf32>
    %cst_76 = arith.constant 1.000000e+00 : f32
    %261 = vector.broadcast %cst_76 : f32 to vector<2x16xf32>
    %262 = arith.addf %261, %260 : vector<2x16xf32>
    %263 = arith.divf %261, %262 : vector<2x16xf32>
    %264 = vector.extract_strided_slice %245 {offsets = [0, 32], sizes = [2, 16], strides = [1, 1]} : vector<2x48xf32> to vector<2x16xf32>
    %265 = vector.extract_strided_slice %246 {offsets = [0, 32], sizes = [2, 16], strides = [1, 1]} : vector<2x48xf32> to vector<2x16xf32>
    %266 = arith.mulf %255, %265 : vector<2x16xf32>
    %267 = arith.addf %264, %266 : vector<2x16xf32>
    %268 = math.tanh %267 : vector<2x16xf32>
    %269 = arith.subf %247, %268 : vector<2x16xf32>
    %270 = arith.mulf %263, %269 : vector<2x16xf32>
    %271 = arith.addf %268, %270 : vector<2x16xf32>
    %c7_i32_77 = arith.constant 7 : i32
    %272 = arith.subi %c7_i32_77, %c3_i32 : i32
    %273 = arith.index_cast %272 : i32 to index
    %c0_78 = arith.constant 0 : index
    %c0_79 = arith.constant 0 : index
    %274 = vector.load %arg14[%273, %c0_78, %c0_79] : memref<8x2x48xf32, #tpu.memory_space<vmem>>, vector<1x2x48xf32>
    %275 = vector.shape_cast %274 : vector<1x2x48xf32> to vector<2x48xf32>
    %276 = vector.extract_strided_slice %242 {offsets = [0, 48], sizes = [2, 48], strides = [1, 1]} : vector<2x96xf32> to vector<2x48xf32>
    %277 = vector.extract_strided_slice %239 {offsets = [0, 16], sizes = [2, 16], strides = [1, 1]} : vector<2x32xf32> to vector<2x16xf32>
    %278 = vector.extract_strided_slice %275 {offsets = [0, 0], sizes = [2, 16], strides = [1, 1]} : vector<2x48xf32> to vector<2x16xf32>
    %279 = vector.extract_strided_slice %276 {offsets = [0, 0], sizes = [2, 16], strides = [1, 1]} : vector<2x48xf32> to vector<2x16xf32>
    %280 = arith.addf %278, %279 : vector<2x16xf32>
    %281 = arith.negf %280 : vector<2x16xf32>
    %282 = math.exp %281 : vector<2x16xf32>
    %cst_80 = arith.constant 1.000000e+00 : f32
    %283 = vector.broadcast %cst_80 : f32 to vector<2x16xf32>
    %284 = arith.addf %283, %282 : vector<2x16xf32>
    %285 = arith.divf %283, %284 : vector<2x16xf32>
    %286 = vector.extract_strided_slice %275 {offsets = [0, 16], sizes = [2, 16], strides = [1, 1]} : vector<2x48xf32> to vector<2x16xf32>
    %287 = vector.extract_strided_slice %276 {offsets = [0, 16], sizes = [2, 16], strides = [1, 1]} : vector<2x48xf32> to vector<2x16xf32>
    %288 = arith.addf %286, %287 : vector<2x16xf32>
    %289 = arith.negf %288 : vector<2x16xf32>
    %290 = math.exp %289 : vector<2x16xf32>
    %cst_81 = arith.constant 1.000000e+00 : f32
    %291 = vector.broadcast %cst_81 : f32 to vector<2x16xf32>
    %292 = arith.addf %291, %290 : vector<2x16xf32>
    %293 = arith.divf %291, %292 : vector<2x16xf32>
    %294 = vector.extract_strided_slice %275 {offsets = [0, 32], sizes = [2, 16], strides = [1, 1]} : vector<2x48xf32> to vector<2x16xf32>
    %295 = vector.extract_strided_slice %276 {offsets = [0, 32], sizes = [2, 16], strides = [1, 1]} : vector<2x48xf32> to vector<2x16xf32>
    %296 = arith.mulf %285, %295 : vector<2x16xf32>
    %297 = arith.addf %294, %296 : vector<2x16xf32>
    %298 = math.tanh %297 : vector<2x16xf32>
    %299 = arith.subf %277, %298 : vector<2x16xf32>
    %300 = arith.mulf %293, %299 : vector<2x16xf32>
    %301 = arith.addf %298, %300 : vector<2x16xf32>
    %302 = arith.index_cast %c3_i32 : i32 to index
    %c0_82 = arith.constant 0 : index
    %c0_83 = arith.constant 0 : index
    %303 = vector.load %arg10[%302, %c0_82, %c0_83] : memref<8x2x16xf32, #tpu.memory_space<vmem>>, vector<1x2x16xf32>
    %304 = vector.shape_cast %303 : vector<1x2x16xf32> to vector<2x16xf32>
    %305 = vector.shape_cast %271 : vector<2x16xf32> to vector<1x2x16xf32>
    tpu.vector_store %arg10[%302, %c0_82, %c0_83], %305 {strides = array<i32>} : memref<8x2x16xf32, #tpu.memory_space<vmem>>, vector<1x2x16xf32>,
    %c7_i32_84 = arith.constant 7 : i32
    %306 = arith.subi %c7_i32_84, %c3_i32 : i32
    %307 = arith.index_cast %306 : i32 to index
    %c0_85 = arith.constant 0 : index
    %c0_86 = arith.constant 0 : index
    %308 = vector.load %arg11[%307, %c0_85, %c0_86] : memref<8x2x16xf32, #tpu.memory_space<vmem>>, vector<1x2x16xf32>
    %309 = vector.shape_cast %308 : vector<1x2x16xf32> to vector<2x16xf32>
    %310 = vector.shape_cast %301 : vector<2x16xf32> to vector<1x2x16xf32>
    tpu.vector_store %arg11[%307, %c0_85, %c0_86], %310 {strides = array<i32>} : memref<8x2x16xf32, #tpu.memory_space<vmem>>, vector<1x2x16xf32>,
    %311 = tpu.concatenate %271, %301 in 1 : vector<2x16xf32>, vector<2x16xf32> -> vector<2x32xf32>
    %c4_i32 = arith.constant 4 : i32
    %cst_87 = arith.constant dense<0.000000e+00> : vector<2x96xf32>
    %312 = tpu.matmul %311, %21, %cst_87 {dimension_numbers = #tpu.dot_dimension_numbers<[1], [0], [0], [1], [0, 0, 1, 1], [], []>} : vector<2x32xf32>, vector<32x96xf32>, vector<2x96xf32> -> vector<2x96xf32>
    %313 = vector.broadcast %22 : vector<1x96xf32> to vector<2x96xf32>
    %314 = arith.addf %312, %313 : vector<2x96xf32>
    %315 = arith.index_cast %c4_i32 : i32 to index
    %c0_88 = arith.constant 0 : index
    %c0_89 = arith.constant 0 : index
    %316 = vector.load %arg13[%315, %c0_88, %c0_89] : memref<8x2x48xf32, #tpu.memory_space<vmem>>, vector<1x2x48xf32>
    %317 = vector.shape_cast %316 : vector<1x2x48xf32> to vector<2x48xf32>
    %318 = vector.extract_strided_slice %314 {offsets = [0, 0], sizes = [2, 48], strides = [1, 1]} : vector<2x96xf32> to vector<2x48xf32>
    %319 = vector.extract_strided_slice %311 {offsets = [0, 0], sizes = [2, 16], strides = [1, 1]} : vector<2x32xf32> to vector<2x16xf32>
    %320 = vector.extract_strided_slice %317 {offsets = [0, 0], sizes = [2, 16], strides = [1, 1]} : vector<2x48xf32> to vector<2x16xf32>
    %321 = vector.extract_strided_slice %318 {offsets = [0, 0], sizes = [2, 16], strides = [1, 1]} : vector<2x48xf32> to vector<2x16xf32>
    %322 = arith.addf %320, %321 : vector<2x16xf32>
    %323 = arith.negf %322 : vector<2x16xf32>
    %324 = math.exp %323 : vector<2x16xf32>
    %cst_90 = arith.constant 1.000000e+00 : f32
    %325 = vector.broadcast %cst_90 : f32 to vector<2x16xf32>
    %326 = arith.addf %325, %324 : vector<2x16xf32>
    %327 = arith.divf %325, %326 : vector<2x16xf32>
    %328 = vector.extract_strided_slice %317 {offsets = [0, 16], sizes = [2, 16], strides = [1, 1]} : vector<2x48xf32> to vector<2x16xf32>
    %329 = vector.extract_strided_slice %318 {offsets = [0, 16], sizes = [2, 16], strides = [1, 1]} : vector<2x48xf32> to vector<2x16xf32>
    %330 = arith.addf %328, %329 : vector<2x16xf32>
    %331 = arith.negf %330 : vector<2x16xf32>
    %332 = math.exp %331 : vector<2x16xf32>
    %cst_91 = arith.constant 1.000000e+00 : f32
    %333 = vector.broadcast %cst_91 : f32 to vector<2x16xf32>
    %334 = arith.addf %333, %332 : vector<2x16xf32>
    %335 = arith.divf %333, %334 : vector<2x16xf32>
    %336 = vector.extract_strided_slice %317 {offsets = [0, 32], sizes = [2, 16], strides = [1, 1]} : vector<2x48xf32> to vector<2x16xf32>
    %337 = vector.extract_strided_slice %318 {offsets = [0, 32], sizes = [2, 16], strides = [1, 1]} : vector<2x48xf32> to vector<2x16xf32>
    %338 = arith.mulf %327, %337 : vector<2x16xf32>
    %339 = arith.addf %336, %338 : vector<2x16xf32>
    %340 = math.tanh %339 : vector<2x16xf32>
    %341 = arith.subf %319, %340 : vector<2x16xf32>
    %342 = arith.mulf %335, %341 : vector<2x16xf32>
    %343 = arith.addf %340, %342 : vector<2x16xf32>
    %c7_i32_92 = arith.constant 7 : i32
    %344 = arith.subi %c7_i32_92, %c4_i32 : i32
    %345 = arith.index_cast %344 : i32 to index
    %c0_93 = arith.constant 0 : index
    %c0_94 = arith.constant 0 : index
    %346 = vector.load %arg14[%345, %c0_93, %c0_94] : memref<8x2x48xf32, #tpu.memory_space<vmem>>, vector<1x2x48xf32>
    %347 = vector.shape_cast %346 : vector<1x2x48xf32> to vector<2x48xf32>
    %348 = vector.extract_strided_slice %314 {offsets = [0, 48], sizes = [2, 48], strides = [1, 1]} : vector<2x96xf32> to vector<2x48xf32>
    %349 = vector.extract_strided_slice %311 {offsets = [0, 16], sizes = [2, 16], strides = [1, 1]} : vector<2x32xf32> to vector<2x16xf32>
    %350 = vector.extract_strided_slice %347 {offsets = [0, 0], sizes = [2, 16], strides = [1, 1]} : vector<2x48xf32> to vector<2x16xf32>
    %351 = vector.extract_strided_slice %348 {offsets = [0, 0], sizes = [2, 16], strides = [1, 1]} : vector<2x48xf32> to vector<2x16xf32>
    %352 = arith.addf %350, %351 : vector<2x16xf32>
    %353 = arith.negf %352 : vector<2x16xf32>
    %354 = math.exp %353 : vector<2x16xf32>
    %cst_95 = arith.constant 1.000000e+00 : f32
    %355 = vector.broadcast %cst_95 : f32 to vector<2x16xf32>
    %356 = arith.addf %355, %354 : vector<2x16xf32>
    %357 = arith.divf %355, %356 : vector<2x16xf32>
    %358 = vector.extract_strided_slice %347 {offsets = [0, 16], sizes = [2, 16], strides = [1, 1]} : vector<2x48xf32> to vector<2x16xf32>
    %359 = vector.extract_strided_slice %348 {offsets = [0, 16], sizes = [2, 16], strides = [1, 1]} : vector<2x48xf32> to vector<2x16xf32>
    %360 = arith.addf %358, %359 : vector<2x16xf32>
    %361 = arith.negf %360 : vector<2x16xf32>
    %362 = math.exp %361 : vector<2x16xf32>
    %cst_96 = arith.constant 1.000000e+00 : f32
    %363 = vector.broadcast %cst_96 : f32 to vector<2x16xf32>
    %364 = arith.addf %363, %362 : vector<2x16xf32>
    %365 = arith.divf %363, %364 : vector<2x16xf32>
    %366 = vector.extract_strided_slice %347 {offsets = [0, 32], sizes = [2, 16], strides = [1, 1]} : vector<2x48xf32> to vector<2x16xf32>
    %367 = vector.extract_strided_slice %348 {offsets = [0, 32], sizes = [2, 16], strides = [1, 1]} : vector<2x48xf32> to vector<2x16xf32>
    %368 = arith.mulf %357, %367 : vector<2x16xf32>
    %369 = arith.addf %366, %368 : vector<2x16xf32>
    %370 = math.tanh %369 : vector<2x16xf32>
    %371 = arith.subf %349, %370 : vector<2x16xf32>
    %372 = arith.mulf %365, %371 : vector<2x16xf32>
    %373 = arith.addf %370, %372 : vector<2x16xf32>
    %374 = arith.index_cast %c4_i32 : i32 to index
    %c0_97 = arith.constant 0 : index
    %c0_98 = arith.constant 0 : index
    %375 = vector.load %arg10[%374, %c0_97, %c0_98] : memref<8x2x16xf32, #tpu.memory_space<vmem>>, vector<1x2x16xf32>
    %376 = vector.shape_cast %375 : vector<1x2x16xf32> to vector<2x16xf32>
    %377 = vector.shape_cast %343 : vector<2x16xf32> to vector<1x2x16xf32>
    tpu.vector_store %arg10[%374, %c0_97, %c0_98], %377 {strides = array<i32>} : memref<8x2x16xf32, #tpu.memory_space<vmem>>, vector<1x2x16xf32>,
    %c7_i32_99 = arith.constant 7 : i32
    %378 = arith.subi %c7_i32_99, %c4_i32 : i32
    %379 = arith.index_cast %378 : i32 to index
    %c0_100 = arith.constant 0 : index
    %c0_101 = arith.constant 0 : index
    %380 = vector.load %arg11[%379, %c0_100, %c0_101] : memref<8x2x16xf32, #tpu.memory_space<vmem>>, vector<1x2x16xf32>
    %381 = vector.shape_cast %380 : vector<1x2x16xf32> to vector<2x16xf32>
    %382 = vector.shape_cast %373 : vector<2x16xf32> to vector<1x2x16xf32>
    tpu.vector_store %arg11[%379, %c0_100, %c0_101], %382 {strides = array<i32>} : memref<8x2x16xf32, #tpu.memory_space<vmem>>, vector<1x2x16xf32>,
    %383 = tpu.concatenate %343, %373 in 1 : vector<2x16xf32>, vector<2x16xf32> -> vector<2x32xf32>
    %c5_i32 = arith.constant 5 : i32
    %cst_102 = arith.constant dense<0.000000e+00> : vector<2x96xf32>
    %384 = tpu.matmul %383, %21, %cst_102 {dimension_numbers = #tpu.dot_dimension_numbers<[1], [0], [0], [1], [0, 0, 1, 1], [], []>} : vector<2x32xf32>, vector<32x96xf32>, vector<2x96xf32> -> vector<2x96xf32>
    %385 = vector.broadcast %22 : vector<1x96xf32> to vector<2x96xf32>
    %386 = arith.addf %384, %385 : vector<2x96xf32>
    %387 = arith.index_cast %c5_i32 : i32 to index
    %c0_103 = arith.constant 0 : index
    %c0_104 = arith.constant 0 : index
    %388 = vector.load %arg13[%387, %c0_103, %c0_104] : memref<8x2x48xf32, #tpu.memory_space<vmem>>, vector<1x2x48xf32>
    %389 = vector.shape_cast %388 : vector<1x2x48xf32> to vector<2x48xf32>
    %390 = vector.extract_strided_slice %386 {offsets = [0, 0], sizes = [2, 48], strides = [1, 1]} : vector<2x96xf32> to vector<2x48xf32>
    %391 = vector.extract_strided_slice %383 {offsets = [0, 0], sizes = [2, 16], strides = [1, 1]} : vector<2x32xf32> to vector<2x16xf32>
    %392 = vector.extract_strided_slice %389 {offsets = [0, 0], sizes = [2, 16], strides = [1, 1]} : vector<2x48xf32> to vector<2x16xf32>
    %393 = vector.extract_strided_slice %390 {offsets = [0, 0], sizes = [2, 16], strides = [1, 1]} : vector<2x48xf32> to vector<2x16xf32>
    %394 = arith.addf %392, %393 : vector<2x16xf32>
    %395 = arith.negf %394 : vector<2x16xf32>
    %396 = math.exp %395 : vector<2x16xf32>
    %cst_105 = arith.constant 1.000000e+00 : f32
    %397 = vector.broadcast %cst_105 : f32 to vector<2x16xf32>
    %398 = arith.addf %397, %396 : vector<2x16xf32>
    %399 = arith.divf %397, %398 : vector<2x16xf32>
    %400 = vector.extract_strided_slice %389 {offsets = [0, 16], sizes = [2, 16], strides = [1, 1]} : vector<2x48xf32> to vector<2x16xf32>
    %401 = vector.extract_strided_slice %390 {offsets = [0, 16], sizes = [2, 16], strides = [1, 1]} : vector<2x48xf32> to vector<2x16xf32>
    %402 = arith.addf %400, %401 : vector<2x16xf32>
    %403 = arith.negf %402 : vector<2x16xf32>
    %404 = math.exp %403 : vector<2x16xf32>
    %cst_106 = arith.constant 1.000000e+00 : f32
    %405 = vector.broadcast %cst_106 : f32 to vector<2x16xf32>
    %406 = arith.addf %405, %404 : vector<2x16xf32>
    %407 = arith.divf %405, %406 : vector<2x16xf32>
    %408 = vector.extract_strided_slice %389 {offsets = [0, 32], sizes = [2, 16], strides = [1, 1]} : vector<2x48xf32> to vector<2x16xf32>
    %409 = vector.extract_strided_slice %390 {offsets = [0, 32], sizes = [2, 16], strides = [1, 1]} : vector<2x48xf32> to vector<2x16xf32>
    %410 = arith.mulf %399, %409 : vector<2x16xf32>
    %411 = arith.addf %408, %410 : vector<2x16xf32>
    %412 = math.tanh %411 : vector<2x16xf32>
    %413 = arith.subf %391, %412 : vector<2x16xf32>
    %414 = arith.mulf %407, %413 : vector<2x16xf32>
    %415 = arith.addf %412, %414 : vector<2x16xf32>
    %c7_i32_107 = arith.constant 7 : i32
    %416 = arith.subi %c7_i32_107, %c5_i32 : i32
    %417 = arith.index_cast %416 : i32 to index
    %c0_108 = arith.constant 0 : index
    %c0_109 = arith.constant 0 : index
    %418 = vector.load %arg14[%417, %c0_108, %c0_109] : memref<8x2x48xf32, #tpu.memory_space<vmem>>, vector<1x2x48xf32>
    %419 = vector.shape_cast %418 : vector<1x2x48xf32> to vector<2x48xf32>
    %420 = vector.extract_strided_slice %386 {offsets = [0, 48], sizes = [2, 48], strides = [1, 1]} : vector<2x96xf32> to vector<2x48xf32>
    %421 = vector.extract_strided_slice %383 {offsets = [0, 16], sizes = [2, 16], strides = [1, 1]} : vector<2x32xf32> to vector<2x16xf32>
    %422 = vector.extract_strided_slice %419 {offsets = [0, 0], sizes = [2, 16], strides = [1, 1]} : vector<2x48xf32> to vector<2x16xf32>
    %423 = vector.extract_strided_slice %420 {offsets = [0, 0], sizes = [2, 16], strides = [1, 1]} : vector<2x48xf32> to vector<2x16xf32>
    %424 = arith.addf %422, %423 : vector<2x16xf32>
    %425 = arith.negf %424 : vector<2x16xf32>
    %426 = math.exp %425 : vector<2x16xf32>
    %cst_110 = arith.constant 1.000000e+00 : f32
    %427 = vector.broadcast %cst_110 : f32 to vector<2x16xf32>
    %428 = arith.addf %427, %426 : vector<2x16xf32>
    %429 = arith.divf %427, %428 : vector<2x16xf32>
    %430 = vector.extract_strided_slice %419 {offsets = [0, 16], sizes = [2, 16], strides = [1, 1]} : vector<2x48xf32> to vector<2x16xf32>
    %431 = vector.extract_strided_slice %420 {offsets = [0, 16], sizes = [2, 16], strides = [1, 1]} : vector<2x48xf32> to vector<2x16xf32>
    %432 = arith.addf %430, %431 : vector<2x16xf32>
    %433 = arith.negf %432 : vector<2x16xf32>
    %434 = math.exp %433 : vector<2x16xf32>
    %cst_111 = arith.constant 1.000000e+00 : f32
    %435 = vector.broadcast %cst_111 : f32 to vector<2x16xf32>
    %436 = arith.addf %435, %434 : vector<2x16xf32>
    %437 = arith.divf %435, %436 : vector<2x16xf32>
    %438 = vector.extract_strided_slice %419 {offsets = [0, 32], sizes = [2, 16], strides = [1, 1]} : vector<2x48xf32> to vector<2x16xf32>
    %439 = vector.extract_strided_slice %420 {offsets = [0, 32], sizes = [2, 16], strides = [1, 1]} : vector<2x48xf32> to vector<2x16xf32>
    %440 = arith.mulf %429, %439 : vector<2x16xf32>
    %441 = arith.addf %438, %440 : vector<2x16xf32>
    %442 = math.tanh %441 : vector<2x16xf32>
    %443 = arith.subf %421, %442 : vector<2x16xf32>
    %444 = arith.mulf %437, %443 : vector<2x16xf32>
    %445 = arith.addf %442, %444 : vector<2x16xf32>
    %446 = arith.index_cast %c5_i32 : i32 to index
    %c0_112 = arith.constant 0 : index
    %c0_113 = arith.constant 0 : index
    %447 = vector.load %arg10[%446, %c0_112, %c0_113] : memref<8x2x16xf32, #tpu.memory_space<vmem>>, vector<1x2x16xf32>
    %448 = vector.shape_cast %447 : vector<1x2x16xf32> to vector<2x16xf32>
    %449 = vector.shape_cast %415 : vector<2x16xf32> to vector<1x2x16xf32>
    tpu.vector_store %arg10[%446, %c0_112, %c0_113], %449 {strides = array<i32>} : memref<8x2x16xf32, #tpu.memory_space<vmem>>, vector<1x2x16xf32>,
    %c7_i32_114 = arith.constant 7 : i32
    %450 = arith.subi %c7_i32_114, %c5_i32 : i32
    %451 = arith.index_cast %450 : i32 to index
    %c0_115 = arith.constant 0 : index
    %c0_116 = arith.constant 0 : index
    %452 = vector.load %arg11[%451, %c0_115, %c0_116] : memref<8x2x16xf32, #tpu.memory_space<vmem>>, vector<1x2x16xf32>
    %453 = vector.shape_cast %452 : vector<1x2x16xf32> to vector<2x16xf32>
    %454 = vector.shape_cast %445 : vector<2x16xf32> to vector<1x2x16xf32>
    tpu.vector_store %arg11[%451, %c0_115, %c0_116], %454 {strides = array<i32>} : memref<8x2x16xf32, #tpu.memory_space<vmem>>, vector<1x2x16xf32>,
    %455 = tpu.concatenate %415, %445 in 1 : vector<2x16xf32>, vector<2x16xf32> -> vector<2x32xf32>
    %c6_i32 = arith.constant 6 : i32
    %cst_117 = arith.constant dense<0.000000e+00> : vector<2x96xf32>
    %456 = tpu.matmul %455, %21, %cst_117 {dimension_numbers = #tpu.dot_dimension_numbers<[1], [0], [0], [1], [0, 0, 1, 1], [], []>} : vector<2x32xf32>, vector<32x96xf32>, vector<2x96xf32> -> vector<2x96xf32>
    %457 = vector.broadcast %22 : vector<1x96xf32> to vector<2x96xf32>
    %458 = arith.addf %456, %457 : vector<2x96xf32>
    %459 = arith.index_cast %c6_i32 : i32 to index
    %c0_118 = arith.constant 0 : index
    %c0_119 = arith.constant 0 : index
    %460 = vector.load %arg13[%459, %c0_118, %c0_119] : memref<8x2x48xf32, #tpu.memory_space<vmem>>, vector<1x2x48xf32>
    %461 = vector.shape_cast %460 : vector<1x2x48xf32> to vector<2x48xf32>
    %462 = vector.extract_strided_slice %458 {offsets = [0, 0], sizes = [2, 48], strides = [1, 1]} : vector<2x96xf32> to vector<2x48xf32>
    %463 = vector.extract_strided_slice %455 {offsets = [0, 0], sizes = [2, 16], strides = [1, 1]} : vector<2x32xf32> to vector<2x16xf32>
    %464 = vector.extract_strided_slice %461 {offsets = [0, 0], sizes = [2, 16], strides = [1, 1]} : vector<2x48xf32> to vector<2x16xf32>
    %465 = vector.extract_strided_slice %462 {offsets = [0, 0], sizes = [2, 16], strides = [1, 1]} : vector<2x48xf32> to vector<2x16xf32>
    %466 = arith.addf %464, %465 : vector<2x16xf32>
    %467 = arith.negf %466 : vector<2x16xf32>
    %468 = math.exp %467 : vector<2x16xf32>
    %cst_120 = arith.constant 1.000000e+00 : f32
    %469 = vector.broadcast %cst_120 : f32 to vector<2x16xf32>
    %470 = arith.addf %469, %468 : vector<2x16xf32>
    %471 = arith.divf %469, %470 : vector<2x16xf32>
    %472 = vector.extract_strided_slice %461 {offsets = [0, 16], sizes = [2, 16], strides = [1, 1]} : vector<2x48xf32> to vector<2x16xf32>
    %473 = vector.extract_strided_slice %462 {offsets = [0, 16], sizes = [2, 16], strides = [1, 1]} : vector<2x48xf32> to vector<2x16xf32>
    %474 = arith.addf %472, %473 : vector<2x16xf32>
    %475 = arith.negf %474 : vector<2x16xf32>
    %476 = math.exp %475 : vector<2x16xf32>
    %cst_121 = arith.constant 1.000000e+00 : f32
    %477 = vector.broadcast %cst_121 : f32 to vector<2x16xf32>
    %478 = arith.addf %477, %476 : vector<2x16xf32>
    %479 = arith.divf %477, %478 : vector<2x16xf32>
    %480 = vector.extract_strided_slice %461 {offsets = [0, 32], sizes = [2, 16], strides = [1, 1]} : vector<2x48xf32> to vector<2x16xf32>
    %481 = vector.extract_strided_slice %462 {offsets = [0, 32], sizes = [2, 16], strides = [1, 1]} : vector<2x48xf32> to vector<2x16xf32>
    %482 = arith.mulf %471, %481 : vector<2x16xf32>
    %483 = arith.addf %480, %482 : vector<2x16xf32>
    %484 = math.tanh %483 : vector<2x16xf32>
    %485 = arith.subf %463, %484 : vector<2x16xf32>
    %486 = arith.mulf %479, %485 : vector<2x16xf32>
    %487 = arith.addf %484, %486 : vector<2x16xf32>
    %c7_i32_122 = arith.constant 7 : i32
    %488 = arith.subi %c7_i32_122, %c6_i32 : i32
    %489 = arith.index_cast %488 : i32 to index
    %c0_123 = arith.constant 0 : index
    %c0_124 = arith.constant 0 : index
    %490 = vector.load %arg14[%489, %c0_123, %c0_124] : memref<8x2x48xf32, #tpu.memory_space<vmem>>, vector<1x2x48xf32>
    %491 = vector.shape_cast %490 : vector<1x2x48xf32> to vector<2x48xf32>
    %492 = vector.extract_strided_slice %458 {offsets = [0, 48], sizes = [2, 48], strides = [1, 1]} : vector<2x96xf32> to vector<2x48xf32>
    %493 = vector.extract_strided_slice %455 {offsets = [0, 16], sizes = [2, 16], strides = [1, 1]} : vector<2x32xf32> to vector<2x16xf32>
    %494 = vector.extract_strided_slice %491 {offsets = [0, 0], sizes = [2, 16], strides = [1, 1]} : vector<2x48xf32> to vector<2x16xf32>
    %495 = vector.extract_strided_slice %492 {offsets = [0, 0], sizes = [2, 16], strides = [1, 1]} : vector<2x48xf32> to vector<2x16xf32>
    %496 = arith.addf %494, %495 : vector<2x16xf32>
    %497 = arith.negf %496 : vector<2x16xf32>
    %498 = math.exp %497 : vector<2x16xf32>
    %cst_125 = arith.constant 1.000000e+00 : f32
    %499 = vector.broadcast %cst_125 : f32 to vector<2x16xf32>
    %500 = arith.addf %499, %498 : vector<2x16xf32>
    %501 = arith.divf %499, %500 : vector<2x16xf32>
    %502 = vector.extract_strided_slice %491 {offsets = [0, 16], sizes = [2, 16], strides = [1, 1]} : vector<2x48xf32> to vector<2x16xf32>
    %503 = vector.extract_strided_slice %492 {offsets = [0, 16], sizes = [2, 16], strides = [1, 1]} : vector<2x48xf32> to vector<2x16xf32>
    %504 = arith.addf %502, %503 : vector<2x16xf32>
    %505 = arith.negf %504 : vector<2x16xf32>
    %506 = math.exp %505 : vector<2x16xf32>
    %cst_126 = arith.constant 1.000000e+00 : f32
    %507 = vector.broadcast %cst_126 : f32 to vector<2x16xf32>
    %508 = arith.addf %507, %506 : vector<2x16xf32>
    %509 = arith.divf %507, %508 : vector<2x16xf32>
    %510 = vector.extract_strided_slice %491 {offsets = [0, 32], sizes = [2, 16], strides = [1, 1]} : vector<2x48xf32> to vector<2x16xf32>
    %511 = vector.extract_strided_slice %492 {offsets = [0, 32], sizes = [2, 16], strides = [1, 1]} : vector<2x48xf32> to vector<2x16xf32>
    %512 = arith.mulf %501, %511 : vector<2x16xf32>
    %513 = arith.addf %510, %512 : vector<2x16xf32>
    %514 = math.tanh %513 : vector<2x16xf32>
    %515 = arith.subf %493, %514 : vector<2x16xf32>
    %516 = arith.mulf %509, %515 : vector<2x16xf32>
    %517 = arith.addf %514, %516 : vector<2x16xf32>
    %518 = arith.index_cast %c6_i32 : i32 to index
    %c0_127 = arith.constant 0 : index
    %c0_128 = arith.constant 0 : index
    %519 = vector.load %arg10[%518, %c0_127, %c0_128] : memref<8x2x16xf32, #tpu.memory_space<vmem>>, vector<1x2x16xf32>
    %520 = vector.shape_cast %519 : vector<1x2x16xf32> to vector<2x16xf32>
    %521 = vector.shape_cast %487 : vector<2x16xf32> to vector<1x2x16xf32>
    tpu.vector_store %arg10[%518, %c0_127, %c0_128], %521 {strides = array<i32>} : memref<8x2x16xf32, #tpu.memory_space<vmem>>, vector<1x2x16xf32>,
    %c7_i32_129 = arith.constant 7 : i32
    %522 = arith.subi %c7_i32_129, %c6_i32 : i32
    %523 = arith.index_cast %522 : i32 to index
    %c0_130 = arith.constant 0 : index
    %c0_131 = arith.constant 0 : index
    %524 = vector.load %arg11[%523, %c0_130, %c0_131] : memref<8x2x16xf32, #tpu.memory_space<vmem>>, vector<1x2x16xf32>
    %525 = vector.shape_cast %524 : vector<1x2x16xf32> to vector<2x16xf32>
    %526 = vector.shape_cast %517 : vector<2x16xf32> to vector<1x2x16xf32>
    tpu.vector_store %arg11[%523, %c0_130, %c0_131], %526 {strides = array<i32>} : memref<8x2x16xf32, #tpu.memory_space<vmem>>, vector<1x2x16xf32>,
    %527 = tpu.concatenate %487, %517 in 1 : vector<2x16xf32>, vector<2x16xf32> -> vector<2x32xf32>
    %c7_i32_132 = arith.constant 7 : i32
    %cst_133 = arith.constant dense<0.000000e+00> : vector<2x96xf32>
    %528 = tpu.matmul %527, %21, %cst_133 {dimension_numbers = #tpu.dot_dimension_numbers<[1], [0], [0], [1], [0, 0, 1, 1], [], []>} : vector<2x32xf32>, vector<32x96xf32>, vector<2x96xf32> -> vector<2x96xf32>
    %529 = vector.broadcast %22 : vector<1x96xf32> to vector<2x96xf32>
    %530 = arith.addf %528, %529 : vector<2x96xf32>
    %531 = arith.index_cast %c7_i32_132 : i32 to index
    %c0_134 = arith.constant 0 : index
    %c0_135 = arith.constant 0 : index
    %532 = vector.load %arg13[%531, %c0_134, %c0_135] : memref<8x2x48xf32, #tpu.memory_space<vmem>>, vector<1x2x48xf32>
    %533 = vector.shape_cast %532 : vector<1x2x48xf32> to vector<2x48xf32>
    %534 = vector.extract_strided_slice %530 {offsets = [0, 0], sizes = [2, 48], strides = [1, 1]} : vector<2x96xf32> to vector<2x48xf32>
    %535 = vector.extract_strided_slice %527 {offsets = [0, 0], sizes = [2, 16], strides = [1, 1]} : vector<2x32xf32> to vector<2x16xf32>
    %536 = vector.extract_strided_slice %533 {offsets = [0, 0], sizes = [2, 16], strides = [1, 1]} : vector<2x48xf32> to vector<2x16xf32>
    %537 = vector.extract_strided_slice %534 {offsets = [0, 0], sizes = [2, 16], strides = [1, 1]} : vector<2x48xf32> to vector<2x16xf32>
    %538 = arith.addf %536, %537 : vector<2x16xf32>
    %539 = arith.negf %538 : vector<2x16xf32>
    %540 = math.exp %539 : vector<2x16xf32>
    %cst_136 = arith.constant 1.000000e+00 : f32
    %541 = vector.broadcast %cst_136 : f32 to vector<2x16xf32>
    %542 = arith.addf %541, %540 : vector<2x16xf32>
    %543 = arith.divf %541, %542 : vector<2x16xf32>
    %544 = vector.extract_strided_slice %533 {offsets = [0, 16], sizes = [2, 16], strides = [1, 1]} : vector<2x48xf32> to vector<2x16xf32>
    %545 = vector.extract_strided_slice %534 {offsets = [0, 16], sizes = [2, 16], strides = [1, 1]} : vector<2x48xf32> to vector<2x16xf32>
    %546 = arith.addf %544, %545 : vector<2x16xf32>
    %547 = arith.negf %546 : vector<2x16xf32>
    %548 = math.exp %547 : vector<2x16xf32>
    %cst_137 = arith.constant 1.000000e+00 : f32
    %549 = vector.broadcast %cst_137 : f32 to vector<2x16xf32>
    %550 = arith.addf %549, %548 : vector<2x16xf32>
    %551 = arith.divf %549, %550 : vector<2x16xf32>
    %552 = vector.extract_strided_slice %533 {offsets = [0, 32], sizes = [2, 16], strides = [1, 1]} : vector<2x48xf32> to vector<2x16xf32>
    %553 = vector.extract_strided_slice %534 {offsets = [0, 32], sizes = [2, 16], strides = [1, 1]} : vector<2x48xf32> to vector<2x16xf32>
    %554 = arith.mulf %543, %553 : vector<2x16xf32>
    %555 = arith.addf %552, %554 : vector<2x16xf32>
    %556 = math.tanh %555 : vector<2x16xf32>
    %557 = arith.subf %535, %556 : vector<2x16xf32>
    %558 = arith.mulf %551, %557 : vector<2x16xf32>
    %559 = arith.addf %556, %558 : vector<2x16xf32>
    %c7_i32_138 = arith.constant 7 : i32
    %560 = arith.subi %c7_i32_138, %c7_i32_132 : i32
    %561 = arith.index_cast %560 : i32 to index
    %c0_139 = arith.constant 0 : index
    %c0_140 = arith.constant 0 : index
    %562 = vector.load %arg14[%561, %c0_139, %c0_140] : memref<8x2x48xf32, #tpu.memory_space<vmem>>, vector<1x2x48xf32>
    %563 = vector.shape_cast %562 : vector<1x2x48xf32> to vector<2x48xf32>
    %564 = vector.extract_strided_slice %530 {offsets = [0, 48], sizes = [2, 48], strides = [1, 1]} : vector<2x96xf32> to vector<2x48xf32>
    %565 = vector.extract_strided_slice %527 {offsets = [0, 16], sizes = [2, 16], strides = [1, 1]} : vector<2x32xf32> to vector<2x16xf32>
    %566 = vector.extract_strided_slice %563 {offsets = [0, 0], sizes = [2, 16], strides = [1, 1]} : vector<2x48xf32> to vector<2x16xf32>
    %567 = vector.extract_strided_slice %564 {offsets = [0, 0], sizes = [2, 16], strides = [1, 1]} : vector<2x48xf32> to vector<2x16xf32>
    %568 = arith.addf %566, %567 : vector<2x16xf32>
    %569 = arith.negf %568 : vector<2x16xf32>
    %570 = math.exp %569 : vector<2x16xf32>
    %cst_141 = arith.constant 1.000000e+00 : f32
    %571 = vector.broadcast %cst_141 : f32 to vector<2x16xf32>
    %572 = arith.addf %571, %570 : vector<2x16xf32>
    %573 = arith.divf %571, %572 : vector<2x16xf32>
    %574 = vector.extract_strided_slice %563 {offsets = [0, 16], sizes = [2, 16], strides = [1, 1]} : vector<2x48xf32> to vector<2x16xf32>
    %575 = vector.extract_strided_slice %564 {offsets = [0, 16], sizes = [2, 16], strides = [1, 1]} : vector<2x48xf32> to vector<2x16xf32>
    %576 = arith.addf %574, %575 : vector<2x16xf32>
    %577 = arith.negf %576 : vector<2x16xf32>
    %578 = math.exp %577 : vector<2x16xf32>
    %cst_142 = arith.constant 1.000000e+00 : f32
    %579 = vector.broadcast %cst_142 : f32 to vector<2x16xf32>
    %580 = arith.addf %579, %578 : vector<2x16xf32>
    %581 = arith.divf %579, %580 : vector<2x16xf32>
    %582 = vector.extract_strided_slice %563 {offsets = [0, 32], sizes = [2, 16], strides = [1, 1]} : vector<2x48xf32> to vector<2x16xf32>
    %583 = vector.extract_strided_slice %564 {offsets = [0, 32], sizes = [2, 16], strides = [1, 1]} : vector<2x48xf32> to vector<2x16xf32>
    %584 = arith.mulf %573, %583 : vector<2x16xf32>
    %585 = arith.addf %582, %584 : vector<2x16xf32>
    %586 = math.tanh %585 : vector<2x16xf32>
    %587 = arith.subf %565, %586 : vector<2x16xf32>
    %588 = arith.mulf %581, %587 : vector<2x16xf32>
    %589 = arith.addf %586, %588 : vector<2x16xf32>
    %590 = arith.index_cast %c7_i32_132 : i32 to index
    %c0_143 = arith.constant 0 : index
    %c0_144 = arith.constant 0 : index
    %591 = vector.load %arg10[%590, %c0_143, %c0_144] : memref<8x2x16xf32, #tpu.memory_space<vmem>>, vector<1x2x16xf32>
    %592 = vector.shape_cast %591 : vector<1x2x16xf32> to vector<2x16xf32>
    %593 = vector.shape_cast %559 : vector<2x16xf32> to vector<1x2x16xf32>
    tpu.vector_store %arg10[%590, %c0_143, %c0_144], %593 {strides = array<i32>} : memref<8x2x16xf32, #tpu.memory_space<vmem>>, vector<1x2x16xf32>,
    %c7_i32_145 = arith.constant 7 : i32
    %594 = arith.subi %c7_i32_145, %c7_i32_132 : i32
    %595 = arith.index_cast %594 : i32 to index
    %c0_146 = arith.constant 0 : index
    %c0_147 = arith.constant 0 : index
    %596 = vector.load %arg11[%595, %c0_146, %c0_147] : memref<8x2x16xf32, #tpu.memory_space<vmem>>, vector<1x2x16xf32>
    %597 = vector.shape_cast %596 : vector<1x2x16xf32> to vector<2x16xf32>
    %598 = vector.shape_cast %589 : vector<2x16xf32> to vector<1x2x16xf32>
    tpu.vector_store %arg11[%595, %c0_146, %c0_147], %598 {strides = array<i32>} : memref<8x2x16xf32, #tpu.memory_space<vmem>>, vector<1x2x16xf32>,
    %599 = tpu.concatenate %559, %589 in 1 : vector<2x16xf32>, vector<2x16xf32> -> vector<2x32xf32>
    %c8_i32 = arith.constant 8 : i32
    %c0_148 = arith.constant 0 : index
    %c0_149 = arith.constant 0 : index
    %600 = vector.load %arg12[%c0_148, %c0_149] : memref<2x32xf32, #tpu.memory_space<vmem>>, vector<2x32xf32>
    tpu.vector_store %arg12[%c0_148, %c0_149], %599 {strides = array<i32>} : memref<2x32xf32, #tpu.memory_space<vmem>>, vector<2x32xf32>,
    return
  }
  func.func @transform_0(%arg0: i32, %arg1: i32) -> (i32, i32, i32) {
    %c0_i32 = arith.constant 0 : i32
    %c0_i32_0 = arith.constant 0 : i32
    return %arg1, %arg0, %c0_i32 : i32, i32, i32
  }
  func.func @transform_1(%arg0: i32, %arg1: i32) -> (i32, i32, i32) {
    %c0_i32 = arith.constant 0 : i32
    %0 = arith.subi %c0_i32, %arg1 : i32
    %c0_i32_0 = arith.constant 0 : i32
    %c0_i32_1 = arith.constant 0 : i32
    return %0, %arg0, %c0_i32_0 : i32, i32, i32
  }
  func.func @transform_2(%arg0: i32, %arg1: i32) -> (i32, i32) {
    %c0_i32 = arith.constant 0 : i32
    %c0_i32_0 = arith.constant 0 : i32
    %c0_i32_1 = arith.constant 0 : i32
    return %c0_i32, %c0_i32_0 : i32, i32
  }
  func.func @transform_3(%arg0: i32, %arg1: i32) -> (i32, i32) {
    %c0_i32 = arith.constant 0 : i32
    %c0_i32_0 = arith.constant 0 : i32
    %c0_i32_1 = arith.constant 0 : i32
    return %c0_i32, %c0_i32_0 : i32, i32
  }
  func.func @transform_4(%arg0: i32, %arg1: i32) -> (i32, i32) {
    %c0_i32 = arith.constant 0 : i32
    %c0_i32_0 = arith.constant 0 : i32
    %c0_i32_1 = arith.constant 0 : i32
    return %c0_i32, %c0_i32_0 : i32, i32
  }
  func.func @transform_5(%arg0: i32, %arg1: i32) -> (i32, i32) {
    %c0_i32 = arith.constant 0 : i32
    %c0_i32_0 = arith.constant 0 : i32
    %c0_i32_1 = arith.constant 0 : i32
    return %c0_i32, %c0_i32_0 : i32, i32
  }
  func.func @transform_6(%arg0: i32, %arg1: i32) -> (i32, i32) {
    %c0_i32 = arith.constant 0 : i32
    %c0_i32_0 = arith.constant 0 : i32
    %c0_i32_1 = arith.constant 0 : i32
    return %c0_i32, %c0_i32_0 : i32, i32
  }
  func.func @transform_7(%arg0: i32, %arg1: i32) -> (i32, i32) {
    %c0_i32 = arith.constant 0 : i32
    %c0_i32_0 = arith.constant 0 : i32
    %c0_i32_1 = arith.constant 0 : i32
    return %c0_i32, %c0_i32_0 : i32, i32
  }
  func.func @transform_8(%arg0: i32, %arg1: i32) -> (i32, i32, i32) {
    %c0_i32 = arith.constant 0 : i32
    %c0_i32_0 = arith.constant 0 : i32
    return %arg1, %arg0, %c0_i32 : i32, i32, i32
  }
  func.func @transform_9(%arg0: i32, %arg1: i32) -> (i32, i32, i32) {
    %c0_i32 = arith.constant 0 : i32
    %0 = arith.subi %c0_i32, %arg1 : i32
    %c0_i32_0 = arith.constant 0 : i32
    %c0_i32_1 = arith.constant 0 : i32
    return %0, %arg0, %c0_i32_0 : i32, i32, i32
  }
}

module attributes {stable_mosaic.version = 11 : i64} {
  func.func @kernel(%arg0: i32, %arg1: i32, %arg2: memref<8x2x16xf32, #tpu.memory_space<vmem>>, %arg3: memref<8x2x16xf32, #tpu.memory_space<vmem>>, %arg4: memref<8x2x16xf32, #tpu.memory_space<vmem>>, %arg5: memref<8x2x16xf32, #tpu.memory_space<vmem>>, %arg6: memref<32x48xf32, #tpu.memory_space<vmem>>, %arg7: memref<32x48xf32, #tpu.memory_space<vmem>>, %arg8: memref<1x48xf32, #tpu.memory_space<vmem>>, %arg9: memref<1x48xf32, #tpu.memory_space<vmem>>, %arg10: memref<32x96xf32, #tpu.memory_space<vmem>>, %arg11: memref<1x96xf32, #tpu.memory_space<vmem>>, %arg12: memref<8x2x16xf32, #tpu.memory_space<vmem>>, %arg13: memref<8x2x16xf32, #tpu.memory_space<vmem>>, %arg14: memref<2x32xf32, #tpu.memory_space<vmem>>, %arg15: memref<8x2x48xf32, #tpu.memory_space<vmem>>, %arg16: memref<8x2x48xf32, #tpu.memory_space<vmem>>) attributes {dimension_semantics = [#tpu.dimension_semantics<parallel>, #tpu.dimension_semantics<arbitrary>], iteration_bounds = array<i64: 1, 1>, scalar_prefetch = 0 : i64, scratch_operands = 3 : i64, tpu.core_type = #tpu.core_type<tc>, window_params = [{transform_indices = @transform_0, window_bounds = array<i64: 8, 2, 16>}, {transform_indices = @transform_1, window_bounds = array<i64: 8, 2, 16>}, {transform_indices = @transform_2, window_bounds = array<i64: 8, 2, 16>}, {transform_indices = @transform_3, window_bounds = array<i64: 8, 2, 16>}, {pipeline_mode = #tpu.pipeline_mode<synchronous>, transform_indices = @transform_4, window_bounds = array<i64: 32, 48>}, {pipeline_mode = #tpu.pipeline_mode<synchronous>, transform_indices = @transform_5, window_bounds = array<i64: 32, 48>}, {pipeline_mode = #tpu.pipeline_mode<synchronous>, transform_indices = @transform_6, window_bounds = array<i64: 1, 48>}, {pipeline_mode = #tpu.pipeline_mode<synchronous>, transform_indices = @transform_7, window_bounds = array<i64: 1, 48>}, {pipeline_mode = #tpu.pipeline_mode<synchronous>, transform_indices = @transform_8, window_bounds = array<i64: 32, 96>}, {pipeline_mode = #tpu.pipeline_mode<synchronous>, transform_indices = @transform_9, window_bounds = array<i64: 1, 96>}, {transform_indices = @transform_10, window_bounds = array<i64: 8, 2, 16>}, {transform_indices = @transform_11, window_bounds = array<i64: 8, 2, 16>}]} {
    %c0_i32 = arith.constant 0 : i32
    %0 = arith.cmpi eq, %arg1, %c0_i32 : i32
    %1 = arith.extui %0 : i1 to i32
    %c0_i32_0 = arith.constant 0 : i32
    %2 = arith.cmpi ne, %1, %c0_i32_0 : i32
    scf.if %2 {
      %cst_156 = arith.constant 0.000000e+00 : f32
      %605 = vector.broadcast %cst_156 : f32 to vector<2x32xf32>
      %c0_157 = arith.constant 0 : index
      %c0_158 = arith.constant 0 : index
      %606 = vector.load %arg14[%c0_157, %c0_158] : memref<2x32xf32, #tpu.memory_space<vmem>>, vector<2x32xf32>
      tpu.vector_store %arg14[%c0_157, %c0_158], %605 {strides = array<i32>} : memref<2x32xf32, #tpu.memory_space<vmem>>, vector<2x32xf32>,
    } else {
    }
    %c0 = arith.constant 0 : index
    %c0_1 = arith.constant 0 : index
    %c0_2 = arith.constant 0 : index
    %3 = vector.load %arg2[%c0, %c0_1, %c0_2] : memref<8x2x16xf32, #tpu.memory_space<vmem>>, vector<8x2x16xf32>
    %c0_3 = arith.constant 0 : index
    %c0_4 = arith.constant 0 : index
    %c0_5 = arith.constant 0 : index
    %4 = vector.load %arg3[%c0_3, %c0_4, %c0_5] : memref<8x2x16xf32, #tpu.memory_space<vmem>>, vector<8x2x16xf32>
    %5 = tpu.concatenate %3, %4 in 2 : vector<8x2x16xf32>, vector<8x2x16xf32> -> vector<8x2x32xf32>
    %6 = vector.shape_cast %5 : vector<8x2x32xf32> to vector<16x32xf32>
    %c0_6 = arith.constant 0 : index
    %c0_7 = arith.constant 0 : index
    %7 = vector.load %arg6[%c0_6, %c0_7] : memref<32x48xf32, #tpu.memory_space<vmem>>, vector<32x48xf32>
    %cst = arith.constant dense<0.000000e+00> : vector<16x48xf32>
    %8 = tpu.matmul %6, %7, %cst {dimension_numbers = #tpu.dot_dimension_numbers<[1], [0], [0], [1], [0, 0, 1, 1], [], []>} : vector<16x32xf32>, vector<32x48xf32>, vector<16x48xf32> -> vector<16x48xf32>
    %c0_8 = arith.constant 0 : index
    %c0_9 = arith.constant 0 : index
    %9 = vector.load %arg8[%c0_8, %c0_9] : memref<1x48xf32, #tpu.memory_space<vmem>>, vector<1x48xf32>
    %10 = vector.broadcast %9 : vector<1x48xf32> to vector<16x48xf32>
    %11 = arith.addf %8, %10 : vector<16x48xf32>
    %12 = vector.shape_cast %11 : vector<16x48xf32> to vector<8x2x48xf32>
    %c0_10 = arith.constant 0 : index
    %c0_11 = arith.constant 0 : index
    %c0_12 = arith.constant 0 : index
    %13 = vector.load %arg15[%c0_10, %c0_11, %c0_12] : memref<8x2x48xf32, #tpu.memory_space<vmem>>, vector<8x2x48xf32>
    tpu.vector_store %arg15[%c0_10, %c0_11, %c0_12], %12 {strides = array<i32>} : memref<8x2x48xf32, #tpu.memory_space<vmem>>, vector<8x2x48xf32>,
    %c0_13 = arith.constant 0 : index
    %c0_14 = arith.constant 0 : index
    %c0_15 = arith.constant 0 : index
    %14 = vector.load %arg4[%c0_13, %c0_14, %c0_15] : memref<8x2x16xf32, #tpu.memory_space<vmem>>, vector<8x2x16xf32>
    %c0_16 = arith.constant 0 : index
    %c0_17 = arith.constant 0 : index
    %c0_18 = arith.constant 0 : index
    %15 = vector.load %arg5[%c0_16, %c0_17, %c0_18] : memref<8x2x16xf32, #tpu.memory_space<vmem>>, vector<8x2x16xf32>
    %16 = tpu.concatenate %14, %15 in 2 : vector<8x2x16xf32>, vector<8x2x16xf32> -> vector<8x2x32xf32>
    %17 = vector.shape_cast %16 : vector<8x2x32xf32> to vector<16x32xf32>
    %c0_19 = arith.constant 0 : index
    %c0_20 = arith.constant 0 : index
    %18 = vector.load %arg7[%c0_19, %c0_20] : memref<32x48xf32, #tpu.memory_space<vmem>>, vector<32x48xf32>
    %cst_21 = arith.constant dense<0.000000e+00> : vector<16x48xf32>
    %19 = tpu.matmul %17, %18, %cst_21 {dimension_numbers = #tpu.dot_dimension_numbers<[1], [0], [0], [1], [0, 0, 1, 1], [], []>} : vector<16x32xf32>, vector<32x48xf32>, vector<16x48xf32> -> vector<16x48xf32>
    %c0_22 = arith.constant 0 : index
    %c0_23 = arith.constant 0 : index
    %20 = vector.load %arg9[%c0_22, %c0_23] : memref<1x48xf32, #tpu.memory_space<vmem>>, vector<1x48xf32>
    %21 = vector.broadcast %20 : vector<1x48xf32> to vector<16x48xf32>
    %22 = arith.addf %19, %21 : vector<16x48xf32>
    %23 = vector.shape_cast %22 : vector<16x48xf32> to vector<8x2x48xf32>
    %c0_24 = arith.constant 0 : index
    %c0_25 = arith.constant 0 : index
    %c0_26 = arith.constant 0 : index
    %24 = vector.load %arg16[%c0_24, %c0_25, %c0_26] : memref<8x2x48xf32, #tpu.memory_space<vmem>>, vector<8x2x48xf32>
    tpu.vector_store %arg16[%c0_24, %c0_25, %c0_26], %23 {strides = array<i32>} : memref<8x2x48xf32, #tpu.memory_space<vmem>>, vector<8x2x48xf32>,
    %c0_27 = arith.constant 0 : index
    %c0_28 = arith.constant 0 : index
    %25 = vector.load %arg10[%c0_27, %c0_28] : memref<32x96xf32, #tpu.memory_space<vmem>>, vector<32x96xf32>
    %c0_29 = arith.constant 0 : index
    %c0_30 = arith.constant 0 : index
    %26 = vector.load %arg11[%c0_29, %c0_30] : memref<1x96xf32, #tpu.memory_space<vmem>>, vector<1x96xf32>
    %c0_31 = arith.constant 0 : index
    %c0_32 = arith.constant 0 : index
    %27 = vector.load %arg14[%c0_31, %c0_32] : memref<2x32xf32, #tpu.memory_space<vmem>>, vector<2x32xf32>
    %c0_i32_33 = arith.constant 0 : i32
    %cst_34 = arith.constant dense<0.000000e+00> : vector<2x96xf32>
    %28 = tpu.matmul %27, %25, %cst_34 {dimension_numbers = #tpu.dot_dimension_numbers<[1], [0], [0], [1], [0, 0, 1, 1], [], []>} : vector<2x32xf32>, vector<32x96xf32>, vector<2x96xf32> -> vector<2x96xf32>
    %29 = vector.broadcast %26 : vector<1x96xf32> to vector<2x96xf32>
    %30 = arith.addf %28, %29 : vector<2x96xf32>
    %31 = arith.index_cast %c0_i32_33 : i32 to index
    %c0_35 = arith.constant 0 : index
    %c0_36 = arith.constant 0 : index
    %32 = vector.load %arg15[%31, %c0_35, %c0_36] : memref<8x2x48xf32, #tpu.memory_space<vmem>>, vector<1x2x48xf32>
    %33 = vector.shape_cast %32 : vector<1x2x48xf32> to vector<2x48xf32>
    %34 = vector.extract_strided_slice %30 {offsets = [0, 0], sizes = [2, 48], strides = [1, 1]} : vector<2x96xf32> to vector<2x48xf32>
    %35 = vector.extract_strided_slice %27 {offsets = [0, 0], sizes = [2, 16], strides = [1, 1]} : vector<2x32xf32> to vector<2x16xf32>
    %36 = vector.extract_strided_slice %33 {offsets = [0, 0], sizes = [2, 16], strides = [1, 1]} : vector<2x48xf32> to vector<2x16xf32>
    %37 = vector.extract_strided_slice %34 {offsets = [0, 0], sizes = [2, 16], strides = [1, 1]} : vector<2x48xf32> to vector<2x16xf32>
    %38 = arith.addf %36, %37 : vector<2x16xf32>
    %39 = arith.negf %38 : vector<2x16xf32>
    %40 = math.exp %39 : vector<2x16xf32>
    %cst_37 = arith.constant 1.000000e+00 : f32
    %41 = vector.broadcast %cst_37 : f32 to vector<2x16xf32>
    %42 = arith.addf %41, %40 : vector<2x16xf32>
    %43 = arith.divf %41, %42 : vector<2x16xf32>
    %44 = vector.extract_strided_slice %33 {offsets = [0, 16], sizes = [2, 16], strides = [1, 1]} : vector<2x48xf32> to vector<2x16xf32>
    %45 = vector.extract_strided_slice %34 {offsets = [0, 16], sizes = [2, 16], strides = [1, 1]} : vector<2x48xf32> to vector<2x16xf32>
    %46 = arith.addf %44, %45 : vector<2x16xf32>
    %47 = arith.negf %46 : vector<2x16xf32>
    %48 = math.exp %47 : vector<2x16xf32>
    %cst_38 = arith.constant 1.000000e+00 : f32
    %49 = vector.broadcast %cst_38 : f32 to vector<2x16xf32>
    %50 = arith.addf %49, %48 : vector<2x16xf32>
    %51 = arith.divf %49, %50 : vector<2x16xf32>
    %52 = vector.extract_strided_slice %33 {offsets = [0, 32], sizes = [2, 16], strides = [1, 1]} : vector<2x48xf32> to vector<2x16xf32>
    %53 = vector.extract_strided_slice %34 {offsets = [0, 32], sizes = [2, 16], strides = [1, 1]} : vector<2x48xf32> to vector<2x16xf32>
    %54 = arith.mulf %43, %53 : vector<2x16xf32>
    %55 = arith.addf %52, %54 : vector<2x16xf32>
    %56 = math.tanh %55 : vector<2x16xf32>
    %57 = arith.subf %35, %56 : vector<2x16xf32>
    %58 = arith.mulf %51, %57 : vector<2x16xf32>
    %59 = arith.addf %56, %58 : vector<2x16xf32>
    %c7_i32 = arith.constant 7 : i32
    %60 = arith.subi %c7_i32, %c0_i32_33 : i32
    %61 = arith.index_cast %60 : i32 to index
    %c0_39 = arith.constant 0 : index
    %c0_40 = arith.constant 0 : index
    %62 = vector.load %arg16[%61, %c0_39, %c0_40] : memref<8x2x48xf32, #tpu.memory_space<vmem>>, vector<1x2x48xf32>
    %63 = vector.shape_cast %62 : vector<1x2x48xf32> to vector<2x48xf32>
    %64 = vector.extract_strided_slice %30 {offsets = [0, 48], sizes = [2, 48], strides = [1, 1]} : vector<2x96xf32> to vector<2x48xf32>
    %65 = vector.extract_strided_slice %27 {offsets = [0, 16], sizes = [2, 16], strides = [1, 1]} : vector<2x32xf32> to vector<2x16xf32>
    %66 = vector.extract_strided_slice %63 {offsets = [0, 0], sizes = [2, 16], strides = [1, 1]} : vector<2x48xf32> to vector<2x16xf32>
    %67 = vector.extract_strided_slice %64 {offsets = [0, 0], sizes = [2, 16], strides = [1, 1]} : vector<2x48xf32> to vector<2x16xf32>
    %68 = arith.addf %66, %67 : vector<2x16xf32>
    %69 = arith.negf %68 : vector<2x16xf32>
    %70 = math.exp %69 : vector<2x16xf32>
    %cst_41 = arith.constant 1.000000e+00 : f32
    %71 = vector.broadcast %cst_41 : f32 to vector<2x16xf32>
    %72 = arith.addf %71, %70 : vector<2x16xf32>
    %73 = arith.divf %71, %72 : vector<2x16xf32>
    %74 = vector.extract_strided_slice %63 {offsets = [0, 16], sizes = [2, 16], strides = [1, 1]} : vector<2x48xf32> to vector<2x16xf32>
    %75 = vector.extract_strided_slice %64 {offsets = [0, 16], sizes = [2, 16], strides = [1, 1]} : vector<2x48xf32> to vector<2x16xf32>
    %76 = arith.addf %74, %75 : vector<2x16xf32>
    %77 = arith.negf %76 : vector<2x16xf32>
    %78 = math.exp %77 : vector<2x16xf32>
    %cst_42 = arith.constant 1.000000e+00 : f32
    %79 = vector.broadcast %cst_42 : f32 to vector<2x16xf32>
    %80 = arith.addf %79, %78 : vector<2x16xf32>
    %81 = arith.divf %79, %80 : vector<2x16xf32>
    %82 = vector.extract_strided_slice %63 {offsets = [0, 32], sizes = [2, 16], strides = [1, 1]} : vector<2x48xf32> to vector<2x16xf32>
    %83 = vector.extract_strided_slice %64 {offsets = [0, 32], sizes = [2, 16], strides = [1, 1]} : vector<2x48xf32> to vector<2x16xf32>
    %84 = arith.mulf %73, %83 : vector<2x16xf32>
    %85 = arith.addf %82, %84 : vector<2x16xf32>
    %86 = math.tanh %85 : vector<2x16xf32>
    %87 = arith.subf %65, %86 : vector<2x16xf32>
    %88 = arith.mulf %81, %87 : vector<2x16xf32>
    %89 = arith.addf %86, %88 : vector<2x16xf32>
    %90 = arith.index_cast %c0_i32_33 : i32 to index
    %c0_43 = arith.constant 0 : index
    %c0_44 = arith.constant 0 : index
    %91 = vector.load %arg12[%90, %c0_43, %c0_44] : memref<8x2x16xf32, #tpu.memory_space<vmem>>, vector<1x2x16xf32>
    %92 = vector.shape_cast %91 : vector<1x2x16xf32> to vector<2x16xf32>
    %93 = vector.shape_cast %59 : vector<2x16xf32> to vector<1x2x16xf32>
    tpu.vector_store %arg12[%90, %c0_43, %c0_44], %93 {strides = array<i32>} : memref<8x2x16xf32, #tpu.memory_space<vmem>>, vector<1x2x16xf32>,
    %c7_i32_45 = arith.constant 7 : i32
    %94 = arith.subi %c7_i32_45, %c0_i32_33 : i32
    %95 = arith.index_cast %94 : i32 to index
    %c0_46 = arith.constant 0 : index
    %c0_47 = arith.constant 0 : index
    %96 = vector.load %arg13[%95, %c0_46, %c0_47] : memref<8x2x16xf32, #tpu.memory_space<vmem>>, vector<1x2x16xf32>
    %97 = vector.shape_cast %96 : vector<1x2x16xf32> to vector<2x16xf32>
    %98 = vector.shape_cast %89 : vector<2x16xf32> to vector<1x2x16xf32>
    tpu.vector_store %arg13[%95, %c0_46, %c0_47], %98 {strides = array<i32>} : memref<8x2x16xf32, #tpu.memory_space<vmem>>, vector<1x2x16xf32>,
    %99 = tpu.concatenate %59, %89 in 1 : vector<2x16xf32>, vector<2x16xf32> -> vector<2x32xf32>
    %c1_i32 = arith.constant 1 : i32
    %cst_48 = arith.constant dense<0.000000e+00> : vector<2x96xf32>
    %100 = tpu.matmul %99, %25, %cst_48 {dimension_numbers = #tpu.dot_dimension_numbers<[1], [0], [0], [1], [0, 0, 1, 1], [], []>} : vector<2x32xf32>, vector<32x96xf32>, vector<2x96xf32> -> vector<2x96xf32>
    %101 = vector.broadcast %26 : vector<1x96xf32> to vector<2x96xf32>
    %102 = arith.addf %100, %101 : vector<2x96xf32>
    %103 = arith.index_cast %c1_i32 : i32 to index
    %c0_49 = arith.constant 0 : index
    %c0_50 = arith.constant 0 : index
    %104 = vector.load %arg15[%103, %c0_49, %c0_50] : memref<8x2x48xf32, #tpu.memory_space<vmem>>, vector<1x2x48xf32>
    %105 = vector.shape_cast %104 : vector<1x2x48xf32> to vector<2x48xf32>
    %106 = vector.extract_strided_slice %102 {offsets = [0, 0], sizes = [2, 48], strides = [1, 1]} : vector<2x96xf32> to vector<2x48xf32>
    %107 = vector.extract_strided_slice %99 {offsets = [0, 0], sizes = [2, 16], strides = [1, 1]} : vector<2x32xf32> to vector<2x16xf32>
    %108 = vector.extract_strided_slice %105 {offsets = [0, 0], sizes = [2, 16], strides = [1, 1]} : vector<2x48xf32> to vector<2x16xf32>
    %109 = vector.extract_strided_slice %106 {offsets = [0, 0], sizes = [2, 16], strides = [1, 1]} : vector<2x48xf32> to vector<2x16xf32>
    %110 = arith.addf %108, %109 : vector<2x16xf32>
    %111 = arith.negf %110 : vector<2x16xf32>
    %112 = math.exp %111 : vector<2x16xf32>
    %cst_51 = arith.constant 1.000000e+00 : f32
    %113 = vector.broadcast %cst_51 : f32 to vector<2x16xf32>
    %114 = arith.addf %113, %112 : vector<2x16xf32>
    %115 = arith.divf %113, %114 : vector<2x16xf32>
    %116 = vector.extract_strided_slice %105 {offsets = [0, 16], sizes = [2, 16], strides = [1, 1]} : vector<2x48xf32> to vector<2x16xf32>
    %117 = vector.extract_strided_slice %106 {offsets = [0, 16], sizes = [2, 16], strides = [1, 1]} : vector<2x48xf32> to vector<2x16xf32>
    %118 = arith.addf %116, %117 : vector<2x16xf32>
    %119 = arith.negf %118 : vector<2x16xf32>
    %120 = math.exp %119 : vector<2x16xf32>
    %cst_52 = arith.constant 1.000000e+00 : f32
    %121 = vector.broadcast %cst_52 : f32 to vector<2x16xf32>
    %122 = arith.addf %121, %120 : vector<2x16xf32>
    %123 = arith.divf %121, %122 : vector<2x16xf32>
    %124 = vector.extract_strided_slice %105 {offsets = [0, 32], sizes = [2, 16], strides = [1, 1]} : vector<2x48xf32> to vector<2x16xf32>
    %125 = vector.extract_strided_slice %106 {offsets = [0, 32], sizes = [2, 16], strides = [1, 1]} : vector<2x48xf32> to vector<2x16xf32>
    %126 = arith.mulf %115, %125 : vector<2x16xf32>
    %127 = arith.addf %124, %126 : vector<2x16xf32>
    %128 = math.tanh %127 : vector<2x16xf32>
    %129 = arith.subf %107, %128 : vector<2x16xf32>
    %130 = arith.mulf %123, %129 : vector<2x16xf32>
    %131 = arith.addf %128, %130 : vector<2x16xf32>
    %c7_i32_53 = arith.constant 7 : i32
    %132 = arith.subi %c7_i32_53, %c1_i32 : i32
    %133 = arith.index_cast %132 : i32 to index
    %c0_54 = arith.constant 0 : index
    %c0_55 = arith.constant 0 : index
    %134 = vector.load %arg16[%133, %c0_54, %c0_55] : memref<8x2x48xf32, #tpu.memory_space<vmem>>, vector<1x2x48xf32>
    %135 = vector.shape_cast %134 : vector<1x2x48xf32> to vector<2x48xf32>
    %136 = vector.extract_strided_slice %102 {offsets = [0, 48], sizes = [2, 48], strides = [1, 1]} : vector<2x96xf32> to vector<2x48xf32>
    %137 = vector.extract_strided_slice %99 {offsets = [0, 16], sizes = [2, 16], strides = [1, 1]} : vector<2x32xf32> to vector<2x16xf32>
    %138 = vector.extract_strided_slice %135 {offsets = [0, 0], sizes = [2, 16], strides = [1, 1]} : vector<2x48xf32> to vector<2x16xf32>
    %139 = vector.extract_strided_slice %136 {offsets = [0, 0], sizes = [2, 16], strides = [1, 1]} : vector<2x48xf32> to vector<2x16xf32>
    %140 = arith.addf %138, %139 : vector<2x16xf32>
    %141 = arith.negf %140 : vector<2x16xf32>
    %142 = math.exp %141 : vector<2x16xf32>
    %cst_56 = arith.constant 1.000000e+00 : f32
    %143 = vector.broadcast %cst_56 : f32 to vector<2x16xf32>
    %144 = arith.addf %143, %142 : vector<2x16xf32>
    %145 = arith.divf %143, %144 : vector<2x16xf32>
    %146 = vector.extract_strided_slice %135 {offsets = [0, 16], sizes = [2, 16], strides = [1, 1]} : vector<2x48xf32> to vector<2x16xf32>
    %147 = vector.extract_strided_slice %136 {offsets = [0, 16], sizes = [2, 16], strides = [1, 1]} : vector<2x48xf32> to vector<2x16xf32>
    %148 = arith.addf %146, %147 : vector<2x16xf32>
    %149 = arith.negf %148 : vector<2x16xf32>
    %150 = math.exp %149 : vector<2x16xf32>
    %cst_57 = arith.constant 1.000000e+00 : f32
    %151 = vector.broadcast %cst_57 : f32 to vector<2x16xf32>
    %152 = arith.addf %151, %150 : vector<2x16xf32>
    %153 = arith.divf %151, %152 : vector<2x16xf32>
    %154 = vector.extract_strided_slice %135 {offsets = [0, 32], sizes = [2, 16], strides = [1, 1]} : vector<2x48xf32> to vector<2x16xf32>
    %155 = vector.extract_strided_slice %136 {offsets = [0, 32], sizes = [2, 16], strides = [1, 1]} : vector<2x48xf32> to vector<2x16xf32>
    %156 = arith.mulf %145, %155 : vector<2x16xf32>
    %157 = arith.addf %154, %156 : vector<2x16xf32>
    %158 = math.tanh %157 : vector<2x16xf32>
    %159 = arith.subf %137, %158 : vector<2x16xf32>
    %160 = arith.mulf %153, %159 : vector<2x16xf32>
    %161 = arith.addf %158, %160 : vector<2x16xf32>
    %162 = arith.index_cast %c1_i32 : i32 to index
    %c0_58 = arith.constant 0 : index
    %c0_59 = arith.constant 0 : index
    %163 = vector.load %arg12[%162, %c0_58, %c0_59] : memref<8x2x16xf32, #tpu.memory_space<vmem>>, vector<1x2x16xf32>
    %164 = vector.shape_cast %163 : vector<1x2x16xf32> to vector<2x16xf32>
    %165 = vector.shape_cast %131 : vector<2x16xf32> to vector<1x2x16xf32>
    tpu.vector_store %arg12[%162, %c0_58, %c0_59], %165 {strides = array<i32>} : memref<8x2x16xf32, #tpu.memory_space<vmem>>, vector<1x2x16xf32>,
    %c7_i32_60 = arith.constant 7 : i32
    %166 = arith.subi %c7_i32_60, %c1_i32 : i32
    %167 = arith.index_cast %166 : i32 to index
    %c0_61 = arith.constant 0 : index
    %c0_62 = arith.constant 0 : index
    %168 = vector.load %arg13[%167, %c0_61, %c0_62] : memref<8x2x16xf32, #tpu.memory_space<vmem>>, vector<1x2x16xf32>
    %169 = vector.shape_cast %168 : vector<1x2x16xf32> to vector<2x16xf32>
    %170 = vector.shape_cast %161 : vector<2x16xf32> to vector<1x2x16xf32>
    tpu.vector_store %arg13[%167, %c0_61, %c0_62], %170 {strides = array<i32>} : memref<8x2x16xf32, #tpu.memory_space<vmem>>, vector<1x2x16xf32>,
    %171 = tpu.concatenate %131, %161 in 1 : vector<2x16xf32>, vector<2x16xf32> -> vector<2x32xf32>
    %c2_i32 = arith.constant 2 : i32
    %cst_63 = arith.constant dense<0.000000e+00> : vector<2x96xf32>
    %172 = tpu.matmul %171, %25, %cst_63 {dimension_numbers = #tpu.dot_dimension_numbers<[1], [0], [0], [1], [0, 0, 1, 1], [], []>} : vector<2x32xf32>, vector<32x96xf32>, vector<2x96xf32> -> vector<2x96xf32>
    %173 = vector.broadcast %26 : vector<1x96xf32> to vector<2x96xf32>
    %174 = arith.addf %172, %173 : vector<2x96xf32>
    %175 = arith.index_cast %c2_i32 : i32 to index
    %c0_64 = arith.constant 0 : index
    %c0_65 = arith.constant 0 : index
    %176 = vector.load %arg15[%175, %c0_64, %c0_65] : memref<8x2x48xf32, #tpu.memory_space<vmem>>, vector<1x2x48xf32>
    %177 = vector.shape_cast %176 : vector<1x2x48xf32> to vector<2x48xf32>
    %178 = vector.extract_strided_slice %174 {offsets = [0, 0], sizes = [2, 48], strides = [1, 1]} : vector<2x96xf32> to vector<2x48xf32>
    %179 = vector.extract_strided_slice %171 {offsets = [0, 0], sizes = [2, 16], strides = [1, 1]} : vector<2x32xf32> to vector<2x16xf32>
    %180 = vector.extract_strided_slice %177 {offsets = [0, 0], sizes = [2, 16], strides = [1, 1]} : vector<2x48xf32> to vector<2x16xf32>
    %181 = vector.extract_strided_slice %178 {offsets = [0, 0], sizes = [2, 16], strides = [1, 1]} : vector<2x48xf32> to vector<2x16xf32>
    %182 = arith.addf %180, %181 : vector<2x16xf32>
    %183 = arith.negf %182 : vector<2x16xf32>
    %184 = math.exp %183 : vector<2x16xf32>
    %cst_66 = arith.constant 1.000000e+00 : f32
    %185 = vector.broadcast %cst_66 : f32 to vector<2x16xf32>
    %186 = arith.addf %185, %184 : vector<2x16xf32>
    %187 = arith.divf %185, %186 : vector<2x16xf32>
    %188 = vector.extract_strided_slice %177 {offsets = [0, 16], sizes = [2, 16], strides = [1, 1]} : vector<2x48xf32> to vector<2x16xf32>
    %189 = vector.extract_strided_slice %178 {offsets = [0, 16], sizes = [2, 16], strides = [1, 1]} : vector<2x48xf32> to vector<2x16xf32>
    %190 = arith.addf %188, %189 : vector<2x16xf32>
    %191 = arith.negf %190 : vector<2x16xf32>
    %192 = math.exp %191 : vector<2x16xf32>
    %cst_67 = arith.constant 1.000000e+00 : f32
    %193 = vector.broadcast %cst_67 : f32 to vector<2x16xf32>
    %194 = arith.addf %193, %192 : vector<2x16xf32>
    %195 = arith.divf %193, %194 : vector<2x16xf32>
    %196 = vector.extract_strided_slice %177 {offsets = [0, 32], sizes = [2, 16], strides = [1, 1]} : vector<2x48xf32> to vector<2x16xf32>
    %197 = vector.extract_strided_slice %178 {offsets = [0, 32], sizes = [2, 16], strides = [1, 1]} : vector<2x48xf32> to vector<2x16xf32>
    %198 = arith.mulf %187, %197 : vector<2x16xf32>
    %199 = arith.addf %196, %198 : vector<2x16xf32>
    %200 = math.tanh %199 : vector<2x16xf32>
    %201 = arith.subf %179, %200 : vector<2x16xf32>
    %202 = arith.mulf %195, %201 : vector<2x16xf32>
    %203 = arith.addf %200, %202 : vector<2x16xf32>
    %c7_i32_68 = arith.constant 7 : i32
    %204 = arith.subi %c7_i32_68, %c2_i32 : i32
    %205 = arith.index_cast %204 : i32 to index
    %c0_69 = arith.constant 0 : index
    %c0_70 = arith.constant 0 : index
    %206 = vector.load %arg16[%205, %c0_69, %c0_70] : memref<8x2x48xf32, #tpu.memory_space<vmem>>, vector<1x2x48xf32>
    %207 = vector.shape_cast %206 : vector<1x2x48xf32> to vector<2x48xf32>
    %208 = vector.extract_strided_slice %174 {offsets = [0, 48], sizes = [2, 48], strides = [1, 1]} : vector<2x96xf32> to vector<2x48xf32>
    %209 = vector.extract_strided_slice %171 {offsets = [0, 16], sizes = [2, 16], strides = [1, 1]} : vector<2x32xf32> to vector<2x16xf32>
    %210 = vector.extract_strided_slice %207 {offsets = [0, 0], sizes = [2, 16], strides = [1, 1]} : vector<2x48xf32> to vector<2x16xf32>
    %211 = vector.extract_strided_slice %208 {offsets = [0, 0], sizes = [2, 16], strides = [1, 1]} : vector<2x48xf32> to vector<2x16xf32>
    %212 = arith.addf %210, %211 : vector<2x16xf32>
    %213 = arith.negf %212 : vector<2x16xf32>
    %214 = math.exp %213 : vector<2x16xf32>
    %cst_71 = arith.constant 1.000000e+00 : f32
    %215 = vector.broadcast %cst_71 : f32 to vector<2x16xf32>
    %216 = arith.addf %215, %214 : vector<2x16xf32>
    %217 = arith.divf %215, %216 : vector<2x16xf32>
    %218 = vector.extract_strided_slice %207 {offsets = [0, 16], sizes = [2, 16], strides = [1, 1]} : vector<2x48xf32> to vector<2x16xf32>
    %219 = vector.extract_strided_slice %208 {offsets = [0, 16], sizes = [2, 16], strides = [1, 1]} : vector<2x48xf32> to vector<2x16xf32>
    %220 = arith.addf %218, %219 : vector<2x16xf32>
    %221 = arith.negf %220 : vector<2x16xf32>
    %222 = math.exp %221 : vector<2x16xf32>
    %cst_72 = arith.constant 1.000000e+00 : f32
    %223 = vector.broadcast %cst_72 : f32 to vector<2x16xf32>
    %224 = arith.addf %223, %222 : vector<2x16xf32>
    %225 = arith.divf %223, %224 : vector<2x16xf32>
    %226 = vector.extract_strided_slice %207 {offsets = [0, 32], sizes = [2, 16], strides = [1, 1]} : vector<2x48xf32> to vector<2x16xf32>
    %227 = vector.extract_strided_slice %208 {offsets = [0, 32], sizes = [2, 16], strides = [1, 1]} : vector<2x48xf32> to vector<2x16xf32>
    %228 = arith.mulf %217, %227 : vector<2x16xf32>
    %229 = arith.addf %226, %228 : vector<2x16xf32>
    %230 = math.tanh %229 : vector<2x16xf32>
    %231 = arith.subf %209, %230 : vector<2x16xf32>
    %232 = arith.mulf %225, %231 : vector<2x16xf32>
    %233 = arith.addf %230, %232 : vector<2x16xf32>
    %234 = arith.index_cast %c2_i32 : i32 to index
    %c0_73 = arith.constant 0 : index
    %c0_74 = arith.constant 0 : index
    %235 = vector.load %arg12[%234, %c0_73, %c0_74] : memref<8x2x16xf32, #tpu.memory_space<vmem>>, vector<1x2x16xf32>
    %236 = vector.shape_cast %235 : vector<1x2x16xf32> to vector<2x16xf32>
    %237 = vector.shape_cast %203 : vector<2x16xf32> to vector<1x2x16xf32>
    tpu.vector_store %arg12[%234, %c0_73, %c0_74], %237 {strides = array<i32>} : memref<8x2x16xf32, #tpu.memory_space<vmem>>, vector<1x2x16xf32>,
    %c7_i32_75 = arith.constant 7 : i32
    %238 = arith.subi %c7_i32_75, %c2_i32 : i32
    %239 = arith.index_cast %238 : i32 to index
    %c0_76 = arith.constant 0 : index
    %c0_77 = arith.constant 0 : index
    %240 = vector.load %arg13[%239, %c0_76, %c0_77] : memref<8x2x16xf32, #tpu.memory_space<vmem>>, vector<1x2x16xf32>
    %241 = vector.shape_cast %240 : vector<1x2x16xf32> to vector<2x16xf32>
    %242 = vector.shape_cast %233 : vector<2x16xf32> to vector<1x2x16xf32>
    tpu.vector_store %arg13[%239, %c0_76, %c0_77], %242 {strides = array<i32>} : memref<8x2x16xf32, #tpu.memory_space<vmem>>, vector<1x2x16xf32>,
    %243 = tpu.concatenate %203, %233 in 1 : vector<2x16xf32>, vector<2x16xf32> -> vector<2x32xf32>
    %c3_i32 = arith.constant 3 : i32
    %cst_78 = arith.constant dense<0.000000e+00> : vector<2x96xf32>
    %244 = tpu.matmul %243, %25, %cst_78 {dimension_numbers = #tpu.dot_dimension_numbers<[1], [0], [0], [1], [0, 0, 1, 1], [], []>} : vector<2x32xf32>, vector<32x96xf32>, vector<2x96xf32> -> vector<2x96xf32>
    %245 = vector.broadcast %26 : vector<1x96xf32> to vector<2x96xf32>
    %246 = arith.addf %244, %245 : vector<2x96xf32>
    %247 = arith.index_cast %c3_i32 : i32 to index
    %c0_79 = arith.constant 0 : index
    %c0_80 = arith.constant 0 : index
    %248 = vector.load %arg15[%247, %c0_79, %c0_80] : memref<8x2x48xf32, #tpu.memory_space<vmem>>, vector<1x2x48xf32>
    %249 = vector.shape_cast %248 : vector<1x2x48xf32> to vector<2x48xf32>
    %250 = vector.extract_strided_slice %246 {offsets = [0, 0], sizes = [2, 48], strides = [1, 1]} : vector<2x96xf32> to vector<2x48xf32>
    %251 = vector.extract_strided_slice %243 {offsets = [0, 0], sizes = [2, 16], strides = [1, 1]} : vector<2x32xf32> to vector<2x16xf32>
    %252 = vector.extract_strided_slice %249 {offsets = [0, 0], sizes = [2, 16], strides = [1, 1]} : vector<2x48xf32> to vector<2x16xf32>
    %253 = vector.extract_strided_slice %250 {offsets = [0, 0], sizes = [2, 16], strides = [1, 1]} : vector<2x48xf32> to vector<2x16xf32>
    %254 = arith.addf %252, %253 : vector<2x16xf32>
    %255 = arith.negf %254 : vector<2x16xf32>
    %256 = math.exp %255 : vector<2x16xf32>
    %cst_81 = arith.constant 1.000000e+00 : f32
    %257 = vector.broadcast %cst_81 : f32 to vector<2x16xf32>
    %258 = arith.addf %257, %256 : vector<2x16xf32>
    %259 = arith.divf %257, %258 : vector<2x16xf32>
    %260 = vector.extract_strided_slice %249 {offsets = [0, 16], sizes = [2, 16], strides = [1, 1]} : vector<2x48xf32> to vector<2x16xf32>
    %261 = vector.extract_strided_slice %250 {offsets = [0, 16], sizes = [2, 16], strides = [1, 1]} : vector<2x48xf32> to vector<2x16xf32>
    %262 = arith.addf %260, %261 : vector<2x16xf32>
    %263 = arith.negf %262 : vector<2x16xf32>
    %264 = math.exp %263 : vector<2x16xf32>
    %cst_82 = arith.constant 1.000000e+00 : f32
    %265 = vector.broadcast %cst_82 : f32 to vector<2x16xf32>
    %266 = arith.addf %265, %264 : vector<2x16xf32>
    %267 = arith.divf %265, %266 : vector<2x16xf32>
    %268 = vector.extract_strided_slice %249 {offsets = [0, 32], sizes = [2, 16], strides = [1, 1]} : vector<2x48xf32> to vector<2x16xf32>
    %269 = vector.extract_strided_slice %250 {offsets = [0, 32], sizes = [2, 16], strides = [1, 1]} : vector<2x48xf32> to vector<2x16xf32>
    %270 = arith.mulf %259, %269 : vector<2x16xf32>
    %271 = arith.addf %268, %270 : vector<2x16xf32>
    %272 = math.tanh %271 : vector<2x16xf32>
    %273 = arith.subf %251, %272 : vector<2x16xf32>
    %274 = arith.mulf %267, %273 : vector<2x16xf32>
    %275 = arith.addf %272, %274 : vector<2x16xf32>
    %c7_i32_83 = arith.constant 7 : i32
    %276 = arith.subi %c7_i32_83, %c3_i32 : i32
    %277 = arith.index_cast %276 : i32 to index
    %c0_84 = arith.constant 0 : index
    %c0_85 = arith.constant 0 : index
    %278 = vector.load %arg16[%277, %c0_84, %c0_85] : memref<8x2x48xf32, #tpu.memory_space<vmem>>, vector<1x2x48xf32>
    %279 = vector.shape_cast %278 : vector<1x2x48xf32> to vector<2x48xf32>
    %280 = vector.extract_strided_slice %246 {offsets = [0, 48], sizes = [2, 48], strides = [1, 1]} : vector<2x96xf32> to vector<2x48xf32>
    %281 = vector.extract_strided_slice %243 {offsets = [0, 16], sizes = [2, 16], strides = [1, 1]} : vector<2x32xf32> to vector<2x16xf32>
    %282 = vector.extract_strided_slice %279 {offsets = [0, 0], sizes = [2, 16], strides = [1, 1]} : vector<2x48xf32> to vector<2x16xf32>
    %283 = vector.extract_strided_slice %280 {offsets = [0, 0], sizes = [2, 16], strides = [1, 1]} : vector<2x48xf32> to vector<2x16xf32>
    %284 = arith.addf %282, %283 : vector<2x16xf32>
    %285 = arith.negf %284 : vector<2x16xf32>
    %286 = math.exp %285 : vector<2x16xf32>
    %cst_86 = arith.constant 1.000000e+00 : f32
    %287 = vector.broadcast %cst_86 : f32 to vector<2x16xf32>
    %288 = arith.addf %287, %286 : vector<2x16xf32>
    %289 = arith.divf %287, %288 : vector<2x16xf32>
    %290 = vector.extract_strided_slice %279 {offsets = [0, 16], sizes = [2, 16], strides = [1, 1]} : vector<2x48xf32> to vector<2x16xf32>
    %291 = vector.extract_strided_slice %280 {offsets = [0, 16], sizes = [2, 16], strides = [1, 1]} : vector<2x48xf32> to vector<2x16xf32>
    %292 = arith.addf %290, %291 : vector<2x16xf32>
    %293 = arith.negf %292 : vector<2x16xf32>
    %294 = math.exp %293 : vector<2x16xf32>
    %cst_87 = arith.constant 1.000000e+00 : f32
    %295 = vector.broadcast %cst_87 : f32 to vector<2x16xf32>
    %296 = arith.addf %295, %294 : vector<2x16xf32>
    %297 = arith.divf %295, %296 : vector<2x16xf32>
    %298 = vector.extract_strided_slice %279 {offsets = [0, 32], sizes = [2, 16], strides = [1, 1]} : vector<2x48xf32> to vector<2x16xf32>
    %299 = vector.extract_strided_slice %280 {offsets = [0, 32], sizes = [2, 16], strides = [1, 1]} : vector<2x48xf32> to vector<2x16xf32>
    %300 = arith.mulf %289, %299 : vector<2x16xf32>
    %301 = arith.addf %298, %300 : vector<2x16xf32>
    %302 = math.tanh %301 : vector<2x16xf32>
    %303 = arith.subf %281, %302 : vector<2x16xf32>
    %304 = arith.mulf %297, %303 : vector<2x16xf32>
    %305 = arith.addf %302, %304 : vector<2x16xf32>
    %306 = arith.index_cast %c3_i32 : i32 to index
    %c0_88 = arith.constant 0 : index
    %c0_89 = arith.constant 0 : index
    %307 = vector.load %arg12[%306, %c0_88, %c0_89] : memref<8x2x16xf32, #tpu.memory_space<vmem>>, vector<1x2x16xf32>
    %308 = vector.shape_cast %307 : vector<1x2x16xf32> to vector<2x16xf32>
    %309 = vector.shape_cast %275 : vector<2x16xf32> to vector<1x2x16xf32>
    tpu.vector_store %arg12[%306, %c0_88, %c0_89], %309 {strides = array<i32>} : memref<8x2x16xf32, #tpu.memory_space<vmem>>, vector<1x2x16xf32>,
    %c7_i32_90 = arith.constant 7 : i32
    %310 = arith.subi %c7_i32_90, %c3_i32 : i32
    %311 = arith.index_cast %310 : i32 to index
    %c0_91 = arith.constant 0 : index
    %c0_92 = arith.constant 0 : index
    %312 = vector.load %arg13[%311, %c0_91, %c0_92] : memref<8x2x16xf32, #tpu.memory_space<vmem>>, vector<1x2x16xf32>
    %313 = vector.shape_cast %312 : vector<1x2x16xf32> to vector<2x16xf32>
    %314 = vector.shape_cast %305 : vector<2x16xf32> to vector<1x2x16xf32>
    tpu.vector_store %arg13[%311, %c0_91, %c0_92], %314 {strides = array<i32>} : memref<8x2x16xf32, #tpu.memory_space<vmem>>, vector<1x2x16xf32>,
    %315 = tpu.concatenate %275, %305 in 1 : vector<2x16xf32>, vector<2x16xf32> -> vector<2x32xf32>
    %c4_i32 = arith.constant 4 : i32
    %cst_93 = arith.constant dense<0.000000e+00> : vector<2x96xf32>
    %316 = tpu.matmul %315, %25, %cst_93 {dimension_numbers = #tpu.dot_dimension_numbers<[1], [0], [0], [1], [0, 0, 1, 1], [], []>} : vector<2x32xf32>, vector<32x96xf32>, vector<2x96xf32> -> vector<2x96xf32>
    %317 = vector.broadcast %26 : vector<1x96xf32> to vector<2x96xf32>
    %318 = arith.addf %316, %317 : vector<2x96xf32>
    %319 = arith.index_cast %c4_i32 : i32 to index
    %c0_94 = arith.constant 0 : index
    %c0_95 = arith.constant 0 : index
    %320 = vector.load %arg15[%319, %c0_94, %c0_95] : memref<8x2x48xf32, #tpu.memory_space<vmem>>, vector<1x2x48xf32>
    %321 = vector.shape_cast %320 : vector<1x2x48xf32> to vector<2x48xf32>
    %322 = vector.extract_strided_slice %318 {offsets = [0, 0], sizes = [2, 48], strides = [1, 1]} : vector<2x96xf32> to vector<2x48xf32>
    %323 = vector.extract_strided_slice %315 {offsets = [0, 0], sizes = [2, 16], strides = [1, 1]} : vector<2x32xf32> to vector<2x16xf32>
    %324 = vector.extract_strided_slice %321 {offsets = [0, 0], sizes = [2, 16], strides = [1, 1]} : vector<2x48xf32> to vector<2x16xf32>
    %325 = vector.extract_strided_slice %322 {offsets = [0, 0], sizes = [2, 16], strides = [1, 1]} : vector<2x48xf32> to vector<2x16xf32>
    %326 = arith.addf %324, %325 : vector<2x16xf32>
    %327 = arith.negf %326 : vector<2x16xf32>
    %328 = math.exp %327 : vector<2x16xf32>
    %cst_96 = arith.constant 1.000000e+00 : f32
    %329 = vector.broadcast %cst_96 : f32 to vector<2x16xf32>
    %330 = arith.addf %329, %328 : vector<2x16xf32>
    %331 = arith.divf %329, %330 : vector<2x16xf32>
    %332 = vector.extract_strided_slice %321 {offsets = [0, 16], sizes = [2, 16], strides = [1, 1]} : vector<2x48xf32> to vector<2x16xf32>
    %333 = vector.extract_strided_slice %322 {offsets = [0, 16], sizes = [2, 16], strides = [1, 1]} : vector<2x48xf32> to vector<2x16xf32>
    %334 = arith.addf %332, %333 : vector<2x16xf32>
    %335 = arith.negf %334 : vector<2x16xf32>
    %336 = math.exp %335 : vector<2x16xf32>
    %cst_97 = arith.constant 1.000000e+00 : f32
    %337 = vector.broadcast %cst_97 : f32 to vector<2x16xf32>
    %338 = arith.addf %337, %336 : vector<2x16xf32>
    %339 = arith.divf %337, %338 : vector<2x16xf32>
    %340 = vector.extract_strided_slice %321 {offsets = [0, 32], sizes = [2, 16], strides = [1, 1]} : vector<2x48xf32> to vector<2x16xf32>
    %341 = vector.extract_strided_slice %322 {offsets = [0, 32], sizes = [2, 16], strides = [1, 1]} : vector<2x48xf32> to vector<2x16xf32>
    %342 = arith.mulf %331, %341 : vector<2x16xf32>
    %343 = arith.addf %340, %342 : vector<2x16xf32>
    %344 = math.tanh %343 : vector<2x16xf32>
    %345 = arith.subf %323, %344 : vector<2x16xf32>
    %346 = arith.mulf %339, %345 : vector<2x16xf32>
    %347 = arith.addf %344, %346 : vector<2x16xf32>
    %c7_i32_98 = arith.constant 7 : i32
    %348 = arith.subi %c7_i32_98, %c4_i32 : i32
    %349 = arith.index_cast %348 : i32 to index
    %c0_99 = arith.constant 0 : index
    %c0_100 = arith.constant 0 : index
    %350 = vector.load %arg16[%349, %c0_99, %c0_100] : memref<8x2x48xf32, #tpu.memory_space<vmem>>, vector<1x2x48xf32>
    %351 = vector.shape_cast %350 : vector<1x2x48xf32> to vector<2x48xf32>
    %352 = vector.extract_strided_slice %318 {offsets = [0, 48], sizes = [2, 48], strides = [1, 1]} : vector<2x96xf32> to vector<2x48xf32>
    %353 = vector.extract_strided_slice %315 {offsets = [0, 16], sizes = [2, 16], strides = [1, 1]} : vector<2x32xf32> to vector<2x16xf32>
    %354 = vector.extract_strided_slice %351 {offsets = [0, 0], sizes = [2, 16], strides = [1, 1]} : vector<2x48xf32> to vector<2x16xf32>
    %355 = vector.extract_strided_slice %352 {offsets = [0, 0], sizes = [2, 16], strides = [1, 1]} : vector<2x48xf32> to vector<2x16xf32>
    %356 = arith.addf %354, %355 : vector<2x16xf32>
    %357 = arith.negf %356 : vector<2x16xf32>
    %358 = math.exp %357 : vector<2x16xf32>
    %cst_101 = arith.constant 1.000000e+00 : f32
    %359 = vector.broadcast %cst_101 : f32 to vector<2x16xf32>
    %360 = arith.addf %359, %358 : vector<2x16xf32>
    %361 = arith.divf %359, %360 : vector<2x16xf32>
    %362 = vector.extract_strided_slice %351 {offsets = [0, 16], sizes = [2, 16], strides = [1, 1]} : vector<2x48xf32> to vector<2x16xf32>
    %363 = vector.extract_strided_slice %352 {offsets = [0, 16], sizes = [2, 16], strides = [1, 1]} : vector<2x48xf32> to vector<2x16xf32>
    %364 = arith.addf %362, %363 : vector<2x16xf32>
    %365 = arith.negf %364 : vector<2x16xf32>
    %366 = math.exp %365 : vector<2x16xf32>
    %cst_102 = arith.constant 1.000000e+00 : f32
    %367 = vector.broadcast %cst_102 : f32 to vector<2x16xf32>
    %368 = arith.addf %367, %366 : vector<2x16xf32>
    %369 = arith.divf %367, %368 : vector<2x16xf32>
    %370 = vector.extract_strided_slice %351 {offsets = [0, 32], sizes = [2, 16], strides = [1, 1]} : vector<2x48xf32> to vector<2x16xf32>
    %371 = vector.extract_strided_slice %352 {offsets = [0, 32], sizes = [2, 16], strides = [1, 1]} : vector<2x48xf32> to vector<2x16xf32>
    %372 = arith.mulf %361, %371 : vector<2x16xf32>
    %373 = arith.addf %370, %372 : vector<2x16xf32>
    %374 = math.tanh %373 : vector<2x16xf32>
    %375 = arith.subf %353, %374 : vector<2x16xf32>
    %376 = arith.mulf %369, %375 : vector<2x16xf32>
    %377 = arith.addf %374, %376 : vector<2x16xf32>
    %378 = arith.index_cast %c4_i32 : i32 to index
    %c0_103 = arith.constant 0 : index
    %c0_104 = arith.constant 0 : index
    %379 = vector.load %arg12[%378, %c0_103, %c0_104] : memref<8x2x16xf32, #tpu.memory_space<vmem>>, vector<1x2x16xf32>
    %380 = vector.shape_cast %379 : vector<1x2x16xf32> to vector<2x16xf32>
    %381 = vector.shape_cast %347 : vector<2x16xf32> to vector<1x2x16xf32>
    tpu.vector_store %arg12[%378, %c0_103, %c0_104], %381 {strides = array<i32>} : memref<8x2x16xf32, #tpu.memory_space<vmem>>, vector<1x2x16xf32>,
    %c7_i32_105 = arith.constant 7 : i32
    %382 = arith.subi %c7_i32_105, %c4_i32 : i32
    %383 = arith.index_cast %382 : i32 to index
    %c0_106 = arith.constant 0 : index
    %c0_107 = arith.constant 0 : index
    %384 = vector.load %arg13[%383, %c0_106, %c0_107] : memref<8x2x16xf32, #tpu.memory_space<vmem>>, vector<1x2x16xf32>
    %385 = vector.shape_cast %384 : vector<1x2x16xf32> to vector<2x16xf32>
    %386 = vector.shape_cast %377 : vector<2x16xf32> to vector<1x2x16xf32>
    tpu.vector_store %arg13[%383, %c0_106, %c0_107], %386 {strides = array<i32>} : memref<8x2x16xf32, #tpu.memory_space<vmem>>, vector<1x2x16xf32>,
    %387 = tpu.concatenate %347, %377 in 1 : vector<2x16xf32>, vector<2x16xf32> -> vector<2x32xf32>
    %c5_i32 = arith.constant 5 : i32
    %cst_108 = arith.constant dense<0.000000e+00> : vector<2x96xf32>
    %388 = tpu.matmul %387, %25, %cst_108 {dimension_numbers = #tpu.dot_dimension_numbers<[1], [0], [0], [1], [0, 0, 1, 1], [], []>} : vector<2x32xf32>, vector<32x96xf32>, vector<2x96xf32> -> vector<2x96xf32>
    %389 = vector.broadcast %26 : vector<1x96xf32> to vector<2x96xf32>
    %390 = arith.addf %388, %389 : vector<2x96xf32>
    %391 = arith.index_cast %c5_i32 : i32 to index
    %c0_109 = arith.constant 0 : index
    %c0_110 = arith.constant 0 : index
    %392 = vector.load %arg15[%391, %c0_109, %c0_110] : memref<8x2x48xf32, #tpu.memory_space<vmem>>, vector<1x2x48xf32>
    %393 = vector.shape_cast %392 : vector<1x2x48xf32> to vector<2x48xf32>
    %394 = vector.extract_strided_slice %390 {offsets = [0, 0], sizes = [2, 48], strides = [1, 1]} : vector<2x96xf32> to vector<2x48xf32>
    %395 = vector.extract_strided_slice %387 {offsets = [0, 0], sizes = [2, 16], strides = [1, 1]} : vector<2x32xf32> to vector<2x16xf32>
    %396 = vector.extract_strided_slice %393 {offsets = [0, 0], sizes = [2, 16], strides = [1, 1]} : vector<2x48xf32> to vector<2x16xf32>
    %397 = vector.extract_strided_slice %394 {offsets = [0, 0], sizes = [2, 16], strides = [1, 1]} : vector<2x48xf32> to vector<2x16xf32>
    %398 = arith.addf %396, %397 : vector<2x16xf32>
    %399 = arith.negf %398 : vector<2x16xf32>
    %400 = math.exp %399 : vector<2x16xf32>
    %cst_111 = arith.constant 1.000000e+00 : f32
    %401 = vector.broadcast %cst_111 : f32 to vector<2x16xf32>
    %402 = arith.addf %401, %400 : vector<2x16xf32>
    %403 = arith.divf %401, %402 : vector<2x16xf32>
    %404 = vector.extract_strided_slice %393 {offsets = [0, 16], sizes = [2, 16], strides = [1, 1]} : vector<2x48xf32> to vector<2x16xf32>
    %405 = vector.extract_strided_slice %394 {offsets = [0, 16], sizes = [2, 16], strides = [1, 1]} : vector<2x48xf32> to vector<2x16xf32>
    %406 = arith.addf %404, %405 : vector<2x16xf32>
    %407 = arith.negf %406 : vector<2x16xf32>
    %408 = math.exp %407 : vector<2x16xf32>
    %cst_112 = arith.constant 1.000000e+00 : f32
    %409 = vector.broadcast %cst_112 : f32 to vector<2x16xf32>
    %410 = arith.addf %409, %408 : vector<2x16xf32>
    %411 = arith.divf %409, %410 : vector<2x16xf32>
    %412 = vector.extract_strided_slice %393 {offsets = [0, 32], sizes = [2, 16], strides = [1, 1]} : vector<2x48xf32> to vector<2x16xf32>
    %413 = vector.extract_strided_slice %394 {offsets = [0, 32], sizes = [2, 16], strides = [1, 1]} : vector<2x48xf32> to vector<2x16xf32>
    %414 = arith.mulf %403, %413 : vector<2x16xf32>
    %415 = arith.addf %412, %414 : vector<2x16xf32>
    %416 = math.tanh %415 : vector<2x16xf32>
    %417 = arith.subf %395, %416 : vector<2x16xf32>
    %418 = arith.mulf %411, %417 : vector<2x16xf32>
    %419 = arith.addf %416, %418 : vector<2x16xf32>
    %c7_i32_113 = arith.constant 7 : i32
    %420 = arith.subi %c7_i32_113, %c5_i32 : i32
    %421 = arith.index_cast %420 : i32 to index
    %c0_114 = arith.constant 0 : index
    %c0_115 = arith.constant 0 : index
    %422 = vector.load %arg16[%421, %c0_114, %c0_115] : memref<8x2x48xf32, #tpu.memory_space<vmem>>, vector<1x2x48xf32>
    %423 = vector.shape_cast %422 : vector<1x2x48xf32> to vector<2x48xf32>
    %424 = vector.extract_strided_slice %390 {offsets = [0, 48], sizes = [2, 48], strides = [1, 1]} : vector<2x96xf32> to vector<2x48xf32>
    %425 = vector.extract_strided_slice %387 {offsets = [0, 16], sizes = [2, 16], strides = [1, 1]} : vector<2x32xf32> to vector<2x16xf32>
    %426 = vector.extract_strided_slice %423 {offsets = [0, 0], sizes = [2, 16], strides = [1, 1]} : vector<2x48xf32> to vector<2x16xf32>
    %427 = vector.extract_strided_slice %424 {offsets = [0, 0], sizes = [2, 16], strides = [1, 1]} : vector<2x48xf32> to vector<2x16xf32>
    %428 = arith.addf %426, %427 : vector<2x16xf32>
    %429 = arith.negf %428 : vector<2x16xf32>
    %430 = math.exp %429 : vector<2x16xf32>
    %cst_116 = arith.constant 1.000000e+00 : f32
    %431 = vector.broadcast %cst_116 : f32 to vector<2x16xf32>
    %432 = arith.addf %431, %430 : vector<2x16xf32>
    %433 = arith.divf %431, %432 : vector<2x16xf32>
    %434 = vector.extract_strided_slice %423 {offsets = [0, 16], sizes = [2, 16], strides = [1, 1]} : vector<2x48xf32> to vector<2x16xf32>
    %435 = vector.extract_strided_slice %424 {offsets = [0, 16], sizes = [2, 16], strides = [1, 1]} : vector<2x48xf32> to vector<2x16xf32>
    %436 = arith.addf %434, %435 : vector<2x16xf32>
    %437 = arith.negf %436 : vector<2x16xf32>
    %438 = math.exp %437 : vector<2x16xf32>
    %cst_117 = arith.constant 1.000000e+00 : f32
    %439 = vector.broadcast %cst_117 : f32 to vector<2x16xf32>
    %440 = arith.addf %439, %438 : vector<2x16xf32>
    %441 = arith.divf %439, %440 : vector<2x16xf32>
    %442 = vector.extract_strided_slice %423 {offsets = [0, 32], sizes = [2, 16], strides = [1, 1]} : vector<2x48xf32> to vector<2x16xf32>
    %443 = vector.extract_strided_slice %424 {offsets = [0, 32], sizes = [2, 16], strides = [1, 1]} : vector<2x48xf32> to vector<2x16xf32>
    %444 = arith.mulf %433, %443 : vector<2x16xf32>
    %445 = arith.addf %442, %444 : vector<2x16xf32>
    %446 = math.tanh %445 : vector<2x16xf32>
    %447 = arith.subf %425, %446 : vector<2x16xf32>
    %448 = arith.mulf %441, %447 : vector<2x16xf32>
    %449 = arith.addf %446, %448 : vector<2x16xf32>
    %450 = arith.index_cast %c5_i32 : i32 to index
    %c0_118 = arith.constant 0 : index
    %c0_119 = arith.constant 0 : index
    %451 = vector.load %arg12[%450, %c0_118, %c0_119] : memref<8x2x16xf32, #tpu.memory_space<vmem>>, vector<1x2x16xf32>
    %452 = vector.shape_cast %451 : vector<1x2x16xf32> to vector<2x16xf32>
    %453 = vector.shape_cast %419 : vector<2x16xf32> to vector<1x2x16xf32>
    tpu.vector_store %arg12[%450, %c0_118, %c0_119], %453 {strides = array<i32>} : memref<8x2x16xf32, #tpu.memory_space<vmem>>, vector<1x2x16xf32>,
    %c7_i32_120 = arith.constant 7 : i32
    %454 = arith.subi %c7_i32_120, %c5_i32 : i32
    %455 = arith.index_cast %454 : i32 to index
    %c0_121 = arith.constant 0 : index
    %c0_122 = arith.constant 0 : index
    %456 = vector.load %arg13[%455, %c0_121, %c0_122] : memref<8x2x16xf32, #tpu.memory_space<vmem>>, vector<1x2x16xf32>
    %457 = vector.shape_cast %456 : vector<1x2x16xf32> to vector<2x16xf32>
    %458 = vector.shape_cast %449 : vector<2x16xf32> to vector<1x2x16xf32>
    tpu.vector_store %arg13[%455, %c0_121, %c0_122], %458 {strides = array<i32>} : memref<8x2x16xf32, #tpu.memory_space<vmem>>, vector<1x2x16xf32>,
    %459 = tpu.concatenate %419, %449 in 1 : vector<2x16xf32>, vector<2x16xf32> -> vector<2x32xf32>
    %c6_i32 = arith.constant 6 : i32
    %cst_123 = arith.constant dense<0.000000e+00> : vector<2x96xf32>
    %460 = tpu.matmul %459, %25, %cst_123 {dimension_numbers = #tpu.dot_dimension_numbers<[1], [0], [0], [1], [0, 0, 1, 1], [], []>} : vector<2x32xf32>, vector<32x96xf32>, vector<2x96xf32> -> vector<2x96xf32>
    %461 = vector.broadcast %26 : vector<1x96xf32> to vector<2x96xf32>
    %462 = arith.addf %460, %461 : vector<2x96xf32>
    %463 = arith.index_cast %c6_i32 : i32 to index
    %c0_124 = arith.constant 0 : index
    %c0_125 = arith.constant 0 : index
    %464 = vector.load %arg15[%463, %c0_124, %c0_125] : memref<8x2x48xf32, #tpu.memory_space<vmem>>, vector<1x2x48xf32>
    %465 = vector.shape_cast %464 : vector<1x2x48xf32> to vector<2x48xf32>
    %466 = vector.extract_strided_slice %462 {offsets = [0, 0], sizes = [2, 48], strides = [1, 1]} : vector<2x96xf32> to vector<2x48xf32>
    %467 = vector.extract_strided_slice %459 {offsets = [0, 0], sizes = [2, 16], strides = [1, 1]} : vector<2x32xf32> to vector<2x16xf32>
    %468 = vector.extract_strided_slice %465 {offsets = [0, 0], sizes = [2, 16], strides = [1, 1]} : vector<2x48xf32> to vector<2x16xf32>
    %469 = vector.extract_strided_slice %466 {offsets = [0, 0], sizes = [2, 16], strides = [1, 1]} : vector<2x48xf32> to vector<2x16xf32>
    %470 = arith.addf %468, %469 : vector<2x16xf32>
    %471 = arith.negf %470 : vector<2x16xf32>
    %472 = math.exp %471 : vector<2x16xf32>
    %cst_126 = arith.constant 1.000000e+00 : f32
    %473 = vector.broadcast %cst_126 : f32 to vector<2x16xf32>
    %474 = arith.addf %473, %472 : vector<2x16xf32>
    %475 = arith.divf %473, %474 : vector<2x16xf32>
    %476 = vector.extract_strided_slice %465 {offsets = [0, 16], sizes = [2, 16], strides = [1, 1]} : vector<2x48xf32> to vector<2x16xf32>
    %477 = vector.extract_strided_slice %466 {offsets = [0, 16], sizes = [2, 16], strides = [1, 1]} : vector<2x48xf32> to vector<2x16xf32>
    %478 = arith.addf %476, %477 : vector<2x16xf32>
    %479 = arith.negf %478 : vector<2x16xf32>
    %480 = math.exp %479 : vector<2x16xf32>
    %cst_127 = arith.constant 1.000000e+00 : f32
    %481 = vector.broadcast %cst_127 : f32 to vector<2x16xf32>
    %482 = arith.addf %481, %480 : vector<2x16xf32>
    %483 = arith.divf %481, %482 : vector<2x16xf32>
    %484 = vector.extract_strided_slice %465 {offsets = [0, 32], sizes = [2, 16], strides = [1, 1]} : vector<2x48xf32> to vector<2x16xf32>
    %485 = vector.extract_strided_slice %466 {offsets = [0, 32], sizes = [2, 16], strides = [1, 1]} : vector<2x48xf32> to vector<2x16xf32>
    %486 = arith.mulf %475, %485 : vector<2x16xf32>
    %487 = arith.addf %484, %486 : vector<2x16xf32>
    %488 = math.tanh %487 : vector<2x16xf32>
    %489 = arith.subf %467, %488 : vector<2x16xf32>
    %490 = arith.mulf %483, %489 : vector<2x16xf32>
    %491 = arith.addf %488, %490 : vector<2x16xf32>
    %c7_i32_128 = arith.constant 7 : i32
    %492 = arith.subi %c7_i32_128, %c6_i32 : i32
    %493 = arith.index_cast %492 : i32 to index
    %c0_129 = arith.constant 0 : index
    %c0_130 = arith.constant 0 : index
    %494 = vector.load %arg16[%493, %c0_129, %c0_130] : memref<8x2x48xf32, #tpu.memory_space<vmem>>, vector<1x2x48xf32>
    %495 = vector.shape_cast %494 : vector<1x2x48xf32> to vector<2x48xf32>
    %496 = vector.extract_strided_slice %462 {offsets = [0, 48], sizes = [2, 48], strides = [1, 1]} : vector<2x96xf32> to vector<2x48xf32>
    %497 = vector.extract_strided_slice %459 {offsets = [0, 16], sizes = [2, 16], strides = [1, 1]} : vector<2x32xf32> to vector<2x16xf32>
    %498 = vector.extract_strided_slice %495 {offsets = [0, 0], sizes = [2, 16], strides = [1, 1]} : vector<2x48xf32> to vector<2x16xf32>
    %499 = vector.extract_strided_slice %496 {offsets = [0, 0], sizes = [2, 16], strides = [1, 1]} : vector<2x48xf32> to vector<2x16xf32>
    %500 = arith.addf %498, %499 : vector<2x16xf32>
    %501 = arith.negf %500 : vector<2x16xf32>
    %502 = math.exp %501 : vector<2x16xf32>
    %cst_131 = arith.constant 1.000000e+00 : f32
    %503 = vector.broadcast %cst_131 : f32 to vector<2x16xf32>
    %504 = arith.addf %503, %502 : vector<2x16xf32>
    %505 = arith.divf %503, %504 : vector<2x16xf32>
    %506 = vector.extract_strided_slice %495 {offsets = [0, 16], sizes = [2, 16], strides = [1, 1]} : vector<2x48xf32> to vector<2x16xf32>
    %507 = vector.extract_strided_slice %496 {offsets = [0, 16], sizes = [2, 16], strides = [1, 1]} : vector<2x48xf32> to vector<2x16xf32>
    %508 = arith.addf %506, %507 : vector<2x16xf32>
    %509 = arith.negf %508 : vector<2x16xf32>
    %510 = math.exp %509 : vector<2x16xf32>
    %cst_132 = arith.constant 1.000000e+00 : f32
    %511 = vector.broadcast %cst_132 : f32 to vector<2x16xf32>
    %512 = arith.addf %511, %510 : vector<2x16xf32>
    %513 = arith.divf %511, %512 : vector<2x16xf32>
    %514 = vector.extract_strided_slice %495 {offsets = [0, 32], sizes = [2, 16], strides = [1, 1]} : vector<2x48xf32> to vector<2x16xf32>
    %515 = vector.extract_strided_slice %496 {offsets = [0, 32], sizes = [2, 16], strides = [1, 1]} : vector<2x48xf32> to vector<2x16xf32>
    %516 = arith.mulf %505, %515 : vector<2x16xf32>
    %517 = arith.addf %514, %516 : vector<2x16xf32>
    %518 = math.tanh %517 : vector<2x16xf32>
    %519 = arith.subf %497, %518 : vector<2x16xf32>
    %520 = arith.mulf %513, %519 : vector<2x16xf32>
    %521 = arith.addf %518, %520 : vector<2x16xf32>
    %522 = arith.index_cast %c6_i32 : i32 to index
    %c0_133 = arith.constant 0 : index
    %c0_134 = arith.constant 0 : index
    %523 = vector.load %arg12[%522, %c0_133, %c0_134] : memref<8x2x16xf32, #tpu.memory_space<vmem>>, vector<1x2x16xf32>
    %524 = vector.shape_cast %523 : vector<1x2x16xf32> to vector<2x16xf32>
    %525 = vector.shape_cast %491 : vector<2x16xf32> to vector<1x2x16xf32>
    tpu.vector_store %arg12[%522, %c0_133, %c0_134], %525 {strides = array<i32>} : memref<8x2x16xf32, #tpu.memory_space<vmem>>, vector<1x2x16xf32>,
    %c7_i32_135 = arith.constant 7 : i32
    %526 = arith.subi %c7_i32_135, %c6_i32 : i32
    %527 = arith.index_cast %526 : i32 to index
    %c0_136 = arith.constant 0 : index
    %c0_137 = arith.constant 0 : index
    %528 = vector.load %arg13[%527, %c0_136, %c0_137] : memref<8x2x16xf32, #tpu.memory_space<vmem>>, vector<1x2x16xf32>
    %529 = vector.shape_cast %528 : vector<1x2x16xf32> to vector<2x16xf32>
    %530 = vector.shape_cast %521 : vector<2x16xf32> to vector<1x2x16xf32>
    tpu.vector_store %arg13[%527, %c0_136, %c0_137], %530 {strides = array<i32>} : memref<8x2x16xf32, #tpu.memory_space<vmem>>, vector<1x2x16xf32>,
    %531 = tpu.concatenate %491, %521 in 1 : vector<2x16xf32>, vector<2x16xf32> -> vector<2x32xf32>
    %c7_i32_138 = arith.constant 7 : i32
    %cst_139 = arith.constant dense<0.000000e+00> : vector<2x96xf32>
    %532 = tpu.matmul %531, %25, %cst_139 {dimension_numbers = #tpu.dot_dimension_numbers<[1], [0], [0], [1], [0, 0, 1, 1], [], []>} : vector<2x32xf32>, vector<32x96xf32>, vector<2x96xf32> -> vector<2x96xf32>
    %533 = vector.broadcast %26 : vector<1x96xf32> to vector<2x96xf32>
    %534 = arith.addf %532, %533 : vector<2x96xf32>
    %535 = arith.index_cast %c7_i32_138 : i32 to index
    %c0_140 = arith.constant 0 : index
    %c0_141 = arith.constant 0 : index
    %536 = vector.load %arg15[%535, %c0_140, %c0_141] : memref<8x2x48xf32, #tpu.memory_space<vmem>>, vector<1x2x48xf32>
    %537 = vector.shape_cast %536 : vector<1x2x48xf32> to vector<2x48xf32>
    %538 = vector.extract_strided_slice %534 {offsets = [0, 0], sizes = [2, 48], strides = [1, 1]} : vector<2x96xf32> to vector<2x48xf32>
    %539 = vector.extract_strided_slice %531 {offsets = [0, 0], sizes = [2, 16], strides = [1, 1]} : vector<2x32xf32> to vector<2x16xf32>
    %540 = vector.extract_strided_slice %537 {offsets = [0, 0], sizes = [2, 16], strides = [1, 1]} : vector<2x48xf32> to vector<2x16xf32>
    %541 = vector.extract_strided_slice %538 {offsets = [0, 0], sizes = [2, 16], strides = [1, 1]} : vector<2x48xf32> to vector<2x16xf32>
    %542 = arith.addf %540, %541 : vector<2x16xf32>
    %543 = arith.negf %542 : vector<2x16xf32>
    %544 = math.exp %543 : vector<2x16xf32>
    %cst_142 = arith.constant 1.000000e+00 : f32
    %545 = vector.broadcast %cst_142 : f32 to vector<2x16xf32>
    %546 = arith.addf %545, %544 : vector<2x16xf32>
    %547 = arith.divf %545, %546 : vector<2x16xf32>
    %548 = vector.extract_strided_slice %537 {offsets = [0, 16], sizes = [2, 16], strides = [1, 1]} : vector<2x48xf32> to vector<2x16xf32>
    %549 = vector.extract_strided_slice %538 {offsets = [0, 16], sizes = [2, 16], strides = [1, 1]} : vector<2x48xf32> to vector<2x16xf32>
    %550 = arith.addf %548, %549 : vector<2x16xf32>
    %551 = arith.negf %550 : vector<2x16xf32>
    %552 = math.exp %551 : vector<2x16xf32>
    %cst_143 = arith.constant 1.000000e+00 : f32
    %553 = vector.broadcast %cst_143 : f32 to vector<2x16xf32>
    %554 = arith.addf %553, %552 : vector<2x16xf32>
    %555 = arith.divf %553, %554 : vector<2x16xf32>
    %556 = vector.extract_strided_slice %537 {offsets = [0, 32], sizes = [2, 16], strides = [1, 1]} : vector<2x48xf32> to vector<2x16xf32>
    %557 = vector.extract_strided_slice %538 {offsets = [0, 32], sizes = [2, 16], strides = [1, 1]} : vector<2x48xf32> to vector<2x16xf32>
    %558 = arith.mulf %547, %557 : vector<2x16xf32>
    %559 = arith.addf %556, %558 : vector<2x16xf32>
    %560 = math.tanh %559 : vector<2x16xf32>
    %561 = arith.subf %539, %560 : vector<2x16xf32>
    %562 = arith.mulf %555, %561 : vector<2x16xf32>
    %563 = arith.addf %560, %562 : vector<2x16xf32>
    %c7_i32_144 = arith.constant 7 : i32
    %564 = arith.subi %c7_i32_144, %c7_i32_138 : i32
    %565 = arith.index_cast %564 : i32 to index
    %c0_145 = arith.constant 0 : index
    %c0_146 = arith.constant 0 : index
    %566 = vector.load %arg16[%565, %c0_145, %c0_146] : memref<8x2x48xf32, #tpu.memory_space<vmem>>, vector<1x2x48xf32>
    %567 = vector.shape_cast %566 : vector<1x2x48xf32> to vector<2x48xf32>
    %568 = vector.extract_strided_slice %534 {offsets = [0, 48], sizes = [2, 48], strides = [1, 1]} : vector<2x96xf32> to vector<2x48xf32>
    %569 = vector.extract_strided_slice %531 {offsets = [0, 16], sizes = [2, 16], strides = [1, 1]} : vector<2x32xf32> to vector<2x16xf32>
    %570 = vector.extract_strided_slice %567 {offsets = [0, 0], sizes = [2, 16], strides = [1, 1]} : vector<2x48xf32> to vector<2x16xf32>
    %571 = vector.extract_strided_slice %568 {offsets = [0, 0], sizes = [2, 16], strides = [1, 1]} : vector<2x48xf32> to vector<2x16xf32>
    %572 = arith.addf %570, %571 : vector<2x16xf32>
    %573 = arith.negf %572 : vector<2x16xf32>
    %574 = math.exp %573 : vector<2x16xf32>
    %cst_147 = arith.constant 1.000000e+00 : f32
    %575 = vector.broadcast %cst_147 : f32 to vector<2x16xf32>
    %576 = arith.addf %575, %574 : vector<2x16xf32>
    %577 = arith.divf %575, %576 : vector<2x16xf32>
    %578 = vector.extract_strided_slice %567 {offsets = [0, 16], sizes = [2, 16], strides = [1, 1]} : vector<2x48xf32> to vector<2x16xf32>
    %579 = vector.extract_strided_slice %568 {offsets = [0, 16], sizes = [2, 16], strides = [1, 1]} : vector<2x48xf32> to vector<2x16xf32>
    %580 = arith.addf %578, %579 : vector<2x16xf32>
    %581 = arith.negf %580 : vector<2x16xf32>
    %582 = math.exp %581 : vector<2x16xf32>
    %cst_148 = arith.constant 1.000000e+00 : f32
    %583 = vector.broadcast %cst_148 : f32 to vector<2x16xf32>
    %584 = arith.addf %583, %582 : vector<2x16xf32>
    %585 = arith.divf %583, %584 : vector<2x16xf32>
    %586 = vector.extract_strided_slice %567 {offsets = [0, 32], sizes = [2, 16], strides = [1, 1]} : vector<2x48xf32> to vector<2x16xf32>
    %587 = vector.extract_strided_slice %568 {offsets = [0, 32], sizes = [2, 16], strides = [1, 1]} : vector<2x48xf32> to vector<2x16xf32>
    %588 = arith.mulf %577, %587 : vector<2x16xf32>
    %589 = arith.addf %586, %588 : vector<2x16xf32>
    %590 = math.tanh %589 : vector<2x16xf32>
    %591 = arith.subf %569, %590 : vector<2x16xf32>
    %592 = arith.mulf %585, %591 : vector<2x16xf32>
    %593 = arith.addf %590, %592 : vector<2x16xf32>
    %594 = arith.index_cast %c7_i32_138 : i32 to index
    %c0_149 = arith.constant 0 : index
    %c0_150 = arith.constant 0 : index
    %595 = vector.load %arg12[%594, %c0_149, %c0_150] : memref<8x2x16xf32, #tpu.memory_space<vmem>>, vector<1x2x16xf32>
    %596 = vector.shape_cast %595 : vector<1x2x16xf32> to vector<2x16xf32>
    %597 = vector.shape_cast %563 : vector<2x16xf32> to vector<1x2x16xf32>
    tpu.vector_store %arg12[%594, %c0_149, %c0_150], %597 {strides = array<i32>} : memref<8x2x16xf32, #tpu.memory_space<vmem>>, vector<1x2x16xf32>,
    %c7_i32_151 = arith.constant 7 : i32
    %598 = arith.subi %c7_i32_151, %c7_i32_138 : i32
    %599 = arith.index_cast %598 : i32 to index
    %c0_152 = arith.constant 0 : index
    %c0_153 = arith.constant 0 : index
    %600 = vector.load %arg13[%599, %c0_152, %c0_153] : memref<8x2x16xf32, #tpu.memory_space<vmem>>, vector<1x2x16xf32>
    %601 = vector.shape_cast %600 : vector<1x2x16xf32> to vector<2x16xf32>
    %602 = vector.shape_cast %593 : vector<2x16xf32> to vector<1x2x16xf32>
    tpu.vector_store %arg13[%599, %c0_152, %c0_153], %602 {strides = array<i32>} : memref<8x2x16xf32, #tpu.memory_space<vmem>>, vector<1x2x16xf32>,
    %603 = tpu.concatenate %563, %593 in 1 : vector<2x16xf32>, vector<2x16xf32> -> vector<2x32xf32>
    %c8_i32 = arith.constant 8 : i32
    %c0_154 = arith.constant 0 : index
    %c0_155 = arith.constant 0 : index
    %604 = vector.load %arg14[%c0_154, %c0_155] : memref<2x32xf32, #tpu.memory_space<vmem>>, vector<2x32xf32>
    tpu.vector_store %arg14[%c0_154, %c0_155], %603 {strides = array<i32>} : memref<2x32xf32, #tpu.memory_space<vmem>>, vector<2x32xf32>,
    return
  }
  func.func @transform_0(%arg0: i32, %arg1: i32) -> (i32, i32, i32) {
    %c0_i32 = arith.constant 0 : i32
    %c0_i32_0 = arith.constant 0 : i32
    return %arg1, %arg0, %c0_i32 : i32, i32, i32
  }
  func.func @transform_1(%arg0: i32, %arg1: i32) -> (i32, i32, i32) {
    %c0_i32 = arith.constant 0 : i32
    %c0_i32_0 = arith.constant 0 : i32
    return %arg1, %arg0, %c0_i32 : i32, i32, i32
  }
  func.func @transform_2(%arg0: i32, %arg1: i32) -> (i32, i32, i32) {
    %c0_i32 = arith.constant 0 : i32
    %0 = arith.subi %c0_i32, %arg1 : i32
    %c0_i32_0 = arith.constant 0 : i32
    %c0_i32_1 = arith.constant 0 : i32
    return %0, %arg0, %c0_i32_0 : i32, i32, i32
  }
  func.func @transform_3(%arg0: i32, %arg1: i32) -> (i32, i32, i32) {
    %c0_i32 = arith.constant 0 : i32
    %0 = arith.subi %c0_i32, %arg1 : i32
    %c0_i32_0 = arith.constant 0 : i32
    %c0_i32_1 = arith.constant 0 : i32
    return %0, %arg0, %c0_i32_0 : i32, i32, i32
  }
  func.func @transform_4(%arg0: i32, %arg1: i32) -> (i32, i32) {
    %c0_i32 = arith.constant 0 : i32
    %c0_i32_0 = arith.constant 0 : i32
    %c0_i32_1 = arith.constant 0 : i32
    return %c0_i32, %c0_i32_0 : i32, i32
  }
  func.func @transform_5(%arg0: i32, %arg1: i32) -> (i32, i32) {
    %c0_i32 = arith.constant 0 : i32
    %c0_i32_0 = arith.constant 0 : i32
    %c0_i32_1 = arith.constant 0 : i32
    return %c0_i32, %c0_i32_0 : i32, i32
  }
  func.func @transform_6(%arg0: i32, %arg1: i32) -> (i32, i32) {
    %c0_i32 = arith.constant 0 : i32
    %c0_i32_0 = arith.constant 0 : i32
    %c0_i32_1 = arith.constant 0 : i32
    return %c0_i32, %c0_i32_0 : i32, i32
  }
  func.func @transform_7(%arg0: i32, %arg1: i32) -> (i32, i32) {
    %c0_i32 = arith.constant 0 : i32
    %c0_i32_0 = arith.constant 0 : i32
    %c0_i32_1 = arith.constant 0 : i32
    return %c0_i32, %c0_i32_0 : i32, i32
  }
  func.func @transform_8(%arg0: i32, %arg1: i32) -> (i32, i32) {
    %c0_i32 = arith.constant 0 : i32
    %c0_i32_0 = arith.constant 0 : i32
    %c0_i32_1 = arith.constant 0 : i32
    return %c0_i32, %c0_i32_0 : i32, i32
  }
  func.func @transform_9(%arg0: i32, %arg1: i32) -> (i32, i32) {
    %c0_i32 = arith.constant 0 : i32
    %c0_i32_0 = arith.constant 0 : i32
    %c0_i32_1 = arith.constant 0 : i32
    return %c0_i32, %c0_i32_0 : i32, i32
  }
  func.func @transform_10(%arg0: i32, %arg1: i32) -> (i32, i32, i32) {
    %c0_i32 = arith.constant 0 : i32
    %c0_i32_0 = arith.constant 0 : i32
    return %arg1, %arg0, %c0_i32 : i32, i32, i32
  }
  func.func @transform_11(%arg0: i32, %arg1: i32) -> (i32, i32, i32) {
    %c0_i32 = arith.constant 0 : i32
    %0 = arith.subi %c0_i32, %arg1 : i32
    %c0_i32_0 = arith.constant 0 : i32
    %c0_i32_1 = arith.constant 0 : i32
    return %0, %arg0, %c0_i32_0 : i32, i32, i32
  }
}

</mosaic_0001>

<llo_original>
// kernel: generic_rnn_forward.3
$region0: #{generic_rnn_forward.3}
  #allocation0 [shape = 'u32[]', space=smem, size = 0x4, offset = 0x4, fixed_abs, tag = 'smem constant byte address 0x4 - core index']
  #allocation1 [shape = 'u32[144,128]{1,0:T(1,128)}', space=vmem, size = 0x12000, scoped, tag = 'internal scratch']
  #allocation2 [shape = 'f32[2,32]{1,0:T(2,128)}', space=vmem, size = 0x400, scoped, tag = 'scratch operand']
  #allocation3 [shape = 'f32[8,2,48]{2,1,0:T(2,128)}', space=vmem, size = 0x2000, scoped, tag = 'scratch operand']
  #allocation4 [shape = 'f32[8,2,48]{2,1,0:T(2,128)}', space=vmem, size = 0x2000, scoped, tag = 'scratch operand']
  %s0 = inlined_call_operand.vmem [shape: f32[8,2,16], index: 0, kind: input, shape index: {}, may-alias: {0,2}]
  %s1 = inlined_call_operand.vmem [shape: f32[8,2,16], index: 1, kind: input, shape index: {}, may-alias: {1,3}]
  %s2 = inlined_call_operand.vmem [shape: f32[8,2,16], index: 2, kind: input, shape index: {}, may-alias: {0,2}]
  %s3 = inlined_call_operand.vmem [shape: f32[8,2,16], index: 3, kind: input, shape index: {}, may-alias: {1,3}]
  %s4 = inlined_call_operand.vmem [shape: f32[32,48], index: 4, kind: input, shape index: {}]
  %s5 = inlined_call_operand.vmem [shape: f32[32,48], index: 5, kind: input, shape index: {}]
  %s6 = inlined_call_operand.vmem [shape: f32[1,48], index: 6, kind: input, shape index: {}]
  %s7 = inlined_call_operand.vmem [shape: f32[1,48], index: 7, kind: input, shape index: {}]
  %s8 = inlined_call_operand.vmem [shape: f32[32,96], index: 8, kind: input, shape index: {}]
  %s9 = inlined_call_operand.vmem [shape: f32[1,96], index: 9, kind: input, shape index: {}]
  %s10 = inlined_call_operand.vmem [shape: f32[8,2,16], index: 10, kind: output, shape index: {0}]
  %s11 = inlined_call_operand.vmem [shape: f32[8,2,16], index: 11, kind: output, shape index: {1}]
  %12 = xla_tuple %s10, %s11
  %s13 = sld [smem:[#allocation0]]
  $region62: #{generic_rnn_forward.3} parent=0
    _
  %s15 = ssub.s32 1, %s13
  %s16 = scalar_select 0, %s15, %s13
  // Predicated region
  $region2: #{generic_rnn_forward.3} parent=0 // pred_check
    _
  $region3: #{generic_rnn_forward.3} parent=0 // pred_check_branch
    %18 = sbr.rel (0) target = $region5
  $region4: #{generic_rnn_forward.3} parent=0 // pred_region
    _
  $region5: #{generic_rnn_forward.3} parent=0 // pred_fallthru
    _
  // Predicated region
  $region6: #{generic_rnn_forward.3} parent=0 // pred_check
    _
  $region7: #{generic_rnn_forward.3} parent=0 // pred_check_branch
    %20 = sbr.rel (0) target = $region9
  $region8: #{generic_rnn_forward.3} parent=0 // pred_region
    _
  $region9: #{generic_rnn_forward.3} parent=0 // pred_fallthru
    _
  // Predicated region
  $region10: #{generic_rnn_forward.3} parent=0 // pred_check
    _
  $region11: #{generic_rnn_forward.3} parent=0 // pred_check_branch
    %22 = sbr.rel (0) target = $region13
  $region12: #{generic_rnn_forward.3} parent=0 // pred_region
    %s23 = ssub.s32 0, 0
    %s24 = smul.u32 8, %s23
    %p25 = scmp.lt.s32.totalorder %s24, 7
    %s26 = scalar_select %p25, %s24, 7
    %s27 = smul.addr %s26, 2
    %s28 = scalar_lea.vmem %s2, %s27
    %s29 = ssub.s32 0, 0
    %s30 = smul.u32 8, %s29
  $region13: #{generic_rnn_forward.3} parent=0 // pred_fallthru
    _
  // Predicated region
  $region14: #{generic_rnn_forward.3} parent=0 // pred_check
    _
  $region15: #{generic_rnn_forward.3} parent=0 // pred_check_branch
    %32 = sbr.rel (0) target = $region17
  $region16: #{generic_rnn_forward.3} parent=0 // pred_region
    %s33 = ssub.s32 0, 0
    %s34 = smul.u32 8, %s33
    %p35 = scmp.lt.s32.totalorder %s34, 7
    %s36 = scalar_select %p35, %s34, 7
    %s37 = smul.addr %s36, 2
    %s38 = scalar_lea.vmem %s3, %s37
    %s39 = ssub.s32 0, 0
    %s40 = smul.u32 8, %s39
  $region17: #{generic_rnn_forward.3} parent=0 // pred_fallthru
    _
  // Predicated region
  $region18: #{generic_rnn_forward.3} parent=0 // pred_check
    _
  $region19: #{generic_rnn_forward.3} parent=0 // pred_check_branch
    %42 = sbr.rel (0) target = $region21
  $region20: #{generic_rnn_forward.3} parent=0 // pred_region
    _
  $region21: #{generic_rnn_forward.3} parent=0 // pred_fallthru
    _
  // Predicated region
  $region22: #{generic_rnn_forward.3} parent=0 // pred_check
    _
  $region23: #{generic_rnn_forward.3} parent=0 // pred_check_branch
    %44 = sbr.rel (0) target = $region25
  $region24: #{generic_rnn_forward.3} parent=0 // pred_region
    _
  $region25: #{generic_rnn_forward.3} parent=0 // pred_fallthru
    _
  // Predicated region
  $region26: #{generic_rnn_forward.3} parent=0 // pred_check
    _
  $region27: #{generic_rnn_forward.3} parent=0 // pred_check_branch
    %46 = sbr.rel (0) target = $region29
  $region28: #{generic_rnn_forward.3} parent=0 // pred_region
    _
  $region29: #{generic_rnn_forward.3} parent=0 // pred_fallthru
    _
  // Predicated region
  $region30: #{generic_rnn_forward.3} parent=0 // pred_check
    _
  $region31: #{generic_rnn_forward.3} parent=0 // pred_check_branch
    %48 = sbr.rel (0) target = $region33
  $region32: #{generic_rnn_forward.3} parent=0 // pred_region
    _
  $region33: #{generic_rnn_forward.3} parent=0 // pred_fallthru
    _
  // Predicated region
  $region34: #{generic_rnn_forward.3} parent=0 // pred_check
    _
  $region35: #{generic_rnn_forward.3} parent=0 // pred_check_branch
    %50 = sbr.rel (0) target = $region37
  $region36: #{generic_rnn_forward.3} parent=0 // pred_region
    _
  $region37: #{generic_rnn_forward.3} parent=0 // pred_fallthru
    _
  // Predicated region
  $region38: #{generic_rnn_forward.3} parent=0 // pred_check
    _
  $region39: #{generic_rnn_forward.3} parent=0 // pred_check_branch
    %52 = sbr.rel (0) target = $region41
  $region40: #{generic_rnn_forward.3} parent=0 // pred_region
    _
  $region41: #{generic_rnn_forward.3} parent=0 // pred_fallthru
    _
  %s53 = ssub.s32 0, 0
  %s54 = smul.u32 8, %s53
  %p55 = scmp.lt.s32.totalorder %s54, 7
  %s56 = scalar_select %p55, %s54, 7
  %s57 = smul.addr %s56, 2
  %s58 = scalar_lea.vmem %s2, %s57
  %s59 = ssub.s32 0, 0
  %s60 = smul.u32 8, %s59
  %p61 = scmp.lt.s32.totalorder %s60, 7
  %s62 = scalar_select %p61, %s60, 7
  %s63 = smul.addr %s62, 2
  %s64 = scalar_lea.vmem %s3, %s63
  %s65 = ssub.s32 0, 0
  %s66 = smul.u32 8, %s65
  %p67 = scmp.lt.s32.totalorder %s66, 7
  %s68 = scalar_select %p67, %s66, 7
  %s69 = smul.addr %s68, 2
  %s70 = scalar_lea.vmem %s11, %s69
  %s71 = ssub.s32 0, 0
  %s72 = smul.u32 8, %s71
  %p73 = scmp.lt.s32.totalorder %s72, 7
  %s74 = scalar_select %p73, %s72, 7
  %s75 = smul.addr %s74, 2
  %s76 = scalar_lea.vmem %s2, %s75
  %s77 = ssub.s32 0, 0
  %s78 = smul.u32 8, %s77
  %s79 = ssub.s32 0, 0
  %s80 = smul.u32 8, %s79
  %p81 = scmp.lt.s32.totalorder %s80, 7
  %s82 = scalar_select %p81, %s80, 7
  %s83 = smul.addr %s82, 2
  %s84 = scalar_lea.vmem %s3, %s83
  %s85 = ssub.s32 0, 0
  %s86 = smul.u32 8, %s85
  %s87 = ssub.s32 0, 0
  %s88 = smul.u32 8, %s87
  %p89 = scmp.lt.s32.totalorder %s88, 7
  %s90 = scalar_select %p89, %s88, 7
  %s91 = smul.addr %s90, 2
  %s92 = scalar_lea.vmem %s11, %s91
  %s93 = ssub.s32 0, 0
  %s94 = smul.u32 8, %s93
  %p95 = scmp.eq.s32.totalorder 0, 0
  // Predicated region
  $region42: #{generic_rnn_forward.3} parent=0 // pred_check
    %p96 = pneg %p95
  $region43: #{generic_rnn_forward.3} parent=0 // pred_check_branch
    %98 = sbr.rel (%p96) target = $region45
  $region44: #{generic_rnn_forward.3} parent=0 // pred_region
    %vm99 = vcmask 254976
    %100 = vst.msk [vmem:[#allocation2] sm:$0x3] %vm99, 0.0
  $region45: #{generic_rnn_forward.3} parent=0 // pred_fallthru
    _
  %v101 = vld [vmem:[%s0] sm:$0x3]
  %v102 = vld [vmem:[%s0 + $0x2] sm:$0x3]
  %v103 = vld [vmem:[%s0 + $0x4] sm:$0x3]
  %v104 = vld [vmem:[%s0 + $0x6] sm:$0x3]
  %v105 = vld [vmem:[%s0 + $0x8] sm:$0x3]
  %v106 = vld [vmem:[%s0 + $0xa] sm:$0x3]
  %v107 = vld [vmem:[%s0 + $0xc] sm:$0x3]
  %v108 = vld [vmem:[%s0 + $0xe] sm:$0x3]
  %v109 = vld [vmem:[%s1] sm:$0x3]
  %v110 = vld [vmem:[%s1 + $0x2] sm:$0x3]
  %v111 = vld [vmem:[%s1 + $0x4] sm:$0x3]
  %v112 = vld [vmem:[%s1 + $0x6] sm:$0x3]
  %v113 = vld [vmem:[%s1 + $0x8] sm:$0x3]
  %v114 = vld [vmem:[%s1 + $0xa] sm:$0x3]
  %v115 = vld [vmem:[%s1 + $0xc] sm:$0x3]
  %v116 = vld [vmem:[%s1 + $0xe] sm:$0x3]
  %125 = vrot.lane.b32.xlu0 %v109, 16
  %v126 = vpop.permute.xlu0 %125
  %127 = vrot.lane.b32.xlu0 %v110, 16
  %v128 = vpop.permute.xlu0 %127
  %129 = vrot.lane.b32.xlu0 %v111, 16
  %v130 = vpop.permute.xlu0 %129
  %131 = vrot.lane.b32.xlu0 %v112, 16
  %v132 = vpop.permute.xlu0 %131
  %133 = vrot.lane.b32.xlu0 %v113, 16
  %v134 = vpop.permute.xlu0 %133
  %135 = vrot.lane.b32.xlu0 %v114, 16
  %v136 = vpop.permute.xlu0 %135
  %137 = vrot.lane.b32.xlu0 %v115, 16
  %v138 = vpop.permute.xlu0 %137
  %139 = vrot.lane.b32.xlu0 %v116, 16
  %v140 = vpop.permute.xlu0 %139
  %vm149 = vcmask 130048
  %v150 = vsel %vm149, %v101, %v126
  %v151 = vsel %vm149, %v102, %v128
  %v152 = vsel %vm149, %v103, %v130
  %v153 = vsel %vm149, %v104, %v132
  %v154 = vsel %vm149, %v105, %v134
  %v155 = vsel %vm149, %v106, %v136
  %v156 = vsel %vm149, %v107, %v138
  %v157 = vsel %vm149, %v108, %v140
  %v158 = vld [vmem:[%s4] sm:$0xff]
  %v159 = vld [vmem:[%s4 + $0x8] sm:$0xff]
  %v160 = vld [vmem:[%s4 + $0x10] sm:$0xff]
  %v161 = vld [vmem:[%s4 + $0x18] sm:$0xff]
  %v162 = vld [vmem:[%s6] sm:$0x1]
  %v164 = vlaneseq
  %v165 = vshrl.u32 %v164, 7
  %v166 = vsub.s32 0, %v165
  %v167 = vrot.slane %v162, %v166
  %v177 = vcombine.low %v150, %v151
  %v178 = vcombine.low %v152, %v153
  %v180 = vunpack.c.l.s4 1983009808
  %v181 = vunpack.c.0.s8 %v180
  %v182 = vlaneseq
  %v183 = vshrl.u32 %v182, 7
  %v184 = vsub.s32 %v181, %v183
  %v185 = vrot.slane %v177, %v184
  %v187 = vunpack.c.l.s4 1983009808
  %v188 = vunpack.c.0.s8 %v187
  %v189 = vlaneseq
  %v190 = vshrl.u32 %v189, 7
  %v191 = vsub.s32 %v188, %v190
  %v192 = vrot.slane %v178, %v191
  %v193 = vcombine.low %v185, %v192
  %v194 = vcombine.low %v154, %v155
  %v195 = vcombine.low %v156, %v157
  %v197 = vunpack.c.l.s4 1983009808
  %v198 = vunpack.c.0.s8 %v197
  %v199 = vlaneseq
  %v200 = vshrl.u32 %v199, 7
  %v201 = vsub.s32 %v198, %v200
  %v202 = vrot.slane %v194, %v201
  %v204 = vunpack.c.l.s4 1983009808
  %v205 = vunpack.c.0.s8 %v204
  %v206 = vlaneseq
  %v207 = vshrl.u32 %v206, 7
  %v208 = vsub.s32 %v205, %v207
  %v209 = vrot.slane %v195, %v208
  %v210 = vcombine.low %v202, %v209
  %vm211 = vcmask 261120
  %v212 = vsel %vm211, %v193, 0
  %v214 = vsel %vm211, %v210, 0
  %216 = vmatprep.subr.mxu0 0.0
  %217 = vmatpush1.msra.mxu0 %v158
  %218 = vmatprep.subr.mxu0 0.0
  %219 = vmatpush1.msra.mxu0 %v159
  %220 = vmatprep.subr.mxu0 0.0
  %221 = vmatpush1.msra.mxu0 %v160
  %222 = vmatprep.subr.mxu0 0.0
  %223 = vmatpush1.msra.mxu0 %v161
  %224 = vmatprep.subr.mxu0 0.0
  %225 = vmatpush1.msra.mxu0 0.0
  %226 = vmatprep.subr.mxu0 0.0
  %227 = vmatpush1.msra.mxu0 0.0
  %228 = vmatprep.subr.mxu0 0.0
  %229 = vmatpush1.msra.mxu0 0.0
  %230 = vmatprep.subr.mxu0 0.0
  %231 = vmatpush1.msra.mxu0 0.0
  %232 = vmatprep.subr.mxu0 0.0
  %233 = vmatpush1.msra.mxu0 0.0
  %234 = vmatprep.subr.mxu0 0.0
  %235 = vmatpush1.msra.mxu0 0.0
  %236 = vmatprep.subr.mxu0 0.0
  %237 = vmatpush1.msra.mxu0 0.0
  %238 = vmatprep.subr.mxu0 0.0
  %239 = vmatpush1.msra.mxu0 0.0
  %240 = vmatprep.subr.mxu0 0.0
  %241 = vmatpush1.msra.mxu0 0.0
  %242 = vmatprep.subr.mxu0 0.0
  %243 = vmatpush1.msra.mxu0 0.0
  %244 = vmatprep.subr.mxu0 0.0
  %245 = vmatpush1.msra.mxu0 0.0
  %246 = vmatprep.subr.mxu0 0.0
  %247 = vmatpush1.msra.mxu0 0.0
  %248 = vmatprep.subr.mxu0 0.0
  %249 = vmatpush1.msra.mxu0 0.0
  %250 = vmatprep.subr.mxu0 0.0
  %251 = vmatpush1.msra.mxu0 0.0
  %252 = vmatprep.subr.mxu0 0.0
  %253 = vmatpush1.msra.mxu0 0.0
  %254 = vmatprep.subr.mxu0 0.0
  %255 = vmatpush1.msra.mxu0 0.0
  %256 = vmatprep.subr.mxu0 0.0
  %257 = vmatpush1.msra.mxu0 0.0
  %258 = vmatprep.subr.mxu0 0.0
  %259 = vmatpush1.msra.mxu0 0.0
  %260 = vmatprep.subr.mxu0 0.0
  %261 = vmatpush1.msra.mxu0 0.0
  %262 = vmatprep.subr.mxu0 0.0
  %263 = vmatpush1.msra.mxu0 0.0
  %264 = vmatprep.subr.mxu0 0.0
  %265 = vmatpush1.msra.mxu0 0.0
  %266 = vmatprep.subr.mxu0 0.0
  %267 = vmatpush1.msra.mxu0 0.0
  %268 = vmatprep.subr.mxu0 0.0
  %269 = vmatpush1.msra.mxu0 0.0
  %270 = vmatprep.subr.mxu0 0.0
  %271 = vmatpush1.msra.mxu0 0.0
  %272 = vmatprep.subr.mxu0 0.0
  %273 = vmatpush1.msra.mxu0 0.0
  %274 = vmatprep.subr.mxu0 0.0
  %275 = vmatpush1.msra.mxu0 0.0
  %276 = vmatprep.subr.mxu0 0.0
  %277 = vmatpush1.msra.mxu0 0.0
  %278 = vmatprep.subr.mxu0 0.0
  %279 = vmatpush1.msra.mxu0 0.0
  %280 = vmatprep.mubr.f32.mxu0 0.0
  %281 = vmatmul.mubr.f32.gmra.mrb[0].mxu0 %v212
  %v282 = vpop.f32.mrb[0].mxu0
  %v283 = vadd.f32 %v167, %v282
  %v284 = vpop.f32.mrb[0].mxu0
  %285 = vmatprep.mubr.f32.mxu0 0.0
  %286 = vmatmul.mubr.f32.gmra.mrb[0].mxu0 %v214
  %v287 = vpop.f32.mrb[0].mxu0
  %v288 = vadd.f32 %v167, %v287
  %v289 = vpop.f32.mrb[0].mxu0
  %290 = vdwg.mxu0
  %v293 = vcombine.high %v283, %v283
  %v295 = vunpack.c.l.s4 1983009808
  %v296 = vunpack.c.0.s8 %v295
  %v297 = vlaneseq
  %v298 = vshrl.u32 %v297, 7
  %v299 = vsub.s32 %v296, %v298
  %v300 = vrot.slane %v283, %v299
  %v302 = vunpack.c.l.s4 1983009808
  %v303 = vunpack.c.0.s8 %v302
  %v304 = vlaneseq
  %v305 = vshrl.u32 %v304, 7
  %v306 = vsub.s32 %v303, %v305
  %v307 = vrot.slane %v293, %v306
  %v308 = vcombine.high %v300, %v300
  %v309 = vcombine.high %v307, %v307
  %v310 = vcombine.high %v288, %v288
  %v312 = vunpack.c.l.s4 1983009808
  %v313 = vunpack.c.0.s8 %v312
  %v314 = vlaneseq
  %v315 = vshrl.u32 %v314, 7
  %v316 = vsub.s32 %v313, %v315
  %v317 = vrot.slane %v288, %v316
  %v319 = vunpack.c.l.s4 1983009808
  %v320 = vunpack.c.0.s8 %v319
  %v321 = vlaneseq
  %v322 = vshrl.u32 %v321, 7
  %v323 = vsub.s32 %v320, %v322
  %v324 = vrot.slane %v310, %v323
  %v325 = vcombine.high %v317, %v317
  %v326 = vcombine.high %v324, %v324
  %vm335 = vcmask 386048
  %336 = vst.msk [vmem:[#allocation3] sm:$0x3] %vm335, %v300
  %337 = vst.msk [vmem:[#allocation3 + $0x2] sm:$0x3] %vm335, %v308
  %338 = vst.msk [vmem:[#allocation3 + $0x4] sm:$0x3] %vm335, %v307
  %339 = vst.msk [vmem:[#allocation3 + $0x6] sm:$0x3] %vm335, %v309
  %340 = vst.msk [vmem:[#allocation3 + $0x8] sm:$0x3] %vm335, %v317
  %341 = vst.msk [vmem:[#allocation3 + $0xa] sm:$0x3] %vm335, %v325
  %342 = vst.msk [vmem:[#allocation3 + $0xc] sm:$0x3] %vm335, %v324
  %343 = vst.msk [vmem:[#allocation3 + $0xe] sm:$0x3] %vm335, %v326
  %v344 = vld [vmem:[%s76] sm:$0x3]
  %v345 = vld [vmem:[%s76 + $0x2] sm:$0x3]
  %v346 = vld [vmem:[%s76 + $0x4] sm:$0x3]
  %v347 = vld [vmem:[%s76 + $0x6] sm:$0x3]
  %v348 = vld [vmem:[%s76 + $0x8] sm:$0x3]
  %v349 = vld [vmem:[%s76 + $0xa] sm:$0x3]
  %v350 = vld [vmem:[%s76 + $0xc] sm:$0x3]
  %v351 = vld [vmem:[%s76 + $0xe] sm:$0x3]
  %v352 = vld [vmem:[%s84] sm:$0x3]
  %v353 = vld [vmem:[%s84 + $0x2] sm:$0x3]
  %v354 = vld [vmem:[%s84 + $0x4] sm:$0x3]
  %v355 = vld [vmem:[%s84 + $0x6] sm:$0x3]
  %v356 = vld [vmem:[%s84 + $0x8] sm:$0x3]
  %v357 = vld [vmem:[%s84 + $0xa] sm:$0x3]
  %v358 = vld [vmem:[%s84 + $0xc] sm:$0x3]
  %v359 = vld [vmem:[%s84 + $0xe] sm:$0x3]
  %368 = vrot.lane.b32.xlu0 %v352, 16
  %v369 = vpop.permute.xlu0 %368
  %370 = vrot.lane.b32.xlu0 %v353, 16
  %v371 = vpop.permute.xlu0 %370
  %372 = vrot.lane.b32.xlu0 %v354, 16
  %v373 = vpop.permute.xlu0 %372
  %374 = vrot.lane.b32.xlu0 %v355, 16
  %v375 = vpop.permute.xlu0 %374
  %376 = vrot.lane.b32.xlu0 %v356, 16
  %v377 = vpop.permute.xlu0 %376
  %378 = vrot.lane.b32.xlu0 %v357, 16
  %v379 = vpop.permute.xlu0 %378
  %380 = vrot.lane.b32.xlu0 %v358, 16
  %v381 = vpop.permute.xlu0 %380
  %382 = vrot.lane.b32.xlu0 %v359, 16
  %v383 = vpop.permute.xlu0 %382
  %v392 = vsel %vm149, %v344, %v369
  %v393 = vsel %vm149, %v345, %v371
  %v394 = vsel %vm149, %v346, %v373
  %v395 = vsel %vm149, %v347, %v375
  %v396 = vsel %vm149, %v348, %v377
  %v397 = vsel %vm149, %v349, %v379
  %v398 = vsel %vm149, %v350, %v381
  %v399 = vsel %vm149, %v351, %v383
  %v400 = vld [vmem:[%s5] sm:$0xff]
  %v401 = vld [vmem:[%s5 + $0x8] sm:$0xff]
  %v402 = vld [vmem:[%s5 + $0x10] sm:$0xff]
  %v403 = vld [vmem:[%s5 + $0x18] sm:$0xff]
  %v404 = vld [vmem:[%s7] sm:$0x1]
  %v406 = vlaneseq
  %v407 = vshrl.u32 %v406, 7
  %v408 = vsub.s32 0, %v407
  %v409 = vrot.slane %v404, %v408
  %v419 = vcombine.low %v392, %v393
  %v420 = vcombine.low %v394, %v395
  %v422 = vunpack.c.l.s4 1983009808
  %v423 = vunpack.c.0.s8 %v422
  %v424 = vlaneseq
  %v425 = vshrl.u32 %v424, 7
  %v426 = vsub.s32 %v423, %v425
  %v427 = vrot.slane %v419, %v426
  %v429 = vunpack.c.l.s4 1983009808
  %v430 = vunpack.c.0.s8 %v429
  %v431 = vlaneseq
  %v432 = vshrl.u32 %v431, 7
  %v433 = vsub.s32 %v430, %v432
  %v434 = vrot.slane %v420, %v433
  %v435 = vcombine.low %v427, %v434
  %v436 = vcombine.low %v396, %v397
  %v437 = vcombine.low %v398, %v399
  %v439 = vunpack.c.l.s4 1983009808
  %v440 = vunpack.c.0.s8 %v439
  %v441 = vlaneseq
  %v442 = vshrl.u32 %v441, 7
  %v443 = vsub.s32 %v440, %v442
  %v444 = vrot.slane %v436, %v443
  %v446 = vunpack.c.l.s4 1983009808
  %v447 = vunpack.c.0.s8 %v446
  %v448 = vlaneseq
  %v449 = vshrl.u32 %v448, 7
  %v450 = vsub.s32 %v447, %v449
  %v451 = vrot.slane %v437, %v450
  %v452 = vcombine.low %v444, %v451
  %v453 = vsel %vm211, %v435, 0
  %v455 = vsel %vm211, %v452, 0
  %457 = vmatprep.subr.mxu0 0.0
  %458 = vmatpush1.msra.mxu0 %v400
  %459 = vmatprep.subr.mxu0 0.0
  %460 = vmatpush1.msra.mxu0 %v401
  %461 = vmatprep.subr.mxu0 0.0
  %462 = vmatpush1.msra.mxu0 %v402
  %463 = vmatprep.subr.mxu0 0.0
  %464 = vmatpush1.msra.mxu0 %v403
  %465 = vmatprep.subr.mxu0 0.0
  %466 = vmatpush1.msra.mxu0 0.0
  %467 = vmatprep.subr.mxu0 0.0
  %468 = vmatpush1.msra.mxu0 0.0
  %469 = vmatprep.subr.mxu0 0.0
  %470 = vmatpush1.msra.mxu0 0.0
  %471 = vmatprep.subr.mxu0 0.0
  %472 = vmatpush1.msra.mxu0 0.0
  %473 = vmatprep.subr.mxu0 0.0
  %474 = vmatpush1.msra.mxu0 0.0
  %475 = vmatprep.subr.mxu0 0.0
  %476 = vmatpush1.msra.mxu0 0.0
  %477 = vmatprep.subr.mxu0 0.0
  %478 = vmatpush1.msra.mxu0 0.0
  %479 = vmatprep.subr.mxu0 0.0
  %480 = vmatpush1.msra.mxu0 0.0
  %481 = vmatprep.subr.mxu0 0.0
  %482 = vmatpush1.msra.mxu0 0.0
  %483 = vmatprep.subr.mxu0 0.0
  %484 = vmatpush1.msra.mxu0 0.0
  %485 = vmatprep.subr.mxu0 0.0
  %486 = vmatpush1.msra.mxu0 0.0
  %487 = vmatprep.subr.mxu0 0.0
  %488 = vmatpush1.msra.mxu0 0.0
  %489 = vmatprep.subr.mxu0 0.0
  %490 = vmatpush1.msra.mxu0 0.0
  %491 = vmatprep.subr.mxu0 0.0
  %492 = vmatpush1.msra.mxu0 0.0
  %493 = vmatprep.subr.mxu0 0.0
  %494 = vmatpush1.msra.mxu0 0.0
  %495 = vmatprep.subr.mxu0 0.0
  %496 = vmatpush1.msra.mxu0 0.0
  %497 = vmatprep.subr.mxu0 0.0
  %498 = vmatpush1.msra.mxu0 0.0
  %499 = vmatprep.subr.mxu0 0.0
  %500 = vmatpush1.msra.mxu0 0.0
  %501 = vmatprep.subr.mxu0 0.0
  %502 = vmatpush1.msra.mxu0 0.0
  %503 = vmatprep.subr.mxu0 0.0
  %504 = vmatpush1.msra.mxu0 0.0
  %505 = vmatprep.subr.mxu0 0.0
  %506 = vmatpush1.msra.mxu0 0.0
  %507 = vmatprep.subr.mxu0 0.0
  %508 = vmatpush1.msra.mxu0 0.0
  %509 = vmatprep.subr.mxu0 0.0
  %510 = vmatpush1.msra.mxu0 0.0
  %511 = vmatprep.subr.mxu0 0.0
  %512 = vmatpush1.msra.mxu0 0.0
  %513 = vmatprep.subr.mxu0 0.0
  %514 = vmatpush1.msra.mxu0 0.0
  %515 = vmatprep.subr.mxu0 0.0
  %516 = vmatpush1.msra.mxu0 0.0
  %517 = vmatprep.subr.mxu0 0.0
  %518 = vmatpush1.msra.mxu0 0.0
  %519 = vmatprep.subr.mxu0 0.0
  %520 = vmatpush1.msra.mxu0 0.0
  %521 = vmatprep.mubr.f32.mxu0 0.0
  %522 = vmatmul.mubr.f32.gmra.mrb[0].mxu0 %v453
  %v523 = vpop.f32.mrb[0].mxu0
  %v524 = vadd.f32 %v409, %v523
  %v525 = vpop.f32.mrb[0].mxu0
  %526 = vmatprep.mubr.f32.mxu0 0.0
  %527 = vmatmul.mubr.f32.gmra.mrb[0].mxu0 %v455
  %v528 = vpop.f32.mrb[0].mxu0
  %v529 = vadd.f32 %v409, %v528
  %v530 = vpop.f32.mrb[0].mxu0
  %531 = vdwg.mxu0
  %v534 = vcombine.high %v524, %v524
  %v536 = vunpack.c.l.s4 1983009808
  %v537 = vunpack.c.0.s8 %v536
  %v538 = vlaneseq
  %v539 = vshrl.u32 %v538, 7
  %v540 = vsub.s32 %v537, %v539
  %v541 = vrot.slane %v524, %v540
  %v543 = vunpack.c.l.s4 1983009808
  %v544 = vunpack.c.0.s8 %v543
  %v545 = vlaneseq
  %v546 = vshrl.u32 %v545, 7
  %v547 = vsub.s32 %v544, %v546
  %v548 = vrot.slane %v534, %v547
  %v549 = vcombine.high %v541, %v541
  %v550 = vcombine.high %v548, %v548
  %v551 = vcombine.high %v529, %v529
  %v553 = vunpack.c.l.s4 1983009808
  %v554 = vunpack.c.0.s8 %v553
  %v555 = vlaneseq
  %v556 = vshrl.u32 %v555, 7
  %v557 = vsub.s32 %v554, %v556
  %v558 = vrot.slane %v529, %v557
  %v560 = vunpack.c.l.s4 1983009808
  %v561 = vunpack.c.0.s8 %v560
  %v562 = vlaneseq
  %v563 = vshrl.u32 %v562, 7
  %v564 = vsub.s32 %v561, %v563
  %v565 = vrot.slane %v551, %v564
  %v566 = vcombine.high %v558, %v558
  %v567 = vcombine.high %v565, %v565
  %576 = vst.msk [vmem:[#allocation4] sm:$0x3] %vm335, %v541
  %577 = vst.msk [vmem:[#allocation4 + $0x2] sm:$0x3] %vm335, %v549
  %578 = vst.msk [vmem:[#allocation4 + $0x4] sm:$0x3] %vm335, %v548
  %579 = vst.msk [vmem:[#allocation4 + $0x6] sm:$0x3] %vm335, %v550
  %580 = vst.msk [vmem:[#allocation4 + $0x8] sm:$0x3] %vm335, %v558
  %581 = vst.msk [vmem:[#allocation4 + $0xa] sm:$0x3] %vm335, %v566
  %582 = vst.msk [vmem:[#allocation4 + $0xc] sm:$0x3] %vm335, %v565
  %583 = vst.msk [vmem:[#allocation4 + $0xe] sm:$0x3] %vm335, %v567
  %v584 = vld [vmem:[%s8] sm:$0xff]
  %v585 = vld [vmem:[%s8 + $0x8] sm:$0xff]
  %v586 = vld [vmem:[%s8 + $0x10] sm:$0xff]
  %v587 = vld [vmem:[%s8 + $0x18] sm:$0xff]
  %v588 = vld [vmem:[%s9] sm:$0x1]
  %v589 = vld [vmem:[#allocation2] sm:$0x3]
  %v591 = vlaneseq
  %v592 = vshrl.u32 %v591, 7
  %v593 = vsub.s32 0, %v592
  %v594 = vrot.slane %v588, %v593
  %v597 = vsel %vm211, %v589, 0
  %599 = vmatprep.subr.mxu0 0.0
  %600 = vmatpush1.msra.mxu0 %v584
  %601 = vmatprep.subr.mxu0 0.0
  %602 = vmatpush1.msra.mxu0 %v585
  %603 = vmatprep.subr.mxu0 0.0
  %604 = vmatpush1.msra.mxu0 %v586
  %605 = vmatprep.subr.mxu0 0.0
  %606 = vmatpush1.msra.mxu0 %v587
  %607 = vmatprep.subr.mxu0 0.0
  %608 = vmatpush1.msra.mxu0 0.0
  %609 = vmatprep.subr.mxu0 0.0
  %610 = vmatpush1.msra.mxu0 0.0
  %611 = vmatprep.subr.mxu0 0.0
  %612 = vmatpush1.msra.mxu0 0.0
  %613 = vmatprep.subr.mxu0 0.0
  %614 = vmatpush1.msra.mxu0 0.0
  %615 = vmatprep.subr.mxu0 0.0
  %616 = vmatpush1.msra.mxu0 0.0
  %617 = vmatprep.subr.mxu0 0.0
  %618 = vmatpush1.msra.mxu0 0.0
  %619 = vmatprep.subr.mxu0 0.0
  %620 = vmatpush1.msra.mxu0 0.0
  %621 = vmatprep.subr.mxu0 0.0
  %622 = vmatpush1.msra.mxu0 0.0
  %623 = vmatprep.subr.mxu0 0.0
  %624 = vmatpush1.msra.mxu0 0.0
  %625 = vmatprep.subr.mxu0 0.0
  %626 = vmatpush1.msra.mxu0 0.0
  %627 = vmatprep.subr.mxu0 0.0
  %628 = vmatpush1.msra.mxu0 0.0
  %629 = vmatprep.subr.mxu0 0.0
  %630 = vmatpush1.msra.mxu0 0.0
  %631 = vmatprep.subr.mxu0 0.0
  %632 = vmatpush1.msra.mxu0 0.0
  %633 = vmatprep.subr.mxu0 0.0
  %634 = vmatpush1.msra.mxu0 0.0
  %635 = vmatprep.subr.mxu0 0.0
  %636 = vmatpush1.msra.mxu0 0.0
  %637 = vmatprep.subr.mxu0 0.0
  %638 = vmatpush1.msra.mxu0 0.0
  %639 = vmatprep.subr.mxu0 0.0
  %640 = vmatpush1.msra.mxu0 0.0
  %641 = vmatprep.subr.mxu0 0.0
  %642 = vmatpush1.msra.mxu0 0.0
  %643 = vmatprep.subr.mxu0 0.0
  %644 = vmatpush1.msra.mxu0 0.0
  %645 = vmatprep.subr.mxu0 0.0
  %646 = vmatpush1.msra.mxu0 0.0
  %647 = vmatprep.subr.mxu0 0.0
  %648 = vmatpush1.msra.mxu0 0.0
  %649 = vmatprep.subr.mxu0 0.0
  %650 = vmatpush1.msra.mxu0 0.0
  %651 = vmatprep.subr.mxu0 0.0
  %652 = vmatpush1.msra.mxu0 0.0
  %653 = vmatprep.subr.mxu0 0.0
  %654 = vmatpush1.msra.mxu0 0.0
  %655 = vmatprep.subr.mxu0 0.0
  %656 = vmatpush1.msra.mxu0 0.0
  %657 = vmatprep.subr.mxu0 0.0
  %658 = vmatpush1.msra.mxu0 0.0
  %659 = vmatprep.subr.mxu0 0.0
  %660 = vmatpush1.msra.mxu0 0.0
  %661 = vmatprep.subr.mxu0 0.0
  %662 = vmatpush1.msra.mxu0 0.0
  %663 = vmatprep.mubr.f32.mxu0 0.0
  %664 = vmatmul.mubr.f32.gmra.mrb[0].mxu0 %v597
  %v665 = vpop.f32.mrb[0].mxu0
  %v666 = vadd.f32 %v594, %v665
  %v667 = vpop.f32.mrb[0].mxu0
  %668 = vdwg.mxu0
  %v669 = vld [vmem:[#allocation3] sm:$0x3]
  %v670 = vadd.f32 %v669, %v666
  %v671 = vxor.u32 %v670, 2147483648
  %v672 = vmul.f32 %v671, 1.442695
  %v673 = vpow.pop %v672
  %v674 = vadd.f32 %v673, 1.0
  %v675 = vrcp.pop %v674
  %v676 = vmul.f32 1.0, %v675
  %678 = vrot.lane.b32.xlu0 %v666, 96
  %v679 = vpop.permute.xlu0 %678
  %v681 = vmul.f32 %v676, %v679
  %683 = vrot.lane.b32.xlu0 %v681, 32
  %v684 = vpop.permute.xlu0 %683
  %v686 = vadd.f32 %v669, %v684
  %v687 = vtanh.pop %v686
  %689 = vrot.lane.b32.xlu0 %v687, 96
  %v690 = vpop.permute.xlu0 %689
  %v692 = vsub.f32 %v589, %v690
  %694 = vrot.lane.b32.xlu0 %v692, 16
  %v695 = vpop.permute.xlu0 %694
  %v697 = vmul.f32 %v676, %v695
  %699 = vrot.lane.b32.xlu0 %v697, 16
  %v700 = vpop.permute.xlu0 %699
  %v702 = vadd.f32 %v687, %v700
  %s703 = scalar_lea.vmem [#allocation4], 14
  %v704 = vld [vmem:[%s703] sm:$0x3]
  %705 = vrot.lane.b32.xlu0 %v666, 80
  %v706 = vpop.permute.xlu0 %705
  %v708 = vadd.f32 %v704, %v706
  %v709 = vxor.u32 %v708, 2147483648
  %v710 = vmul.f32 %v709, 1.442695
  %v711 = vpow.pop %v710
  %v712 = vadd.f32 %v711, 1.0
  %v713 = vrcp.pop %v712
  %v714 = vmul.f32 1.0, %v713
  %715 = vrot.lane.b32.xlu0 %v666, 48
  %v716 = vpop.permute.xlu0 %715
  %v718 = vmul.f32 %v714, %v716
  %720 = vrot.lane.b32.xlu0 %v718, 32
  %v721 = vpop.permute.xlu0 %720
  %v723 = vadd.f32 %v704, %v721
  %v724 = vtanh.pop %v723
  %726 = vrot.lane.b32.xlu0 %v724, 112
  %v727 = vpop.permute.xlu0 %726
  %v729 = vsub.f32 %v589, %v727
  %v730 = vmul.f32 %v714, %v729
  %732 = vrot.lane.b32.xlu0 %v730, 16
  %v733 = vpop.permute.xlu0 %732
  %v735 = vadd.f32 %v724, %v733
  %737 = vrot.lane.b32.xlu0 %v702, 96
  %v738 = vpop.permute.xlu0 %737
  %vm740 = vcmask 123904
  %741 = vst.msk [vmem:[%s10] sm:$0x3] %vm740, %v738
  %743 = vrot.lane.b32.xlu0 %v735, 96
  %v744 = vpop.permute.xlu0 %743
  %s746 = scalar_lea.vmem %s92, 14
  %747 = vst.msk [vmem:[%s746] sm:$0x3] %vm740, %v744
  %748 = vrot.lane.b32.xlu0 %v735, 112
  %v749 = vpop.permute.xlu0 %748
  %v751 = vsel %vm149, %v738, %v749
  %v753 = vsel %vm211, %v751, 0
  %755 = vmatprep.subr.mxu0 0.0
  %756 = vmatpush1.msra.mxu0 %v584
  %757 = vmatprep.subr.mxu0 0.0
  %758 = vmatpush1.msra.mxu0 %v585
  %759 = vmatprep.subr.mxu0 0.0
  %760 = vmatpush1.msra.mxu0 %v586
  %761 = vmatprep.subr.mxu0 0.0
  %762 = vmatpush1.msra.mxu0 %v587
  %763 = vmatprep.subr.mxu0 0.0
  %764 = vmatpush1.msra.mxu0 0.0
  %765 = vmatprep.subr.mxu0 0.0
  %766 = vmatpush1.msra.mxu0 0.0
  %767 = vmatprep.subr.mxu0 0.0
  %768 = vmatpush1.msra.mxu0 0.0
  %769 = vmatprep.subr.mxu0 0.0
  %770 = vmatpush1.msra.mxu0 0.0
  %771 = vmatprep.subr.mxu0 0.0
  %772 = vmatpush1.msra.mxu0 0.0
  %773 = vmatprep.subr.mxu0 0.0
  %774 = vmatpush1.msra.mxu0 0.0
  %775 = vmatprep.subr.mxu0 0.0
  %776 = vmatpush1.msra.mxu0 0.0
  %777 = vmatprep.subr.mxu0 0.0
  %778 = vmatpush1.msra.mxu0 0.0
  %779 = vmatprep.subr.mxu0 0.0
  %780 = vmatpush1.msra.mxu0 0.0
  %781 = vmatprep.subr.mxu0 0.0
  %782 = vmatpush1.msra.mxu0 0.0
  %783 = vmatprep.subr.mxu0 0.0
  %784 = vmatpush1.msra.mxu0 0.0
  %785 = vmatprep.subr.mxu0 0.0
  %786 = vmatpush1.msra.mxu0 0.0
  %787 = vmatprep.subr.mxu0 0.0
  %788 = vmatpush1.msra.mxu0 0.0
  %789 = vmatprep.subr.mxu0 0.0
  %790 = vmatpush1.msra.mxu0 0.0
  %791 = vmatprep.subr.mxu0 0.0
  %792 = vmatpush1.msra.mxu0 0.0
  %793 = vmatprep.subr.mxu0 0.0
  %794 = vmatpush1.msra.mxu0 0.0
  %795 = vmatprep.subr.mxu0 0.0
  %796 = vmatpush1.msra.mxu0 0.0
  %797 = vmatprep.subr.mxu0 0.0
  %798 = vmatpush1.msra.mxu0 0.0
  %799 = vmatprep.subr.mxu0 0.0
  %800 = vmatpush1.msra.mxu0 0.0
  %801 = vmatprep.subr.mxu0 0.0
  %802 = vmatpush1.msra.mxu0 0.0
  %803 = vmatprep.subr.mxu0 0.0
  %804 = vmatpush1.msra.mxu0 0.0
  %805 = vmatprep.subr.mxu0 0.0
  %806 = vmatpush1.msra.mxu0 0.0
  %807 = vmatprep.subr.mxu0 0.0
  %808 = vmatpush1.msra.mxu0 0.0
  %809 = vmatprep.subr.mxu0 0.0
  %810 = vmatpush1.msra.mxu0 0.0
  %811 = vmatprep.subr.mxu0 0.0
  %812 = vmatpush1.msra.mxu0 0.0
  %813 = vmatprep.subr.mxu0 0.0
  %814 = vmatpush1.msra.mxu0 0.0
  %815 = vmatprep.subr.mxu0 0.0
  %816 = vmatpush1.msra.mxu0 0.0
  %817 = vmatprep.subr.mxu0 0.0
  %818 = vmatpush1.msra.mxu0 0.0
  %819 = vmatprep.mubr.f32.mxu0 0.0
  %820 = vmatmul.mubr.f32.gmra.mrb[0].mxu0 %v753
  %v821 = vpop.f32.mrb[0].mxu0
  %v822 = vadd.f32 %v594, %v821
  %v823 = vpop.f32.mrb[0].mxu0
  %824 = vdwg.mxu0
  %s825 = scalar_lea.vmem [#allocation3], 2
  %v826 = vld [vmem:[%s825] sm:$0x3]
  %v827 = vadd.f32 %v826, %v822
  %v828 = vxor.u32 %v827, 2147483648
  %v829 = vmul.f32 %v828, 1.442695
  %v830 = vpow.pop %v829
  %v831 = vadd.f32 %v830, 1.0
  %v832 = vrcp.pop %v831
  %v833 = vmul.f32 1.0, %v832
  %835 = vrot.lane.b32.xlu0 %v822, 96
  %v836 = vpop.permute.xlu0 %835
  %v838 = vmul.f32 %v833, %v836
  %840 = vrot.lane.b32.xlu0 %v838, 32
  %v841 = vpop.permute.xlu0 %840
  %v843 = vadd.f32 %v826, %v841
  %v844 = vtanh.pop %v843
  %846 = vrot.lane.b32.xlu0 %v844, 96
  %v847 = vpop.permute.xlu0 %846
  %v849 = vsub.f32 %v751, %v847
  %851 = vrot.lane.b32.xlu0 %v849, 16
  %v852 = vpop.permute.xlu0 %851
  %v854 = vmul.f32 %v833, %v852
  %856 = vrot.lane.b32.xlu0 %v854, 16
  %v857 = vpop.permute.xlu0 %856
  %v859 = vadd.f32 %v844, %v857
  %s860 = scalar_lea.vmem [#allocation4], 12
  %v861 = vld [vmem:[%s860] sm:$0x3]
  %862 = vrot.lane.b32.xlu0 %v822, 80
  %v863 = vpop.permute.xlu0 %862
  %v865 = vadd.f32 %v861, %v863
  %v866 = vxor.u32 %v865, 2147483648
  %v867 = vmul.f32 %v866, 1.442695
  %v868 = vpow.pop %v867
  %v869 = vadd.f32 %v868, 1.0
  %v870 = vrcp.pop %v869
  %v871 = vmul.f32 1.0, %v870
  %872 = vrot.lane.b32.xlu0 %v822, 48
  %v873 = vpop.permute.xlu0 %872
  %v875 = vmul.f32 %v871, %v873
  %877 = vrot.lane.b32.xlu0 %v875, 32
  %v878 = vpop.permute.xlu0 %877
  %v880 = vadd.f32 %v861, %v878
  %v881 = vtanh.pop %v880
  %883 = vrot.lane.b32.xlu0 %v881, 112
  %v884 = vpop.permute.xlu0 %883
  %v886 = vsub.f32 %v751, %v884
  %v887 = vmul.f32 %v871, %v886
  %889 = vrot.lane.b32.xlu0 %v887, 16
  %v890 = vpop.permute.xlu0 %889
  %v892 = vadd.f32 %v881, %v890
  %894 = vrot.lane.b32.xlu0 %v859, 96
  %v895 = vpop.permute.xlu0 %894
  %s897 = scalar_lea.vmem %s10, 2
  %898 = vst.msk [vmem:[%s897] sm:$0x3] %vm740, %v895
  %900 = vrot.lane.b32.xlu0 %v892, 96
  %v901 = vpop.permute.xlu0 %900
  %s903 = scalar_lea.vmem %s92, 12
  %904 = vst.msk [vmem:[%s903] sm:$0x3] %vm740, %v901
  %905 = vrot.lane.b32.xlu0 %v892, 112
  %v906 = vpop.permute.xlu0 %905
  %v908 = vsel %vm149, %v895, %v906
  %v910 = vsel %vm211, %v908, 0
  %912 = vmatprep.subr.mxu0 0.0
  %913 = vmatpush1.msra.mxu0 %v584
  %914 = vmatprep.subr.mxu0 0.0
  %915 = vmatpush1.msra.mxu0 %v585
  %916 = vmatprep.subr.mxu0 0.0
  %917 = vmatpush1.msra.mxu0 %v586
  %918 = vmatprep.subr.mxu0 0.0
  %919 = vmatpush1.msra.mxu0 %v587
  %920 = vmatprep.subr.mxu0 0.0
  %921 = vmatpush1.msra.mxu0 0.0
  %922 = vmatprep.subr.mxu0 0.0
  %923 = vmatpush1.msra.mxu0 0.0
  %924 = vmatprep.subr.mxu0 0.0
  %925 = vmatpush1.msra.mxu0 0.0
  %926 = vmatprep.subr.mxu0 0.0
  %927 = vmatpush1.msra.mxu0 0.0
  %928 = vmatprep.subr.mxu0 0.0
  %929 = vmatpush1.msra.mxu0 0.0
  %930 = vmatprep.subr.mxu0 0.0
  %931 = vmatpush1.msra.mxu0 0.0
  %932 = vmatprep.subr.mxu0 0.0
  %933 = vmatpush1.msra.mxu0 0.0
  %934 = vmatprep.subr.mxu0 0.0
  %935 = vmatpush1.msra.mxu0 0.0
  %936 = vmatprep.subr.mxu0 0.0
  %937 = vmatpush1.msra.mxu0 0.0
  %938 = vmatprep.subr.mxu0 0.0
  %939 = vmatpush1.msra.mxu0 0.0
  %940 = vmatprep.subr.mxu0 0.0
  %941 = vmatpush1.msra.mxu0 0.0
  %942 = vmatprep.subr.mxu0 0.0
  %943 = vmatpush1.msra.mxu0 0.0
  %944 = vmatprep.subr.mxu0 0.0
  %945 = vmatpush1.msra.mxu0 0.0
  %946 = vmatprep.subr.mxu0 0.0
  %947 = vmatpush1.msra.mxu0 0.0
  %948 = vmatprep.subr.mxu0 0.0
  %949 = vmatpush1.msra.mxu0 0.0
  %950 = vmatprep.subr.mxu0 0.0
  %951 = vmatpush1.msra.mxu0 0.0
  %952 = vmatprep.subr.mxu0 0.0
  %953 = vmatpush1.msra.mxu0 0.0
  %954 = vmatprep.subr.mxu0 0.0
  %955 = vmatpush1.msra.mxu0 0.0
  %956 = vmatprep.subr.mxu0 0.0
  %957 = vmatpush1.msra.mxu0 0.0
  %958 = vmatprep.subr.mxu0 0.0
  %959 = vmatpush1.msra.mxu0 0.0
  %960 = vmatprep.subr.mxu0 0.0
  %961 = vmatpush1.msra.mxu0 0.0
  %962 = vmatprep.subr.mxu0 0.0
  %963 = vmatpush1.msra.mxu0 0.0
  %964 = vmatprep.subr.mxu0 0.0
  %965 = vmatpush1.msra.mxu0 0.0
  %966 = vmatprep.subr.mxu0 0.0
  %967 = vmatpush1.msra.mxu0 0.0
  %968 = vmatprep.subr.mxu0 0.0
  %969 = vmatpush1.msra.mxu0 0.0
  %970 = vmatprep.subr.mxu0 0.0
  %971 = vmatpush1.msra.mxu0 0.0
  %972 = vmatprep.subr.mxu0 0.0
  %973 = vmatpush1.msra.mxu0 0.0
  %974 = vmatprep.subr.mxu0 0.0
  %975 = vmatpush1.msra.mxu0 0.0
  %976 = vmatprep.mubr.f32.mxu0 0.0
  %977 = vmatmul.mubr.f32.gmra.mrb[0].mxu0 %v910
  %v978 = vpop.f32.mrb[0].mxu0
  %v979 = vadd.f32 %v594, %v978
  %v980 = vpop.f32.mrb[0].mxu0
  %981 = vdwg.mxu0
  %s982 = scalar_lea.vmem [#allocation3], 4
  %v983 = vld [vmem:[%s982] sm:$0x3]
  %v984 = vadd.f32 %v983, %v979
  %v985 = vxor.u32 %v984, 2147483648
  %v986 = vmul.f32 %v985, 1.442695
  %v987 = vpow.pop %v986
  %v988 = vadd.f32 %v987, 1.0
  %v989 = vrcp.pop %v988
  %v990 = vmul.f32 1.0, %v989
  %992 = vrot.lane.b32.xlu0 %v979, 96
  %v993 = vpop.permute.xlu0 %992
  %v995 = vmul.f32 %v990, %v993
  %997 = vrot.lane.b32.xlu0 %v995, 32
  %v998 = vpop.permute.xlu0 %997
  %v1000 = vadd.f32 %v983, %v998
  %v1001 = vtanh.pop %v1000
  %1003 = vrot.lane.b32.xlu0 %v1001, 96
  %v1004 = vpop.permute.xlu0 %1003
  %v1006 = vsub.f32 %v908, %v1004
  %1008 = vrot.lane.b32.xlu0 %v1006, 16
  %v1009 = vpop.permute.xlu0 %1008
  %v1011 = vmul.f32 %v990, %v1009
  %1013 = vrot.lane.b32.xlu0 %v1011, 16
  %v1014 = vpop.permute.xlu0 %1013
  %v1016 = vadd.f32 %v1001, %v1014
  %s1017 = scalar_lea.vmem [#allocation4], 10
  %v1018 = vld [vmem:[%s1017] sm:$0x3]
  %1019 = vrot.lane.b32.xlu0 %v979, 80
  %v1020 = vpop.permute.xlu0 %1019
  %v1022 = vadd.f32 %v1018, %v1020
  %v1023 = vxor.u32 %v1022, 2147483648
  %v1024 = vmul.f32 %v1023, 1.442695
  %v1025 = vpow.pop %v1024
  %v1026 = vadd.f32 %v1025, 1.0
  %v1027 = vrcp.pop %v1026
  %v1028 = vmul.f32 1.0, %v1027
  %1029 = vrot.lane.b32.xlu0 %v979, 48
  %v1030 = vpop.permute.xlu0 %1029
  %v1032 = vmul.f32 %v1028, %v1030
  %1034 = vrot.lane.b32.xlu0 %v1032, 32
  %v1035 = vpop.permute.xlu0 %1034
  %v1037 = vadd.f32 %v1018, %v1035
  %v1038 = vtanh.pop %v1037
  %1040 = vrot.lane.b32.xlu0 %v1038, 112
  %v1041 = vpop.permute.xlu0 %1040
  %v1043 = vsub.f32 %v908, %v1041
  %v1044 = vmul.f32 %v1028, %v1043
  %1046 = vrot.lane.b32.xlu0 %v1044, 16
  %v1047 = vpop.permute.xlu0 %1046
  %v1049 = vadd.f32 %v1038, %v1047
  %1051 = vrot.lane.b32.xlu0 %v1016, 96
  %v1052 = vpop.permute.xlu0 %1051
  %s1054 = scalar_lea.vmem %s10, 4
  %1055 = vst.msk [vmem:[%s1054] sm:$0x3] %vm740, %v1052
  %1057 = vrot.lane.b32.xlu0 %v1049, 96
  %v1058 = vpop.permute.xlu0 %1057
  %s1060 = scalar_lea.vmem %s92, 10
  %1061 = vst.msk [vmem:[%s1060] sm:$0x3] %vm740, %v1058
  %1062 = vrot.lane.b32.xlu0 %v1049, 112
  %v1063 = vpop.permute.xlu0 %1062
  %v1065 = vsel %vm149, %v1052, %v1063
  %v1067 = vsel %vm211, %v1065, 0
  %1069 = vmatprep.subr.mxu0 0.0
  %1070 = vmatpush1.msra.mxu0 %v584
  %1071 = vmatprep.subr.mxu0 0.0
  %1072 = vmatpush1.msra.mxu0 %v585
  %1073 = vmatprep.subr.mxu0 0.0
  %1074 = vmatpush1.msra.mxu0 %v586
  %1075 = vmatprep.subr.mxu0 0.0
  %1076 = vmatpush1.msra.mxu0 %v587
  %1077 = vmatprep.subr.mxu0 0.0
  %1078 = vmatpush1.msra.mxu0 0.0
  %1079 = vmatprep.subr.mxu0 0.0
  %1080 = vmatpush1.msra.mxu0 0.0
  %1081 = vmatprep.subr.mxu0 0.0
  %1082 = vmatpush1.msra.mxu0 0.0
  %1083 = vmatprep.subr.mxu0 0.0
  %1084 = vmatpush1.msra.mxu0 0.0
  %1085 = vmatprep.subr.mxu0 0.0
  %1086 = vmatpush1.msra.mxu0 0.0
  %1087 = vmatprep.subr.mxu0 0.0
  %1088 = vmatpush1.msra.mxu0 0.0
  %1089 = vmatprep.subr.mxu0 0.0
  %1090 = vmatpush1.msra.mxu0 0.0
  %1091 = vmatprep.subr.mxu0 0.0
  %1092 = vmatpush1.msra.mxu0 0.0
  %1093 = vmatprep.subr.mxu0 0.0
  %1094 = vmatpush1.msra.mxu0 0.0
  %1095 = vmatprep.subr.mxu0 0.0
  %1096 = vmatpush1.msra.mxu0 0.0
  %1097 = vmatprep.subr.mxu0 0.0
  %1098 = vmatpush1.msra.mxu0 0.0
  %1099 = vmatprep.subr.mxu0 0.0
  %1100 = vmatpush1.msra.mxu0 0.0
  %1101 = vmatprep.subr.mxu0 0.0
  %1102 = vmatpush1.msra.mxu0 0.0
  %1103 = vmatprep.subr.mxu0 0.0
  %1104 = vmatpush1.msra.mxu0 0.0
  %1105 = vmatprep.subr.mxu0 0.0
  %1106 = vmatpush1.msra.mxu0 0.0
  %1107 = vmatprep.subr.mxu0 0.0
  %1108 = vmatpush1.msra.mxu0 0.0
  %1109 = vmatprep.subr.mxu0 0.0
  %1110 = vmatpush1.msra.mxu0 0.0
  %1111 = vmatprep.subr.mxu0 0.0
  %1112 = vmatpush1.msra.mxu0 0.0
  %1113 = vmatprep.subr.mxu0 0.0
  %1114 = vmatpush1.msra.mxu0 0.0
  %1115 = vmatprep.subr.mxu0 0.0
  %1116 = vmatpush1.msra.mxu0 0.0
  %1117 = vmatprep.subr.mxu0 0.0
  %1118 = vmatpush1.msra.mxu0 0.0
  %1119 = vmatprep.subr.mxu0 0.0
  %1120 = vmatpush1.msra.mxu0 0.0
  %1121 = vmatprep.subr.mxu0 0.0
  %1122 = vmatpush1.msra.mxu0 0.0
  %1123 = vmatprep.subr.mxu0 0.0
  %1124 = vmatpush1.msra.mxu0 0.0
  %1125 = vmatprep.subr.mxu0 0.0
  %1126 = vmatpush1.msra.mxu0 0.0
  %1127 = vmatprep.subr.mxu0 0.0
  %1128 = vmatpush1.msra.mxu0 0.0
  %1129 = vmatprep.subr.mxu0 0.0
  %1130 = vmatpush1.msra.mxu0 0.0
  %1131 = vmatprep.subr.mxu0 0.0
  %1132 = vmatpush1.msra.mxu0 0.0
  %1133 = vmatprep.mubr.f32.mxu0 0.0
  %1134 = vmatmul.mubr.f32.gmra.mrb[0].mxu0 %v1067
  %v1135 = vpop.f32.mrb[0].mxu0
  %v1136 = vadd.f32 %v594, %v1135
  %v1137 = vpop.f32.mrb[0].mxu0
  %1138 = vdwg.mxu0
  %s1139 = scalar_lea.vmem [#allocation3], 6
  %v1140 = vld [vmem:[%s1139] sm:$0x3]
  %v1141 = vadd.f32 %v1140, %v1136
  %v1142 = vxor.u32 %v1141, 2147483648
  %v1143 = vmul.f32 %v1142, 1.442695
  %v1144 = vpow.pop %v1143
  %v1145 = vadd.f32 %v1144, 1.0
  %v1146 = vrcp.pop %v1145
  %v1147 = vmul.f32 1.0, %v1146
  %1149 = vrot.lane.b32.xlu0 %v1136, 96
  %v1150 = vpop.permute.xlu0 %1149
  %v1152 = vmul.f32 %v1147, %v1150
  %1154 = vrot.lane.b32.xlu0 %v1152, 32
  %v1155 = vpop.permute.xlu0 %1154
  %v1157 = vadd.f32 %v1140, %v1155
  %v1158 = vtanh.pop %v1157
  %1160 = vrot.lane.b32.xlu0 %v1158, 96
  %v1161 = vpop.permute.xlu0 %1160
  %v1163 = vsub.f32 %v1065, %v1161
  %1165 = vrot.lane.b32.xlu0 %v1163, 16
  %v1166 = vpop.permute.xlu0 %1165
  %v1168 = vmul.f32 %v1147, %v1166
  %1170 = vrot.lane.b32.xlu0 %v1168, 16
  %v1171 = vpop.permute.xlu0 %1170
  %v1173 = vadd.f32 %v1158, %v1171
  %s1174 = scalar_lea.vmem [#allocation4], 8
  %v1175 = vld [vmem:[%s1174] sm:$0x3]
  %1176 = vrot.lane.b32.xlu0 %v1136, 80
  %v1177 = vpop.permute.xlu0 %1176
  %v1179 = vadd.f32 %v1175, %v1177
  %v1180 = vxor.u32 %v1179, 2147483648
  %v1181 = vmul.f32 %v1180, 1.442695
  %v1182 = vpow.pop %v1181
  %v1183 = vadd.f32 %v1182, 1.0
  %v1184 = vrcp.pop %v1183
  %v1185 = vmul.f32 1.0, %v1184
  %1186 = vrot.lane.b32.xlu0 %v1136, 48
  %v1187 = vpop.permute.xlu0 %1186
  %v1189 = vmul.f32 %v1185, %v1187
  %1191 = vrot.lane.b32.xlu0 %v1189, 32
  %v1192 = vpop.permute.xlu0 %1191
  %v1194 = vadd.f32 %v1175, %v1192
  %v1195 = vtanh.pop %v1194
  %1197 = vrot.lane.b32.xlu0 %v1195, 112
  %v1198 = vpop.permute.xlu0 %1197
  %v1200 = vsub.f32 %v1065, %v1198
  %v1201 = vmul.f32 %v1185, %v1200
  %1203 = vrot.lane.b32.xlu0 %v1201, 16
  %v1204 = vpop.permute.xlu0 %1203
  %v1206 = vadd.f32 %v1195, %v1204
  %1208 = vrot.lane.b32.xlu0 %v1173, 96
  %v1209 = vpop.permute.xlu0 %1208
  %s1211 = scalar_lea.vmem %s10, 6
  %1212 = vst.msk [vmem:[%s1211] sm:$0x3] %vm740, %v1209
  %1214 = vrot.lane.b32.xlu0 %v1206, 96
  %v1215 = vpop.permute.xlu0 %1214
  %s1217 = scalar_lea.vmem %s92, 8
  %1218 = vst.msk [vmem:[%s1217] sm:$0x3] %vm740, %v1215
  %1219 = vrot.lane.b32.xlu0 %v1206, 112
  %v1220 = vpop.permute.xlu0 %1219
  %v1222 = vsel %vm149, %v1209, %v1220
  %v1224 = vsel %vm211, %v1222, 0
  %1226 = vmatprep.subr.mxu0 0.0
  %1227 = vmatpush1.msra.mxu0 %v584
  %1228 = vmatprep.subr.mxu0 0.0
  %1229 = vmatpush1.msra.mxu0 %v585
  %1230 = vmatprep.subr.mxu0 0.0
  %1231 = vmatpush1.msra.mxu0 %v586
  %1232 = vmatprep.subr.mxu0 0.0
  %1233 = vmatpush1.msra.mxu0 %v587
  %1234 = vmatprep.subr.mxu0 0.0
  %1235 = vmatpush1.msra.mxu0 0.0
  %1236 = vmatprep.subr.mxu0 0.0
  %1237 = vmatpush1.msra.mxu0 0.0
  %1238 = vmatprep.subr.mxu0 0.0
  %1239 = vmatpush1.msra.mxu0 0.0
  %1240 = vmatprep.subr.mxu0 0.0
  %1241 = vmatpush1.msra.mxu0 0.0
  %1242 = vmatprep.subr.mxu0 0.0
  %1243 = vmatpush1.msra.mxu0 0.0
  %1244 = vmatprep.subr.mxu0 0.0
  %1245 = vmatpush1.msra.mxu0 0.0
  %1246 = vmatprep.subr.mxu0 0.0
  %1247 = vmatpush1.msra.mxu0 0.0
  %1248 = vmatprep.subr.mxu0 0.0
  %1249 = vmatpush1.msra.mxu0 0.0
  %1250 = vmatprep.subr.mxu0 0.0
  %1251 = vmatpush1.msra.mxu0 0.0
  %1252 = vmatprep.subr.mxu0 0.0
  %1253 = vmatpush1.msra.mxu0 0.0
  %1254 = vmatprep.subr.mxu0 0.0
  %1255 = vmatpush1.msra.mxu0 0.0
  %1256 = vmatprep.subr.mxu0 0.0
  %1257 = vmatpush1.msra.mxu0 0.0
  %1258 = vmatprep.subr.mxu0 0.0
  %1259 = vmatpush1.msra.mxu0 0.0
  %1260 = vmatprep.subr.mxu0 0.0
  %1261 = vmatpush1.msra.mxu0 0.0
  %1262 = vmatprep.subr.mxu0 0.0
  %1263 = vmatpush1.msra.mxu0 0.0
  %1264 = vmatprep.subr.mxu0 0.0
  %1265 = vmatpush1.msra.mxu0 0.0
  %1266 = vmatprep.subr.mxu0 0.0
  %1267 = vmatpush1.msra.mxu0 0.0
  %1268 = vmatprep.subr.mxu0 0.0
  %1269 = vmatpush1.msra.mxu0 0.0
  %1270 = vmatprep.subr.mxu0 0.0
  %1271 = vmatpush1.msra.mxu0 0.0
  %1272 = vmatprep.subr.mxu0 0.0
  %1273 = vmatpush1.msra.mxu0 0.0
  %1274 = vmatprep.subr.mxu0 0.0
  %1275 = vmatpush1.msra.mxu0 0.0
  %1276 = vmatprep.subr.mxu0 0.0
  %1277 = vmatpush1.msra.mxu0 0.0
  %1278 = vmatprep.subr.mxu0 0.0
  %1279 = vmatpush1.msra.mxu0 0.0
  %1280 = vmatprep.subr.mxu0 0.0
  %1281 = vmatpush1.msra.mxu0 0.0
  %1282 = vmatprep.subr.mxu0 0.0
  %1283 = vmatpush1.msra.mxu0 0.0
  %1284 = vmatprep.subr.mxu0 0.0
  %1285 = vmatpush1.msra.mxu0 0.0
  %1286 = vmatprep.subr.mxu0 0.0
  %1287 = vmatpush1.msra.mxu0 0.0
  %1288 = vmatprep.subr.mxu0 0.0
  %1289 = vmatpush1.msra.mxu0 0.0
  %1290 = vmatprep.mubr.f32.mxu0 0.0
  %1291 = vmatmul.mubr.f32.gmra.mrb[0].mxu0 %v1224
  %v1292 = vpop.f32.mrb[0].mxu0
  %v1293 = vadd.f32 %v594, %v1292
  %v1294 = vpop.f32.mrb[0].mxu0
  %1295 = vdwg.mxu0
  %s1296 = scalar_lea.vmem [#allocation3], 8
  %v1297 = vld [vmem:[%s1296] sm:$0x3]
  %v1298 = vadd.f32 %v1297, %v1293
  %v1299 = vxor.u32 %v1298, 2147483648
  %v1300 = vmul.f32 %v1299, 1.442695
  %v1301 = vpow.pop %v1300
  %v1302 = vadd.f32 %v1301, 1.0
  %v1303 = vrcp.pop %v1302
  %v1304 = vmul.f32 1.0, %v1303
  %1306 = vrot.lane.b32.xlu0 %v1293, 96
  %v1307 = vpop.permute.xlu0 %1306
  %v1309 = vmul.f32 %v1304, %v1307
  %1311 = vrot.lane.b32.xlu0 %v1309, 32
  %v1312 = vpop.permute.xlu0 %1311
  %v1314 = vadd.f32 %v1297, %v1312
  %v1315 = vtanh.pop %v1314
  %1317 = vrot.lane.b32.xlu0 %v1315, 96
  %v1318 = vpop.permute.xlu0 %1317
  %v1320 = vsub.f32 %v1222, %v1318
  %1322 = vrot.lane.b32.xlu0 %v1320, 16
  %v1323 = vpop.permute.xlu0 %1322
  %v1325 = vmul.f32 %v1304, %v1323
  %1327 = vrot.lane.b32.xlu0 %v1325, 16
  %v1328 = vpop.permute.xlu0 %1327
  %v1330 = vadd.f32 %v1315, %v1328
  %s1331 = scalar_lea.vmem [#allocation4], 6
  %v1332 = vld [vmem:[%s1331] sm:$0x3]
  %1333 = vrot.lane.b32.xlu0 %v1293, 80
  %v1334 = vpop.permute.xlu0 %1333
  %v1336 = vadd.f32 %v1332, %v1334
  %v1337 = vxor.u32 %v1336, 2147483648
  %v1338 = vmul.f32 %v1337, 1.442695
  %v1339 = vpow.pop %v1338
  %v1340 = vadd.f32 %v1339, 1.0
  %v1341 = vrcp.pop %v1340
  %v1342 = vmul.f32 1.0, %v1341
  %1343 = vrot.lane.b32.xlu0 %v1293, 48
  %v1344 = vpop.permute.xlu0 %1343
  %v1346 = vmul.f32 %v1342, %v1344
  %1348 = vrot.lane.b32.xlu0 %v1346, 32
  %v1349 = vpop.permute.xlu0 %1348
  %v1351 = vadd.f32 %v1332, %v1349
  %v1352 = vtanh.pop %v1351
  %1354 = vrot.lane.b32.xlu0 %v1352, 112
  %v1355 = vpop.permute.xlu0 %1354
  %v1357 = vsub.f32 %v1222, %v1355
  %v1358 = vmul.f32 %v1342, %v1357
  %1360 = vrot.lane.b32.xlu0 %v1358, 16
  %v1361 = vpop.permute.xlu0 %1360
  %v1363 = vadd.f32 %v1352, %v1361
  %1365 = vrot.lane.b32.xlu0 %v1330, 96
  %v1366 = vpop.permute.xlu0 %1365
  %s1368 = scalar_lea.vmem %s10, 8
  %1369 = vst.msk [vmem:[%s1368] sm:$0x3] %vm740, %v1366
  %1371 = vrot.lane.b32.xlu0 %v1363, 96
  %v1372 = vpop.permute.xlu0 %1371
  %s1374 = scalar_lea.vmem %s92, 6
  %1375 = vst.msk [vmem:[%s1374] sm:$0x3] %vm740, %v1372
  %1376 = vrot.lane.b32.xlu0 %v1363, 112
  %v1377 = vpop.permute.xlu0 %1376
  %v1379 = vsel %vm149, %v1366, %v1377
  %v1381 = vsel %vm211, %v1379, 0
  %1383 = vmatprep.subr.mxu0 0.0
  %1384 = vmatpush1.msra.mxu0 %v584
  %1385 = vmatprep.subr.mxu0 0.0
  %1386 = vmatpush1.msra.mxu0 %v585
  %1387 = vmatprep.subr.mxu0 0.0
  %1388 = vmatpush1.msra.mxu0 %v586
  %1389 = vmatprep.subr.mxu0 0.0
  %1390 = vmatpush1.msra.mxu0 %v587
  %1391 = vmatprep.subr.mxu0 0.0
  %1392 = vmatpush1.msra.mxu0 0.0
  %1393 = vmatprep.subr.mxu0 0.0
  %1394 = vmatpush1.msra.mxu0 0.0
  %1395 = vmatprep.subr.mxu0 0.0
  %1396 = vmatpush1.msra.mxu0 0.0
  %1397 = vmatprep.subr.mxu0 0.0
  %1398 = vmatpush1.msra.mxu0 0.0
  %1399 = vmatprep.subr.mxu0 0.0
  %1400 = vmatpush1.msra.mxu0 0.0
  %1401 = vmatprep.subr.mxu0 0.0
  %1402 = vmatpush1.msra.mxu0 0.0
  %1403 = vmatprep.subr.mxu0 0.0
  %1404 = vmatpush1.msra.mxu0 0.0
  %1405 = vmatprep.subr.mxu0 0.0
  %1406 = vmatpush1.msra.mxu0 0.0
  %1407 = vmatprep.subr.mxu0 0.0
  %1408 = vmatpush1.msra.mxu0 0.0
  %1409 = vmatprep.subr.mxu0 0.0
  %1410 = vmatpush1.msra.mxu0 0.0
  %1411 = vmatprep.subr.mxu0 0.0
  %1412 = vmatpush1.msra.mxu0 0.0
  %1413 = vmatprep.subr.mxu0 0.0
  %1414 = vmatpush1.msra.mxu0 0.0
  %1415 = vmatprep.subr.mxu0 0.0
  %1416 = vmatpush1.msra.mxu0 0.0
  %1417 = vmatprep.subr.mxu0 0.0
  %1418 = vmatpush1.msra.mxu0 0.0
  %1419 = vmatprep.subr.mxu0 0.0
  %1420 = vmatpush1.msra.mxu0 0.0
  %1421 = vmatprep.subr.mxu0 0.0
  %1422 = vmatpush1.msra.mxu0 0.0
  %1423 = vmatprep.subr.mxu0 0.0
  %1424 = vmatpush1.msra.mxu0 0.0
  %1425 = vmatprep.subr.mxu0 0.0
  %1426 = vmatpush1.msra.mxu0 0.0
  %1427 = vmatprep.subr.mxu0 0.0
  %1428 = vmatpush1.msra.mxu0 0.0
  %1429 = vmatprep.subr.mxu0 0.0
  %1430 = vmatpush1.msra.mxu0 0.0
  %1431 = vmatprep.subr.mxu0 0.0
  %1432 = vmatpush1.msra.mxu0 0.0
  %1433 = vmatprep.subr.mxu0 0.0
  %1434 = vmatpush1.msra.mxu0 0.0
  %1435 = vmatprep.subr.mxu0 0.0
  %1436 = vmatpush1.msra.mxu0 0.0
  %1437 = vmatprep.subr.mxu0 0.0
  %1438 = vmatpush1.msra.mxu0 0.0
  %1439 = vmatprep.subr.mxu0 0.0
  %1440 = vmatpush1.msra.mxu0 0.0
  %1441 = vmatprep.subr.mxu0 0.0
  %1442 = vmatpush1.msra.mxu0 0.0
  %1443 = vmatprep.subr.mxu0 0.0
  %1444 = vmatpush1.msra.mxu0 0.0
  %1445 = vmatprep.subr.mxu0 0.0
  %1446 = vmatpush1.msra.mxu0 0.0
  %1447 = vmatprep.mubr.f32.mxu0 0.0
  %1448 = vmatmul.mubr.f32.gmra.mrb[0].mxu0 %v1381
  %v1449 = vpop.f32.mrb[0].mxu0
  %v1450 = vadd.f32 %v594, %v1449
  %v1451 = vpop.f32.mrb[0].mxu0
  %1452 = vdwg.mxu0
  %s1453 = scalar_lea.vmem [#allocation3], 10
  %v1454 = vld [vmem:[%s1453] sm:$0x3]
  %v1455 = vadd.f32 %v1454, %v1450
  %v1456 = vxor.u32 %v1455, 2147483648
  %v1457 = vmul.f32 %v1456, 1.442695
  %v1458 = vpow.pop %v1457
  %v1459 = vadd.f32 %v1458, 1.0
  %v1460 = vrcp.pop %v1459
  %v1461 = vmul.f32 1.0, %v1460
  %1463 = vrot.lane.b32.xlu0 %v1450, 96
  %v1464 = vpop.permute.xlu0 %1463
  %v1466 = vmul.f32 %v1461, %v1464
  %1468 = vrot.lane.b32.xlu0 %v1466, 32
  %v1469 = vpop.permute.xlu0 %1468
  %v1471 = vadd.f32 %v1454, %v1469
  %v1472 = vtanh.pop %v1471
  %1474 = vrot.lane.b32.xlu0 %v1472, 96
  %v1475 = vpop.permute.xlu0 %1474
  %v1477 = vsub.f32 %v1379, %v1475
  %1479 = vrot.lane.b32.xlu0 %v1477, 16
  %v1480 = vpop.permute.xlu0 %1479
  %v1482 = vmul.f32 %v1461, %v1480
  %1484 = vrot.lane.b32.xlu0 %v1482, 16
  %v1485 = vpop.permute.xlu0 %1484
  %v1487 = vadd.f32 %v1472, %v1485
  %s1488 = scalar_lea.vmem [#allocation4], 4
  %v1489 = vld [vmem:[%s1488] sm:$0x3]
  %1490 = vrot.lane.b32.xlu0 %v1450, 80
  %v1491 = vpop.permute.xlu0 %1490
  %v1493 = vadd.f32 %v1489, %v1491
  %v1494 = vxor.u32 %v1493, 2147483648
  %v1495 = vmul.f32 %v1494, 1.442695
  %v1496 = vpow.pop %v1495
  %v1497 = vadd.f32 %v1496, 1.0
  %v1498 = vrcp.pop %v1497
  %v1499 = vmul.f32 1.0, %v1498
  %1500 = vrot.lane.b32.xlu0 %v1450, 48
  %v1501 = vpop.permute.xlu0 %1500
  %v1503 = vmul.f32 %v1499, %v1501
  %1505 = vrot.lane.b32.xlu0 %v1503, 32
  %v1506 = vpop.permute.xlu0 %1505
  %v1508 = vadd.f32 %v1489, %v1506
  %v1509 = vtanh.pop %v1508
  %1511 = vrot.lane.b32.xlu0 %v1509, 112
  %v1512 = vpop.permute.xlu0 %1511
  %v1514 = vsub.f32 %v1379, %v1512
  %v1515 = vmul.f32 %v1499, %v1514
  %1517 = vrot.lane.b32.xlu0 %v1515, 16
  %v1518 = vpop.permute.xlu0 %1517
  %v1520 = vadd.f32 %v1509, %v1518
  %1522 = vrot.lane.b32.xlu0 %v1487, 96
  %v1523 = vpop.permute.xlu0 %1522
  %s1525 = scalar_lea.vmem %s10, 10
  %1526 = vst.msk [vmem:[%s1525] sm:$0x3] %vm740, %v1523
  %1528 = vrot.lane.b32.xlu0 %v1520, 96
  %v1529 = vpop.permute.xlu0 %1528
  %s1531 = scalar_lea.vmem %s92, 4
  %1532 = vst.msk [vmem:[%s1531] sm:$0x3] %vm740, %v1529
  %1533 = vrot.lane.b32.xlu0 %v1520, 112
  %v1534 = vpop.permute.xlu0 %1533
  %v1536 = vsel %vm149, %v1523, %v1534
  %v1538 = vsel %vm211, %v1536, 0
  %1540 = vmatprep.subr.mxu0 0.0
  %1541 = vmatpush1.msra.mxu0 %v584
  %1542 = vmatprep.subr.mxu0 0.0
  %1543 = vmatpush1.msra.mxu0 %v585
  %1544 = vmatprep.subr.mxu0 0.0
  %1545 = vmatpush1.msra.mxu0 %v586
  %1546 = vmatprep.subr.mxu0 0.0
  %1547 = vmatpush1.msra.mxu0 %v587
  %1548 = vmatprep.subr.mxu0 0.0
  %1549 = vmatpush1.msra.mxu0 0.0
  %1550 = vmatprep.subr.mxu0 0.0
  %1551 = vmatpush1.msra.mxu0 0.0
  %1552 = vmatprep.subr.mxu0 0.0
  %1553 = vmatpush1.msra.mxu0 0.0
  %1554 = vmatprep.subr.mxu0 0.0
  %1555 = vmatpush1.msra.mxu0 0.0
  %1556 = vmatprep.subr.mxu0 0.0
  %1557 = vmatpush1.msra.mxu0 0.0
  %1558 = vmatprep.subr.mxu0 0.0
  %1559 = vmatpush1.msra.mxu0 0.0
  %1560 = vmatprep.subr.mxu0 0.0
  %1561 = vmatpush1.msra.mxu0 0.0
  %1562 = vmatprep.subr.mxu0 0.0
  %1563 = vmatpush1.msra.mxu0 0.0
  %1564 = vmatprep.subr.mxu0 0.0
  %1565 = vmatpush1.msra.mxu0 0.0
  %1566 = vmatprep.subr.mxu0 0.0
  %1567 = vmatpush1.msra.mxu0 0.0
  %1568 = vmatprep.subr.mxu0 0.0
  %1569 = vmatpush1.msra.mxu0 0.0
  %1570 = vmatprep.subr.mxu0 0.0
  %1571 = vmatpush1.msra.mxu0 0.0
  %1572 = vmatprep.subr.mxu0 0.0
  %1573 = vmatpush1.msra.mxu0 0.0
  %1574 = vmatprep.subr.mxu0 0.0
  %1575 = vmatpush1.msra.mxu0 0.0
  %1576 = vmatprep.subr.mxu0 0.0
  %1577 = vmatpush1.msra.mxu0 0.0
  %1578 = vmatprep.subr.mxu0 0.0
  %1579 = vmatpush1.msra.mxu0 0.0
  %1580 = vmatprep.subr.mxu0 0.0
  %1581 = vmatpush1.msra.mxu0 0.0
  %1582 = vmatprep.subr.mxu0 0.0
  %1583 = vmatpush1.msra.mxu0 0.0
  %1584 = vmatprep.subr.mxu0 0.0
  %1585 = vmatpush1.msra.mxu0 0.0
  %1586 = vmatprep.subr.mxu0 0.0
  %1587 = vmatpush1.msra.mxu0 0.0
  %1588 = vmatprep.subr.mxu0 0.0
  %1589 = vmatpush1.msra.mxu0 0.0
  %1590 = vmatprep.subr.mxu0 0.0
  %1591 = vmatpush1.msra.mxu0 0.0
  %1592 = vmatprep.subr.mxu0 0.0
  %1593 = vmatpush1.msra.mxu0 0.0
  %1594 = vmatprep.subr.mxu0 0.0
  %1595 = vmatpush1.msra.mxu0 0.0
  %1596 = vmatprep.subr.mxu0 0.0
  %1597 = vmatpush1.msra.mxu0 0.0
  %1598 = vmatprep.subr.mxu0 0.0
  %1599 = vmatpush1.msra.mxu0 0.0
  %1600 = vmatprep.subr.mxu0 0.0
  %1601 = vmatpush1.msra.mxu0 0.0
  %1602 = vmatprep.subr.mxu0 0.0
  %1603 = vmatpush1.msra.mxu0 0.0
  %1604 = vmatprep.mubr.f32.mxu0 0.0
  %1605 = vmatmul.mubr.f32.gmra.mrb[0].mxu0 %v1538
  %v1606 = vpop.f32.mrb[0].mxu0
  %v1607 = vadd.f32 %v594, %v1606
  %v1608 = vpop.f32.mrb[0].mxu0
  %1609 = vdwg.mxu0
  %s1610 = scalar_lea.vmem [#allocation3], 12
  %v1611 = vld [vmem:[%s1610] sm:$0x3]
  %v1612 = vadd.f32 %v1611, %v1607
  %v1613 = vxor.u32 %v1612, 2147483648
  %v1614 = vmul.f32 %v1613, 1.442695
  %v1615 = vpow.pop %v1614
  %v1616 = vadd.f32 %v1615, 1.0
  %v1617 = vrcp.pop %v1616
  %v1618 = vmul.f32 1.0, %v1617
  %1620 = vrot.lane.b32.xlu0 %v1607, 96
  %v1621 = vpop.permute.xlu0 %1620
  %v1623 = vmul.f32 %v1618, %v1621
  %1625 = vrot.lane.b32.xlu0 %v1623, 32
  %v1626 = vpop.permute.xlu0 %1625
  %v1628 = vadd.f32 %v1611, %v1626
  %v1629 = vtanh.pop %v1628
  %1631 = vrot.lane.b32.xlu0 %v1629, 96
  %v1632 = vpop.permute.xlu0 %1631
  %v1634 = vsub.f32 %v1536, %v1632
  %1636 = vrot.lane.b32.xlu0 %v1634, 16
  %v1637 = vpop.permute.xlu0 %1636
  %v1639 = vmul.f32 %v1618, %v1637
  %1641 = vrot.lane.b32.xlu0 %v1639, 16
  %v1642 = vpop.permute.xlu0 %1641
  %v1644 = vadd.f32 %v1629, %v1642
  %s1645 = scalar_lea.vmem [#allocation4], 2
  %v1646 = vld [vmem:[%s1645] sm:$0x3]
  %1647 = vrot.lane.b32.xlu0 %v1607, 80
  %v1648 = vpop.permute.xlu0 %1647
  %v1650 = vadd.f32 %v1646, %v1648
  %v1651 = vxor.u32 %v1650, 2147483648
  %v1652 = vmul.f32 %v1651, 1.442695
  %v1653 = vpow.pop %v1652
  %v1654 = vadd.f32 %v1653, 1.0
  %v1655 = vrcp.pop %v1654
  %v1656 = vmul.f32 1.0, %v1655
  %1657 = vrot.lane.b32.xlu0 %v1607, 48
  %v1658 = vpop.permute.xlu0 %1657
  %v1660 = vmul.f32 %v1656, %v1658
  %1662 = vrot.lane.b32.xlu0 %v1660, 32
  %v1663 = vpop.permute.xlu0 %1662
  %v1665 = vadd.f32 %v1646, %v1663
  %v1666 = vtanh.pop %v1665
  %1668 = vrot.lane.b32.xlu0 %v1666, 112
  %v1669 = vpop.permute.xlu0 %1668
  %v1671 = vsub.f32 %v1536, %v1669
  %v1672 = vmul.f32 %v1656, %v1671
  %1674 = vrot.lane.b32.xlu0 %v1672, 16
  %v1675 = vpop.permute.xlu0 %1674
  %v1677 = vadd.f32 %v1666, %v1675
  %1679 = vrot.lane.b32.xlu0 %v1644, 96
  %v1680 = vpop.permute.xlu0 %1679
  %s1682 = scalar_lea.vmem %s10, 12
  %1683 = vst.msk [vmem:[%s1682] sm:$0x3] %vm740, %v1680
  %1685 = vrot.lane.b32.xlu0 %v1677, 96
  %v1686 = vpop.permute.xlu0 %1685
  %s1688 = scalar_lea.vmem %s92, 2
  %1689 = vst.msk [vmem:[%s1688] sm:$0x3] %vm740, %v1686
  %1690 = vrot.lane.b32.xlu0 %v1677, 112
  %v1691 = vpop.permute.xlu0 %1690
  %v1693 = vsel %vm149, %v1680, %v1691
  %v1695 = vsel %vm211, %v1693, 0
  %1697 = vmatprep.subr.mxu0 0.0
  %1698 = vmatpush1.msra.mxu0 %v584
  %1699 = vmatprep.subr.mxu0 0.0
  %1700 = vmatpush1.msra.mxu0 %v585
  %1701 = vmatprep.subr.mxu0 0.0
  %1702 = vmatpush1.msra.mxu0 %v586
  %1703 = vmatprep.subr.mxu0 0.0
  %1704 = vmatpush1.msra.mxu0 %v587
  %1705 = vmatprep.subr.mxu0 0.0
  %1706 = vmatpush1.msra.mxu0 0.0
  %1707 = vmatprep.subr.mxu0 0.0
  %1708 = vmatpush1.msra.mxu0 0.0
  %1709 = vmatprep.subr.mxu0 0.0
  %1710 = vmatpush1.msra.mxu0 0.0
  %1711 = vmatprep.subr.mxu0 0.0
  %1712 = vmatpush1.msra.mxu0 0.0
  %1713 = vmatprep.subr.mxu0 0.0
  %1714 = vmatpush1.msra.mxu0 0.0
  %1715 = vmatprep.subr.mxu0 0.0
  %1716 = vmatpush1.msra.mxu0 0.0
  %1717 = vmatprep.subr.mxu0 0.0
  %1718 = vmatpush1.msra.mxu0 0.0
  %1719 = vmatprep.subr.mxu0 0.0
  %1720 = vmatpush1.msra.mxu0 0.0
  %1721 = vmatprep.subr.mxu0 0.0
  %1722 = vmatpush1.msra.mxu0 0.0
  %1723 = vmatprep.subr.mxu0 0.0
  %1724 = vmatpush1.msra.mxu0 0.0
  %1725 = vmatprep.subr.mxu0 0.0
  %1726 = vmatpush1.msra.mxu0 0.0
  %1727 = vmatprep.subr.mxu0 0.0
  %1728 = vmatpush1.msra.mxu0 0.0
  %1729 = vmatprep.subr.mxu0 0.0
  %1730 = vmatpush1.msra.mxu0 0.0
  %1731 = vmatprep.subr.mxu0 0.0
  %1732 = vmatpush1.msra.mxu0 0.0
  %1733 = vmatprep.subr.mxu0 0.0
  %1734 = vmatpush1.msra.mxu0 0.0
  %1735 = vmatprep.subr.mxu0 0.0
  %1736 = vmatpush1.msra.mxu0 0.0
  %1737 = vmatprep.subr.mxu0 0.0
  %1738 = vmatpush1.msra.mxu0 0.0
  %1739 = vmatprep.subr.mxu0 0.0
  %1740 = vmatpush1.msra.mxu0 0.0
  %1741 = vmatprep.subr.mxu0 0.0
  %1742 = vmatpush1.msra.mxu0 0.0
  %1743 = vmatprep.subr.mxu0 0.0
  %1744 = vmatpush1.msra.mxu0 0.0
  %1745 = vmatprep.subr.mxu0 0.0
  %1746 = vmatpush1.msra.mxu0 0.0
  %1747 = vmatprep.subr.mxu0 0.0
  %1748 = vmatpush1.msra.mxu0 0.0
  %1749 = vmatprep.subr.mxu0 0.0
  %1750 = vmatpush1.msra.mxu0 0.0
  %1751 = vmatprep.subr.mxu0 0.0
  %1752 = vmatpush1.msra.mxu0 0.0
  %1753 = vmatprep.subr.mxu0 0.0
  %1754 = vmatpush1.msra.mxu0 0.0
  %1755 = vmatprep.subr.mxu0 0.0
  %1756 = vmatpush1.msra.mxu0 0.0
  %1757 = vmatprep.subr.mxu0 0.0
  %1758 = vmatpush1.msra.mxu0 0.0
  %1759 = vmatprep.subr.mxu0 0.0
  %1760 = vmatpush1.msra.mxu0 0.0
  %1761 = vmatprep.mubr.f32.mxu0 0.0
  %1762 = vmatmul.mubr.f32.gmra.mrb[0].mxu0 %v1695
  %v1763 = vpop.f32.mrb[0].mxu0
  %v1764 = vadd.f32 %v594, %v1763
  %v1765 = vpop.f32.mrb[0].mxu0
  %1766 = vdwg.mxu0
  %s1767 = scalar_lea.vmem [#allocation3], 14
  %v1768 = vld [vmem:[%s1767] sm:$0x3]
  %v1769 = vadd.f32 %v1768, %v1764
  %v1770 = vxor.u32 %v1769, 2147483648
  %v1771 = vmul.f32 %v1770, 1.442695
  %v1772 = vpow.pop %v1771
  %v1773 = vadd.f32 %v1772, 1.0
  %v1774 = vrcp.pop %v1773
  %v1775 = vmul.f32 1.0, %v1774
  %1777 = vrot.lane.b32.xlu0 %v1764, 96
  %v1778 = vpop.permute.xlu0 %1777
  %v1780 = vmul.f32 %v1775, %v1778
  %1782 = vrot.lane.b32.xlu0 %v1780, 32
  %v1783 = vpop.permute.xlu0 %1782
  %v1785 = vadd.f32 %v1768, %v1783
  %v1786 = vtanh.pop %v1785
  %1788 = vrot.lane.b32.xlu0 %v1786, 96
  %v1789 = vpop.permute.xlu0 %1788
  %v1791 = vsub.f32 %v1693, %v1789
  %1793 = vrot.lane.b32.xlu0 %v1791, 16
  %v1794 = vpop.permute.xlu0 %1793
  %v1796 = vmul.f32 %v1775, %v1794
  %1798 = vrot.lane.b32.xlu0 %v1796, 16
  %v1799 = vpop.permute.xlu0 %1798
  %v1801 = vadd.f32 %v1786, %v1799
  %v1802 = vld [vmem:[#allocation4] sm:$0x3]
  %1803 = vrot.lane.b32.xlu0 %v1764, 80
  %v1804 = vpop.permute.xlu0 %1803
  %v1806 = vadd.f32 %v1802, %v1804
  %v1807 = vxor.u32 %v1806, 2147483648
  %v1808 = vmul.f32 %v1807, 1.442695
  %v1809 = vpow.pop %v1808
  %v1810 = vadd.f32 %v1809, 1.0
  %v1811 = vrcp.pop %v1810
  %v1812 = vmul.f32 1.0, %v1811
  %1813 = vrot.lane.b32.xlu0 %v1764, 48
  %v1814 = vpop.permute.xlu0 %1813
  %v1816 = vmul.f32 %v1812, %v1814
  %1818 = vrot.lane.b32.xlu0 %v1816, 32
  %v1819 = vpop.permute.xlu0 %1818
  %v1821 = vadd.f32 %v1802, %v1819
  %v1822 = vtanh.pop %v1821
  %1824 = vrot.lane.b32.xlu0 %v1822, 112
  %v1825 = vpop.permute.xlu0 %1824
  %v1827 = vsub.f32 %v1693, %v1825
  %v1828 = vmul.f32 %v1812, %v1827
  %1830 = vrot.lane.b32.xlu0 %v1828, 16
  %v1831 = vpop.permute.xlu0 %1830
  %v1833 = vadd.f32 %v1822, %v1831
  %1835 = vrot.lane.b32.xlu0 %v1801, 96
  %v1836 = vpop.permute.xlu0 %1835
  %s1838 = scalar_lea.vmem %s10, 14
  %1839 = vst.msk [vmem:[%s1838] sm:$0x3] %vm740, %v1836
  %1841 = vrot.lane.b32.xlu0 %v1833, 96
  %v1842 = vpop.permute.xlu0 %1841
  %1844 = vst.msk [vmem:[%s92] sm:$0x3] %vm740, %v1842
  %1845 = vrot.lane.b32.xlu0 %v1833, 112
  %v1846 = vpop.permute.xlu0 %1845
  %v1848 = vsel %vm149, %v1836, %v1846
  %vm1849 = vcmask 254976
  %1850 = vst.msk [vmem:[#allocation2] sm:$0x3] %vm1849, %v1848
  %s1851 = ssub.s32 0, 0
  %s1852 = smul.u32 8, %s1851
  %p1853 = scmp.lt.s32.totalorder %s1852, 7
  %s1854 = scalar_select %p1853, %s1852, 7
  %s1855 = smul.addr %s1854, 2
  %s1856 = scalar_lea.vmem %s11, %s1855
  // Predicated region
  $region46: #{generic_rnn_forward.3} parent=0 // pred_check
    _
  $region47: #{generic_rnn_forward.3} parent=0 // pred_check_branch
    %1858 = sbr.rel (0) target = $region49
  $region48: #{generic_rnn_forward.3} parent=0 // pred_region
    _
  $region49: #{generic_rnn_forward.3} parent=0 // pred_fallthru
    _
  // Predicated region
  $region50: #{generic_rnn_forward.3} parent=0 // pred_check
    _
  $region51: #{generic_rnn_forward.3} parent=0 // pred_check_branch
    %1860 = sbr.rel (0) target = $region53
  $region52: #{generic_rnn_forward.3} parent=0 // pred_region
    %s1861 = ssub.s32 0, 0
    %s1862 = smul.u32 8, %s1861
  $region53: #{generic_rnn_forward.3} parent=0 // pred_fallthru
    _
  // Predicated region
  $region54: #{generic_rnn_forward.3} parent=0 // pred_check
    _
  $region55: #{generic_rnn_forward.3} parent=0 // pred_check_branch
    %1864 = sbr.rel (0) target = $region57
  $region56: #{generic_rnn_forward.3} parent=0 // pred_region
    _
  $region57: #{generic_rnn_forward.3} parent=0 // pred_fallthru
    _
  // Predicated region
  $region58: #{generic_rnn_forward.3} parent=0 // pred_check
    _
  $region59: #{generic_rnn_forward.3} parent=0 // pred_check_branch
    %1866 = sbr.rel (0) target = $region61
  $region60: #{generic_rnn_forward.3} parent=0 // pred_region
    %s1867 = ssub.s32 0, 0
    %s1868 = smul.u32 8, %s1867
    %p1869 = scmp.lt.s32.totalorder %s1868, 7
    %s1870 = scalar_select %p1869, %s1868, 7
    %s1871 = smul.addr %s1870, 2
    %s1872 = scalar_lea.vmem %s11, %s1871
  $region61: #{generic_rnn_forward.3} parent=0 // pred_fallthru
    _

// kernel: generic_rnn_forward.2
$region0: #{generic_rnn_forward.2}
  #allocation0 [shape = 'u32[]', space=smem, size = 0x4, offset = 0x4, fixed_abs, tag = 'smem constant byte address 0x4 - core index']
  #allocation1 [shape = 'u32[144,128]{1,0:T(1,128)}', space=vmem, size = 0x12000, scoped, tag = 'internal scratch']
  #allocation2 [shape = 'f32[2,32]{1,0:T(2,128)}', space=vmem, size = 0x400, scoped, tag = 'scratch operand']
  #allocation3 [shape = 'f32[8,2,48]{2,1,0:T(2,128)}', space=vmem, size = 0x2000, scoped, tag = 'scratch operand']
  #allocation4 [shape = 'f32[8,2,48]{2,1,0:T(2,128)}', space=vmem, size = 0x2000, scoped, tag = 'scratch operand']
  %s0 = inlined_call_operand.vmem [shape: f32[8,2,4], index: 0, kind: input, shape index: {}, may-alias: {0,1}]
  %s1 = inlined_call_operand.vmem [shape: f32[8,2,4], index: 1, kind: input, shape index: {}, may-alias: {0,1}]
  %s2 = inlined_call_operand.vmem [shape: f32[4,48], index: 2, kind: input, shape index: {}]
  %s3 = inlined_call_operand.vmem [shape: f32[4,48], index: 3, kind: input, shape index: {}]
  %s4 = inlined_call_operand.vmem [shape: f32[1,48], index: 4, kind: input, shape index: {}]
  %s5 = inlined_call_operand.vmem [shape: f32[1,48], index: 5, kind: input, shape index: {}]
  %s6 = inlined_call_operand.vmem [shape: f32[32,96], index: 6, kind: input, shape index: {}]
  %s7 = inlined_call_operand.vmem [shape: f32[1,96], index: 7, kind: input, shape index: {}]
  %s8 = inlined_call_operand.vmem [shape: f32[8,2,16], index: 8, kind: output, shape index: {0}]
  %s9 = inlined_call_operand.vmem [shape: f32[8,2,16], index: 9, kind: output, shape index: {1}]
  %10 = xla_tuple %s8, %s9
  %s11 = sld [smem:[#allocation0]]
  $region54: #{generic_rnn_forward.2} parent=0
    _
  %s13 = ssub.s32 1, %s11
  %s14 = scalar_select 0, %s13, %s11
  // Predicated region
  $region2: #{generic_rnn_forward.2} parent=0 // pred_check
    _
  $region3: #{generic_rnn_forward.2} parent=0 // pred_check_branch
    %16 = sbr.rel (0) target = $region5
  $region4: #{generic_rnn_forward.2} parent=0 // pred_region
    _
  $region5: #{generic_rnn_forward.2} parent=0 // pred_fallthru
    _
  // Predicated region
  $region6: #{generic_rnn_forward.2} parent=0 // pred_check
    _
  $region7: #{generic_rnn_forward.2} parent=0 // pred_check_branch
    %18 = sbr.rel (0) target = $region9
  $region8: #{generic_rnn_forward.2} parent=0 // pred_region
    %s19 = ssub.s32 0, 0
    %s20 = smul.u32 8, %s19
    %p21 = scmp.lt.s32.totalorder %s20, 7
    %s22 = scalar_select %p21, %s20, 7
    %s23 = smul.addr %s22, 2
    %s24 = scalar_lea.vmem %s1, %s23
    %s25 = ssub.s32 0, 0
    %s26 = smul.u32 8, %s25
  $region9: #{generic_rnn_forward.2} parent=0 // pred_fallthru
    _
  // Predicated region
  $region10: #{generic_rnn_forward.2} parent=0 // pred_check
    _
  $region11: #{generic_rnn_forward.2} parent=0 // pred_check_branch
    %28 = sbr.rel (0) target = $region13
  $region12: #{generic_rnn_forward.2} parent=0 // pred_region
    _
  $region13: #{generic_rnn_forward.2} parent=0 // pred_fallthru
    _
  // Predicated region
  $region14: #{generic_rnn_forward.2} parent=0 // pred_check
    _
  $region15: #{generic_rnn_forward.2} parent=0 // pred_check_branch
    %30 = sbr.rel (0) target = $region17
  $region16: #{generic_rnn_forward.2} parent=0 // pred_region
    _
  $region17: #{generic_rnn_forward.2} parent=0 // pred_fallthru
    _
  // Predicated region
  $region18: #{generic_rnn_forward.2} parent=0 // pred_check
    _
  $region19: #{generic_rnn_forward.2} parent=0 // pred_check_branch
    %32 = sbr.rel (0) target = $region21
  $region20: #{generic_rnn_forward.2} parent=0 // pred_region
    _
  $region21: #{generic_rnn_forward.2} parent=0 // pred_fallthru
    _
  // Predicated region
  $region22: #{generic_rnn_forward.2} parent=0 // pred_check
    _
  $region23: #{generic_rnn_forward.2} parent=0 // pred_check_branch
    %34 = sbr.rel (0) target = $region25
  $region24: #{generic_rnn_forward.2} parent=0 // pred_region
    _
  $region25: #{generic_rnn_forward.2} parent=0 // pred_fallthru
    _
  // Predicated region
  $region26: #{generic_rnn_forward.2} parent=0 // pred_check
    _
  $region27: #{generic_rnn_forward.2} parent=0 // pred_check_branch
    %36 = sbr.rel (0) target = $region29
  $region28: #{generic_rnn_forward.2} parent=0 // pred_region
    _
  $region29: #{generic_rnn_forward.2} parent=0 // pred_fallthru
    _
  // Predicated region
  $region30: #{generic_rnn_forward.2} parent=0 // pred_check
    _
  $region31: #{generic_rnn_forward.2} parent=0 // pred_check_branch
    %38 = sbr.rel (0) target = $region33
  $region32: #{generic_rnn_forward.2} parent=0 // pred_region
    _
  $region33: #{generic_rnn_forward.2} parent=0 // pred_fallthru
    _
  %s39 = ssub.s32 0, 0
  %s40 = smul.u32 8, %s39
  %p41 = scmp.lt.s32.totalorder %s40, 7
  %s42 = scalar_select %p41, %s40, 7
  %s43 = smul.addr %s42, 2
  %s44 = scalar_lea.vmem %s1, %s43
  %s45 = ssub.s32 0, 0
  %s46 = smul.u32 8, %s45
  %p47 = scmp.lt.s32.totalorder %s46, 7
  %s48 = scalar_select %p47, %s46, 7
  %s49 = smul.addr %s48, 2
  %s50 = scalar_lea.vmem %s9, %s49
  %s51 = ssub.s32 0, 0
  %s52 = smul.u32 8, %s51
  %p53 = scmp.lt.s32.totalorder %s52, 7
  %s54 = scalar_select %p53, %s52, 7
  %s55 = smul.addr %s54, 2
  %s56 = scalar_lea.vmem %s1, %s55
  %s57 = ssub.s32 0, 0
  %s58 = smul.u32 8, %s57
  %s59 = ssub.s32 0, 0
  %s60 = smul.u32 8, %s59
  %p61 = scmp.lt.s32.totalorder %s60, 7
  %s62 = scalar_select %p61, %s60, 7
  %s63 = smul.addr %s62, 2
  %s64 = scalar_lea.vmem %s9, %s63
  %s65 = ssub.s32 0, 0
  %s66 = smul.u32 8, %s65
  %p67 = scmp.eq.s32.totalorder 0, 0
  // Predicated region
  $region34: #{generic_rnn_forward.2} parent=0 // pred_check
    %p68 = pneg %p67
  $region35: #{generic_rnn_forward.2} parent=0 // pred_check_branch
    %70 = sbr.rel (%p68) target = $region37
  $region36: #{generic_rnn_forward.2} parent=0 // pred_region
    %vm71 = vcmask 254976
    %72 = vst.msk [vmem:[#allocation2] sm:$0x3] %vm71, 0.0
  $region37: #{generic_rnn_forward.2} parent=0 // pred_fallthru
    _
  %v73 = vld [vmem:[%s0] sm:$0x3]
  %v74 = vld [vmem:[%s0 + $0x2] sm:$0x3]
  %v75 = vld [vmem:[%s0 + $0x4] sm:$0x3]
  %v76 = vld [vmem:[%s0 + $0x6] sm:$0x3]
  %v77 = vld [vmem:[%s0 + $0x8] sm:$0x3]
  %v78 = vld [vmem:[%s0 + $0xa] sm:$0x3]
  %v79 = vld [vmem:[%s0 + $0xc] sm:$0x3]
  %v80 = vld [vmem:[%s0 + $0xe] sm:$0x3]
  %v81 = vld [vmem:[%s2] sm:$0xf]
  %v82 = vld [vmem:[%s4] sm:$0x1]
  %v84 = vlaneseq
  %v85 = vshrl.u32 %v84, 7
  %v86 = vsub.s32 0, %v85
  %v87 = vrot.slane %v82, %v86
  %v97 = vcombine.low %v73, %v74
  %v98 = vcombine.low %v75, %v76
  %v100 = vunpack.c.l.s4 1983009808
  %v101 = vunpack.c.0.s8 %v100
  %v102 = vlaneseq
  %v103 = vshrl.u32 %v102, 7
  %v104 = vsub.s32 %v101, %v103
  %v105 = vrot.slane %v97, %v104
  %v107 = vunpack.c.l.s4 1983009808
  %v108 = vunpack.c.0.s8 %v107
  %v109 = vlaneseq
  %v110 = vshrl.u32 %v109, 7
  %v111 = vsub.s32 %v108, %v110
  %v112 = vrot.slane %v98, %v111
  %v113 = vcombine.low %v105, %v112
  %v114 = vcombine.low %v77, %v78
  %v115 = vcombine.low %v79, %v80
  %v117 = vunpack.c.l.s4 1983009808
  %v118 = vunpack.c.0.s8 %v117
  %v119 = vlaneseq
  %v120 = vshrl.u32 %v119, 7
  %v121 = vsub.s32 %v118, %v120
  %v122 = vrot.slane %v114, %v121
  %v124 = vunpack.c.l.s4 1983009808
  %v125 = vunpack.c.0.s8 %v124
  %v126 = vlaneseq
  %v127 = vshrl.u32 %v126, 7
  %v128 = vsub.s32 %v125, %v127
  %v129 = vrot.slane %v115, %v128
  %v130 = vcombine.low %v122, %v129
  %vm131 = vcmask 31744
  %v132 = vsel %vm131, %v113, 0
  %v134 = vsel %vm131, %v130, 0
  %vm136 = vcmask 1043456
  %v138 = vsel %vm136, %v81, 0
  %140 = vmatprep.subr.mxu0 0.0
  %141 = vmatpush1.msra.mxu0 %v138
  %142 = vmatprep.subr.mxu0 0.0
  %143 = vmatpush1.msra.mxu0 0.0
  %144 = vmatprep.subr.mxu0 0.0
  %145 = vmatpush1.msra.mxu0 0.0
  %146 = vmatprep.subr.mxu0 0.0
  %147 = vmatpush1.msra.mxu0 0.0
  %148 = vmatprep.subr.mxu0 0.0
  %149 = vmatpush1.msra.mxu0 0.0
  %150 = vmatprep.subr.mxu0 0.0
  %151 = vmatpush1.msra.mxu0 0.0
  %152 = vmatprep.subr.mxu0 0.0
  %153 = vmatpush1.msra.mxu0 0.0
  %154 = vmatprep.subr.mxu0 0.0
  %155 = vmatpush1.msra.mxu0 0.0
  %156 = vmatprep.subr.mxu0 0.0
  %157 = vmatpush1.msra.mxu0 0.0
  %158 = vmatprep.subr.mxu0 0.0
  %159 = vmatpush1.msra.mxu0 0.0
  %160 = vmatprep.subr.mxu0 0.0
  %161 = vmatpush1.msra.mxu0 0.0
  %162 = vmatprep.subr.mxu0 0.0
  %163 = vmatpush1.msra.mxu0 0.0
  %164 = vmatprep.subr.mxu0 0.0
  %165 = vmatpush1.msra.mxu0 0.0
  %166 = vmatprep.subr.mxu0 0.0
  %167 = vmatpush1.msra.mxu0 0.0
  %168 = vmatprep.subr.mxu0 0.0
  %169 = vmatpush1.msra.mxu0 0.0
  %170 = vmatprep.subr.mxu0 0.0
  %171 = vmatpush1.msra.mxu0 0.0
  %172 = vmatprep.subr.mxu0 0.0
  %173 = vmatpush1.msra.mxu0 0.0
  %174 = vmatprep.subr.mxu0 0.0
  %175 = vmatpush1.msra.mxu0 0.0
  %176 = vmatprep.subr.mxu0 0.0
  %177 = vmatpush1.msra.mxu0 0.0
  %178 = vmatprep.subr.mxu0 0.0
  %179 = vmatpush1.msra.mxu0 0.0
  %180 = vmatprep.subr.mxu0 0.0
  %181 = vmatpush1.msra.mxu0 0.0
  %182 = vmatprep.subr.mxu0 0.0
  %183 = vmatpush1.msra.mxu0 0.0
  %184 = vmatprep.subr.mxu0 0.0
  %185 = vmatpush1.msra.mxu0 0.0
  %186 = vmatprep.subr.mxu0 0.0
  %187 = vmatpush1.msra.mxu0 0.0
  %188 = vmatprep.subr.mxu0 0.0
  %189 = vmatpush1.msra.mxu0 0.0
  %190 = vmatprep.subr.mxu0 0.0
  %191 = vmatpush1.msra.mxu0 0.0
  %192 = vmatprep.subr.mxu0 0.0
  %193 = vmatpush1.msra.mxu0 0.0
  %194 = vmatprep.subr.mxu0 0.0
  %195 = vmatpush1.msra.mxu0 0.0
  %196 = vmatprep.subr.mxu0 0.0
  %197 = vmatpush1.msra.mxu0 0.0
  %198 = vmatprep.subr.mxu0 0.0
  %199 = vmatpush1.msra.mxu0 0.0
  %200 = vmatprep.subr.mxu0 0.0
  %201 = vmatpush1.msra.mxu0 0.0
  %202 = vmatprep.subr.mxu0 0.0
  %203 = vmatpush1.msra.mxu0 0.0
  %204 = vmatprep.mubr.f32.mxu0 0.0
  %205 = vmatmul.mubr.f32.gmra.mrb[0].mxu0 %v132
  %v206 = vpop.f32.mrb[0].mxu0
  %v207 = vadd.f32 %v87, %v206
  %v208 = vpop.f32.mrb[0].mxu0
  %209 = vmatprep.mubr.f32.mxu0 0.0
  %210 = vmatmul.mubr.f32.gmra.mrb[0].mxu0 %v134
  %v211 = vpop.f32.mrb[0].mxu0
  %v212 = vadd.f32 %v87, %v211
  %v213 = vpop.f32.mrb[0].mxu0
  %214 = vdwg.mxu0
  %v217 = vcombine.high %v207, %v207
  %v219 = vunpack.c.l.s4 1983009808
  %v220 = vunpack.c.0.s8 %v219
  %v221 = vlaneseq
  %v222 = vshrl.u32 %v221, 7
  %v223 = vsub.s32 %v220, %v222
  %v224 = vrot.slane %v207, %v223
  %v226 = vunpack.c.l.s4 1983009808
  %v227 = vunpack.c.0.s8 %v226
  %v228 = vlaneseq
  %v229 = vshrl.u32 %v228, 7
  %v230 = vsub.s32 %v227, %v229
  %v231 = vrot.slane %v217, %v230
  %v232 = vcombine.high %v224, %v224
  %v233 = vcombine.high %v231, %v231
  %v234 = vcombine.high %v212, %v212
  %v236 = vunpack.c.l.s4 1983009808
  %v237 = vunpack.c.0.s8 %v236
  %v238 = vlaneseq
  %v239 = vshrl.u32 %v238, 7
  %v240 = vsub.s32 %v237, %v239
  %v241 = vrot.slane %v212, %v240
  %v243 = vunpack.c.l.s4 1983009808
  %v244 = vunpack.c.0.s8 %v243
  %v245 = vlaneseq
  %v246 = vshrl.u32 %v245, 7
  %v247 = vsub.s32 %v244, %v246
  %v248 = vrot.slane %v234, %v247
  %v249 = vcombine.high %v241, %v241
  %v250 = vcombine.high %v248, %v248
  %vm259 = vcmask 386048
  %260 = vst.msk [vmem:[#allocation3] sm:$0x3] %vm259, %v224
  %261 = vst.msk [vmem:[#allocation3 + $0x2] sm:$0x3] %vm259, %v232
  %262 = vst.msk [vmem:[#allocation3 + $0x4] sm:$0x3] %vm259, %v231
  %263 = vst.msk [vmem:[#allocation3 + $0x6] sm:$0x3] %vm259, %v233
  %264 = vst.msk [vmem:[#allocation3 + $0x8] sm:$0x3] %vm259, %v241
  %265 = vst.msk [vmem:[#allocation3 + $0xa] sm:$0x3] %vm259, %v249
  %266 = vst.msk [vmem:[#allocation3 + $0xc] sm:$0x3] %vm259, %v248
  %267 = vst.msk [vmem:[#allocation3 + $0xe] sm:$0x3] %vm259, %v250
  %v268 = vld [vmem:[%s56] sm:$0x3]
  %v269 = vld [vmem:[%s56 + $0x2] sm:$0x3]
  %v270 = vld [vmem:[%s56 + $0x4] sm:$0x3]
  %v271 = vld [vmem:[%s56 + $0x6] sm:$0x3]
  %v272 = vld [vmem:[%s56 + $0x8] sm:$0x3]
  %v273 = vld [vmem:[%s56 + $0xa] sm:$0x3]
  %v274 = vld [vmem:[%s56 + $0xc] sm:$0x3]
  %v275 = vld [vmem:[%s56 + $0xe] sm:$0x3]
  %v276 = vld [vmem:[%s3] sm:$0xf]
  %v277 = vld [vmem:[%s5] sm:$0x1]
  %v279 = vlaneseq
  %v280 = vshrl.u32 %v279, 7
  %v281 = vsub.s32 0, %v280
  %v282 = vrot.slane %v277, %v281
  %v292 = vcombine.low %v268, %v269
  %v293 = vcombine.low %v270, %v271
  %v295 = vunpack.c.l.s4 1983009808
  %v296 = vunpack.c.0.s8 %v295
  %v297 = vlaneseq
  %v298 = vshrl.u32 %v297, 7
  %v299 = vsub.s32 %v296, %v298
  %v300 = vrot.slane %v292, %v299
  %v302 = vunpack.c.l.s4 1983009808
  %v303 = vunpack.c.0.s8 %v302
  %v304 = vlaneseq
  %v305 = vshrl.u32 %v304, 7
  %v306 = vsub.s32 %v303, %v305
  %v307 = vrot.slane %v293, %v306
  %v308 = vcombine.low %v300, %v307
  %v309 = vcombine.low %v272, %v273
  %v310 = vcombine.low %v274, %v275
  %v312 = vunpack.c.l.s4 1983009808
  %v313 = vunpack.c.0.s8 %v312
  %v314 = vlaneseq
  %v315 = vshrl.u32 %v314, 7
  %v316 = vsub.s32 %v313, %v315
  %v317 = vrot.slane %v309, %v316
  %v319 = vunpack.c.l.s4 1983009808
  %v320 = vunpack.c.0.s8 %v319
  %v321 = vlaneseq
  %v322 = vshrl.u32 %v321, 7
  %v323 = vsub.s32 %v320, %v322
  %v324 = vrot.slane %v310, %v323
  %v325 = vcombine.low %v317, %v324
  %v326 = vsel %vm131, %v308, 0
  %v328 = vsel %vm131, %v325, 0
  %v331 = vsel %vm136, %v276, 0
  %333 = vmatprep.subr.mxu0 0.0
  %334 = vmatpush1.msra.mxu0 %v331
  %335 = vmatprep.subr.mxu0 0.0
  %336 = vmatpush1.msra.mxu0 0.0
  %337 = vmatprep.subr.mxu0 0.0
  %338 = vmatpush1.msra.mxu0 0.0
  %339 = vmatprep.subr.mxu0 0.0
  %340 = vmatpush1.msra.mxu0 0.0
  %341 = vmatprep.subr.mxu0 0.0
  %342 = vmatpush1.msra.mxu0 0.0
  %343 = vmatprep.subr.mxu0 0.0
  %344 = vmatpush1.msra.mxu0 0.0
  %345 = vmatprep.subr.mxu0 0.0
  %346 = vmatpush1.msra.mxu0 0.0
  %347 = vmatprep.subr.mxu0 0.0
  %348 = vmatpush1.msra.mxu0 0.0
  %349 = vmatprep.subr.mxu0 0.0
  %350 = vmatpush1.msra.mxu0 0.0
  %351 = vmatprep.subr.mxu0 0.0
  %352 = vmatpush1.msra.mxu0 0.0
  %353 = vmatprep.subr.mxu0 0.0
  %354 = vmatpush1.msra.mxu0 0.0
  %355 = vmatprep.subr.mxu0 0.0
  %356 = vmatpush1.msra.mxu0 0.0
  %357 = vmatprep.subr.mxu0 0.0
  %358 = vmatpush1.msra.mxu0 0.0
  %359 = vmatprep.subr.mxu0 0.0
  %360 = vmatpush1.msra.mxu0 0.0
  %361 = vmatprep.subr.mxu0 0.0
  %362 = vmatpush1.msra.mxu0 0.0
  %363 = vmatprep.subr.mxu0 0.0
  %364 = vmatpush1.msra.mxu0 0.0
  %365 = vmatprep.subr.mxu0 0.0
  %366 = vmatpush1.msra.mxu0 0.0
  %367 = vmatprep.subr.mxu0 0.0
  %368 = vmatpush1.msra.mxu0 0.0
  %369 = vmatprep.subr.mxu0 0.0
  %370 = vmatpush1.msra.mxu0 0.0
  %371 = vmatprep.subr.mxu0 0.0
  %372 = vmatpush1.msra.mxu0 0.0
  %373 = vmatprep.subr.mxu0 0.0
  %374 = vmatpush1.msra.mxu0 0.0
  %375 = vmatprep.subr.mxu0 0.0
  %376 = vmatpush1.msra.mxu0 0.0
  %377 = vmatprep.subr.mxu0 0.0
  %378 = vmatpush1.msra.mxu0 0.0
  %379 = vmatprep.subr.mxu0 0.0
  %380 = vmatpush1.msra.mxu0 0.0
  %381 = vmatprep.subr.mxu0 0.0
  %382 = vmatpush1.msra.mxu0 0.0
  %383 = vmatprep.subr.mxu0 0.0
  %384 = vmatpush1.msra.mxu0 0.0
  %385 = vmatprep.subr.mxu0 0.0
  %386 = vmatpush1.msra.mxu0 0.0
  %387 = vmatprep.subr.mxu0 0.0
  %388 = vmatpush1.msra.mxu0 0.0
  %389 = vmatprep.subr.mxu0 0.0
  %390 = vmatpush1.msra.mxu0 0.0
  %391 = vmatprep.subr.mxu0 0.0
  %392 = vmatpush1.msra.mxu0 0.0
  %393 = vmatprep.subr.mxu0 0.0
  %394 = vmatpush1.msra.mxu0 0.0
  %395 = vmatprep.subr.mxu0 0.0
  %396 = vmatpush1.msra.mxu0 0.0
  %397 = vmatprep.mubr.f32.mxu0 0.0
  %398 = vmatmul.mubr.f32.gmra.mrb[0].mxu0 %v326
  %v399 = vpop.f32.mrb[0].mxu0
  %v400 = vadd.f32 %v282, %v399
  %v401 = vpop.f32.mrb[0].mxu0
  %402 = vmatprep.mubr.f32.mxu0 0.0
  %403 = vmatmul.mubr.f32.gmra.mrb[0].mxu0 %v328
  %v404 = vpop.f32.mrb[0].mxu0
  %v405 = vadd.f32 %v282, %v404
  %v406 = vpop.f32.mrb[0].mxu0
  %407 = vdwg.mxu0
  %v410 = vcombine.high %v400, %v400
  %v412 = vunpack.c.l.s4 1983009808
  %v413 = vunpack.c.0.s8 %v412
  %v414 = vlaneseq
  %v415 = vshrl.u32 %v414, 7
  %v416 = vsub.s32 %v413, %v415
  %v417 = vrot.slane %v400, %v416
  %v419 = vunpack.c.l.s4 1983009808
  %v420 = vunpack.c.0.s8 %v419
  %v421 = vlaneseq
  %v422 = vshrl.u32 %v421, 7
  %v423 = vsub.s32 %v420, %v422
  %v424 = vrot.slane %v410, %v423
  %v425 = vcombine.high %v417, %v417
  %v426 = vcombine.high %v424, %v424
  %v427 = vcombine.high %v405, %v405
  %v429 = vunpack.c.l.s4 1983009808
  %v430 = vunpack.c.0.s8 %v429
  %v431 = vlaneseq
  %v432 = vshrl.u32 %v431, 7
  %v433 = vsub.s32 %v430, %v432
  %v434 = vrot.slane %v405, %v433
  %v436 = vunpack.c.l.s4 1983009808
  %v437 = vunpack.c.0.s8 %v436
  %v438 = vlaneseq
  %v439 = vshrl.u32 %v438, 7
  %v440 = vsub.s32 %v437, %v439
  %v441 = vrot.slane %v427, %v440
  %v442 = vcombine.high %v434, %v434
  %v443 = vcombine.high %v441, %v441
  %452 = vst.msk [vmem:[#allocation4] sm:$0x3] %vm259, %v417
  %453 = vst.msk [vmem:[#allocation4 + $0x2] sm:$0x3] %vm259, %v425
  %454 = vst.msk [vmem:[#allocation4 + $0x4] sm:$0x3] %vm259, %v424
  %455 = vst.msk [vmem:[#allocation4 + $0x6] sm:$0x3] %vm259, %v426
  %456 = vst.msk [vmem:[#allocation4 + $0x8] sm:$0x3] %vm259, %v434
  %457 = vst.msk [vmem:[#allocation4 + $0xa] sm:$0x3] %vm259, %v442
  %458 = vst.msk [vmem:[#allocation4 + $0xc] sm:$0x3] %vm259, %v441
  %459 = vst.msk [vmem:[#allocation4 + $0xe] sm:$0x3] %vm259, %v443
  %v460 = vld [vmem:[%s6] sm:$0xff]
  %v461 = vld [vmem:[%s6 + $0x8] sm:$0xff]
  %v462 = vld [vmem:[%s6 + $0x10] sm:$0xff]
  %v463 = vld [vmem:[%s6 + $0x18] sm:$0xff]
  %v464 = vld [vmem:[%s7] sm:$0x1]
  %v465 = vld [vmem:[#allocation2] sm:$0x3]
  %v467 = vlaneseq
  %v468 = vshrl.u32 %v467, 7
  %v469 = vsub.s32 0, %v468
  %v470 = vrot.slane %v464, %v469
  %vm472 = vcmask 261120
  %v474 = vsel %vm472, %v465, 0
  %476 = vmatprep.subr.mxu0 0.0
  %477 = vmatpush1.msra.mxu0 %v460
  %478 = vmatprep.subr.mxu0 0.0
  %479 = vmatpush1.msra.mxu0 %v461
  %480 = vmatprep.subr.mxu0 0.0
  %481 = vmatpush1.msra.mxu0 %v462
  %482 = vmatprep.subr.mxu0 0.0
  %483 = vmatpush1.msra.mxu0 %v463
  %484 = vmatprep.subr.mxu0 0.0
  %485 = vmatpush1.msra.mxu0 0.0
  %486 = vmatprep.subr.mxu0 0.0
  %487 = vmatpush1.msra.mxu0 0.0
  %488 = vmatprep.subr.mxu0 0.0
  %489 = vmatpush1.msra.mxu0 0.0
  %490 = vmatprep.subr.mxu0 0.0
  %491 = vmatpush1.msra.mxu0 0.0
  %492 = vmatprep.subr.mxu0 0.0
  %493 = vmatpush1.msra.mxu0 0.0
  %494 = vmatprep.subr.mxu0 0.0
  %495 = vmatpush1.msra.mxu0 0.0
  %496 = vmatprep.subr.mxu0 0.0
  %497 = vmatpush1.msra.mxu0 0.0
  %498 = vmatprep.subr.mxu0 0.0
  %499 = vmatpush1.msra.mxu0 0.0
  %500 = vmatprep.subr.mxu0 0.0
  %501 = vmatpush1.msra.mxu0 0.0
  %502 = vmatprep.subr.mxu0 0.0
  %503 = vmatpush1.msra.mxu0 0.0
  %504 = vmatprep.subr.mxu0 0.0
  %505 = vmatpush1.msra.mxu0 0.0
  %506 = vmatprep.subr.mxu0 0.0
  %507 = vmatpush1.msra.mxu0 0.0
  %508 = vmatprep.subr.mxu0 0.0
  %509 = vmatpush1.msra.mxu0 0.0
  %510 = vmatprep.subr.mxu0 0.0
  %511 = vmatpush1.msra.mxu0 0.0
  %512 = vmatprep.subr.mxu0 0.0
  %513 = vmatpush1.msra.mxu0 0.0
  %514 = vmatprep.subr.mxu0 0.0
  %515 = vmatpush1.msra.mxu0 0.0
  %516 = vmatprep.subr.mxu0 0.0
  %517 = vmatpush1.msra.mxu0 0.0
  %518 = vmatprep.subr.mxu0 0.0
  %519 = vmatpush1.msra.mxu0 0.0
  %520 = vmatprep.subr.mxu0 0.0
  %521 = vmatpush1.msra.mxu0 0.0
  %522 = vmatprep.subr.mxu0 0.0
  %523 = vmatpush1.msra.mxu0 0.0
  %524 = vmatprep.subr.mxu0 0.0
  %525 = vmatpush1.msra.mxu0 0.0
  %526 = vmatprep.subr.mxu0 0.0
  %527 = vmatpush1.msra.mxu0 0.0
  %528 = vmatprep.subr.mxu0 0.0
  %529 = vmatpush1.msra.mxu0 0.0
  %530 = vmatprep.subr.mxu0 0.0
  %531 = vmatpush1.msra.mxu0 0.0
  %532 = vmatprep.subr.mxu0 0.0
  %533 = vmatpush1.msra.mxu0 0.0
  %534 = vmatprep.subr.mxu0 0.0
  %535 = vmatpush1.msra.mxu0 0.0
  %536 = vmatprep.subr.mxu0 0.0
  %537 = vmatpush1.msra.mxu0 0.0
  %538 = vmatprep.subr.mxu0 0.0
  %539 = vmatpush1.msra.mxu0 0.0
  %540 = vmatprep.mubr.f32.mxu0 0.0
  %541 = vmatmul.mubr.f32.gmra.mrb[0].mxu0 %v474
  %v542 = vpop.f32.mrb[0].mxu0
  %v543 = vadd.f32 %v470, %v542
  %v544 = vpop.f32.mrb[0].mxu0
  %545 = vdwg.mxu0
  %v546 = vld [vmem:[#allocation3] sm:$0x3]
  %v547 = vadd.f32 %v546, %v543
  %v548 = vxor.u32 %v547, 2147483648
  %v549 = vmul.f32 %v548, 1.442695
  %v550 = vpow.pop %v549
  %v551 = vadd.f32 %v550, 1.0
  %v552 = vrcp.pop %v551
  %v553 = vmul.f32 1.0, %v552
  %555 = vrot.lane.b32.xlu0 %v543, 96
  %v556 = vpop.permute.xlu0 %555
  %v558 = vmul.f32 %v553, %v556
  %560 = vrot.lane.b32.xlu0 %v558, 32
  %v561 = vpop.permute.xlu0 %560
  %v563 = vadd.f32 %v546, %v561
  %v564 = vtanh.pop %v563
  %566 = vrot.lane.b32.xlu0 %v564, 96
  %v567 = vpop.permute.xlu0 %566
  %v569 = vsub.f32 %v465, %v567
  %571 = vrot.lane.b32.xlu0 %v569, 16
  %v572 = vpop.permute.xlu0 %571
  %v574 = vmul.f32 %v553, %v572
  %576 = vrot.lane.b32.xlu0 %v574, 16
  %v577 = vpop.permute.xlu0 %576
  %v579 = vadd.f32 %v564, %v577
  %s580 = scalar_lea.vmem [#allocation4], 14
  %v581 = vld [vmem:[%s580] sm:$0x3]
  %582 = vrot.lane.b32.xlu0 %v543, 80
  %v583 = vpop.permute.xlu0 %582
  %v585 = vadd.f32 %v581, %v583
  %v586 = vxor.u32 %v585, 2147483648
  %v587 = vmul.f32 %v586, 1.442695
  %v588 = vpow.pop %v587
  %v589 = vadd.f32 %v588, 1.0
  %v590 = vrcp.pop %v589
  %v591 = vmul.f32 1.0, %v590
  %592 = vrot.lane.b32.xlu0 %v543, 48
  %v593 = vpop.permute.xlu0 %592
  %v595 = vmul.f32 %v591, %v593
  %597 = vrot.lane.b32.xlu0 %v595, 32
  %v598 = vpop.permute.xlu0 %597
  %v600 = vadd.f32 %v581, %v598
  %v601 = vtanh.pop %v600
  %603 = vrot.lane.b32.xlu0 %v601, 112
  %v604 = vpop.permute.xlu0 %603
  %v606 = vsub.f32 %v465, %v604
  %v607 = vmul.f32 %v591, %v606
  %609 = vrot.lane.b32.xlu0 %v607, 16
  %v610 = vpop.permute.xlu0 %609
  %v612 = vadd.f32 %v601, %v610
  %614 = vrot.lane.b32.xlu0 %v579, 96
  %v615 = vpop.permute.xlu0 %614
  %vm617 = vcmask 123904
  %618 = vst.msk [vmem:[%s8] sm:$0x3] %vm617, %v615
  %620 = vrot.lane.b32.xlu0 %v612, 96
  %v621 = vpop.permute.xlu0 %620
  %s623 = scalar_lea.vmem %s64, 14
  %624 = vst.msk [vmem:[%s623] sm:$0x3] %vm617, %v621
  %625 = vrot.lane.b32.xlu0 %v612, 112
  %v626 = vpop.permute.xlu0 %625
  %vm628 = vcmask 130048
  %v629 = vsel %vm628, %v615, %v626
  %v631 = vsel %vm472, %v629, 0
  %633 = vmatprep.subr.mxu0 0.0
  %634 = vmatpush1.msra.mxu0 %v460
  %635 = vmatprep.subr.mxu0 0.0
  %636 = vmatpush1.msra.mxu0 %v461
  %637 = vmatprep.subr.mxu0 0.0
  %638 = vmatpush1.msra.mxu0 %v462
  %639 = vmatprep.subr.mxu0 0.0
  %640 = vmatpush1.msra.mxu0 %v463
  %641 = vmatprep.subr.mxu0 0.0
  %642 = vmatpush1.msra.mxu0 0.0
  %643 = vmatprep.subr.mxu0 0.0
  %644 = vmatpush1.msra.mxu0 0.0
  %645 = vmatprep.subr.mxu0 0.0
  %646 = vmatpush1.msra.mxu0 0.0
  %647 = vmatprep.subr.mxu0 0.0
  %648 = vmatpush1.msra.mxu0 0.0
  %649 = vmatprep.subr.mxu0 0.0
  %650 = vmatpush1.msra.mxu0 0.0
  %651 = vmatprep.subr.mxu0 0.0
  %652 = vmatpush1.msra.mxu0 0.0
  %653 = vmatprep.subr.mxu0 0.0
  %654 = vmatpush1.msra.mxu0 0.0
  %655 = vmatprep.subr.mxu0 0.0
  %656 = vmatpush1.msra.mxu0 0.0
  %657 = vmatprep.subr.mxu0 0.0
  %658 = vmatpush1.msra.mxu0 0.0
  %659 = vmatprep.subr.mxu0 0.0
  %660 = vmatpush1.msra.mxu0 0.0
  %661 = vmatprep.subr.mxu0 0.0
  %662 = vmatpush1.msra.mxu0 0.0
  %663 = vmatprep.subr.mxu0 0.0
  %664 = vmatpush1.msra.mxu0 0.0
  %665 = vmatprep.subr.mxu0 0.0
  %666 = vmatpush1.msra.mxu0 0.0
  %667 = vmatprep.subr.mxu0 0.0
  %668 = vmatpush1.msra.mxu0 0.0
  %669 = vmatprep.subr.mxu0 0.0
  %670 = vmatpush1.msra.mxu0 0.0
  %671 = vmatprep.subr.mxu0 0.0
  %672 = vmatpush1.msra.mxu0 0.0
  %673 = vmatprep.subr.mxu0 0.0
  %674 = vmatpush1.msra.mxu0 0.0
  %675 = vmatprep.subr.mxu0 0.0
  %676 = vmatpush1.msra.mxu0 0.0
  %677 = vmatprep.subr.mxu0 0.0
  %678 = vmatpush1.msra.mxu0 0.0
  %679 = vmatprep.subr.mxu0 0.0
  %680 = vmatpush1.msra.mxu0 0.0
  %681 = vmatprep.subr.mxu0 0.0
  %682 = vmatpush1.msra.mxu0 0.0
  %683 = vmatprep.subr.mxu0 0.0
  %684 = vmatpush1.msra.mxu0 0.0
  %685 = vmatprep.subr.mxu0 0.0
  %686 = vmatpush1.msra.mxu0 0.0
  %687 = vmatprep.subr.mxu0 0.0
  %688 = vmatpush1.msra.mxu0 0.0
  %689 = vmatprep.subr.mxu0 0.0
  %690 = vmatpush1.msra.mxu0 0.0
  %691 = vmatprep.subr.mxu0 0.0
  %692 = vmatpush1.msra.mxu0 0.0
  %693 = vmatprep.subr.mxu0 0.0
  %694 = vmatpush1.msra.mxu0 0.0
  %695 = vmatprep.subr.mxu0 0.0
  %696 = vmatpush1.msra.mxu0 0.0
  %697 = vmatprep.mubr.f32.mxu0 0.0
  %698 = vmatmul.mubr.f32.gmra.mrb[0].mxu0 %v631
  %v699 = vpop.f32.mrb[0].mxu0
  %v700 = vadd.f32 %v470, %v699
  %v701 = vpop.f32.mrb[0].mxu0
  %702 = vdwg.mxu0
  %s703 = scalar_lea.vmem [#allocation3], 2
  %v704 = vld [vmem:[%s703] sm:$0x3]
  %v705 = vadd.f32 %v704, %v700
  %v706 = vxor.u32 %v705, 2147483648
  %v707 = vmul.f32 %v706, 1.442695
  %v708 = vpow.pop %v707
  %v709 = vadd.f32 %v708, 1.0
  %v710 = vrcp.pop %v709
  %v711 = vmul.f32 1.0, %v710
  %713 = vrot.lane.b32.xlu0 %v700, 96
  %v714 = vpop.permute.xlu0 %713
  %v716 = vmul.f32 %v711, %v714
  %718 = vrot.lane.b32.xlu0 %v716, 32
  %v719 = vpop.permute.xlu0 %718
  %v721 = vadd.f32 %v704, %v719
  %v722 = vtanh.pop %v721
  %724 = vrot.lane.b32.xlu0 %v722, 96
  %v725 = vpop.permute.xlu0 %724
  %v727 = vsub.f32 %v629, %v725
  %729 = vrot.lane.b32.xlu0 %v727, 16
  %v730 = vpop.permute.xlu0 %729
  %v732 = vmul.f32 %v711, %v730
  %734 = vrot.lane.b32.xlu0 %v732, 16
  %v735 = vpop.permute.xlu0 %734
  %v737 = vadd.f32 %v722, %v735
  %s738 = scalar_lea.vmem [#allocation4], 12
  %v739 = vld [vmem:[%s738] sm:$0x3]
  %740 = vrot.lane.b32.xlu0 %v700, 80
  %v741 = vpop.permute.xlu0 %740
  %v743 = vadd.f32 %v739, %v741
  %v744 = vxor.u32 %v743, 2147483648
  %v745 = vmul.f32 %v744, 1.442695
  %v746 = vpow.pop %v745
  %v747 = vadd.f32 %v746, 1.0
  %v748 = vrcp.pop %v747
  %v749 = vmul.f32 1.0, %v748
  %750 = vrot.lane.b32.xlu0 %v700, 48
  %v751 = vpop.permute.xlu0 %750
  %v753 = vmul.f32 %v749, %v751
  %755 = vrot.lane.b32.xlu0 %v753, 32
  %v756 = vpop.permute.xlu0 %755
  %v758 = vadd.f32 %v739, %v756
  %v759 = vtanh.pop %v758
  %761 = vrot.lane.b32.xlu0 %v759, 112
  %v762 = vpop.permute.xlu0 %761
  %v764 = vsub.f32 %v629, %v762
  %v765 = vmul.f32 %v749, %v764
  %767 = vrot.lane.b32.xlu0 %v765, 16
  %v768 = vpop.permute.xlu0 %767
  %v770 = vadd.f32 %v759, %v768
  %772 = vrot.lane.b32.xlu0 %v737, 96
  %v773 = vpop.permute.xlu0 %772
  %s775 = scalar_lea.vmem %s8, 2
  %776 = vst.msk [vmem:[%s775] sm:$0x3] %vm617, %v773
  %778 = vrot.lane.b32.xlu0 %v770, 96
  %v779 = vpop.permute.xlu0 %778
  %s781 = scalar_lea.vmem %s64, 12
  %782 = vst.msk [vmem:[%s781] sm:$0x3] %vm617, %v779
  %783 = vrot.lane.b32.xlu0 %v770, 112
  %v784 = vpop.permute.xlu0 %783
  %v786 = vsel %vm628, %v773, %v784
  %v788 = vsel %vm472, %v786, 0
  %790 = vmatprep.subr.mxu0 0.0
  %791 = vmatpush1.msra.mxu0 %v460
  %792 = vmatprep.subr.mxu0 0.0
  %793 = vmatpush1.msra.mxu0 %v461
  %794 = vmatprep.subr.mxu0 0.0
  %795 = vmatpush1.msra.mxu0 %v462
  %796 = vmatprep.subr.mxu0 0.0
  %797 = vmatpush1.msra.mxu0 %v463
  %798 = vmatprep.subr.mxu0 0.0
  %799 = vmatpush1.msra.mxu0 0.0
  %800 = vmatprep.subr.mxu0 0.0
  %801 = vmatpush1.msra.mxu0 0.0
  %802 = vmatprep.subr.mxu0 0.0
  %803 = vmatpush1.msra.mxu0 0.0
  %804 = vmatprep.subr.mxu0 0.0
  %805 = vmatpush1.msra.mxu0 0.0
  %806 = vmatprep.subr.mxu0 0.0
  %807 = vmatpush1.msra.mxu0 0.0
  %808 = vmatprep.subr.mxu0 0.0
  %809 = vmatpush1.msra.mxu0 0.0
  %810 = vmatprep.subr.mxu0 0.0
  %811 = vmatpush1.msra.mxu0 0.0
  %812 = vmatprep.subr.mxu0 0.0
  %813 = vmatpush1.msra.mxu0 0.0
  %814 = vmatprep.subr.mxu0 0.0
  %815 = vmatpush1.msra.mxu0 0.0
  %816 = vmatprep.subr.mxu0 0.0
  %817 = vmatpush1.msra.mxu0 0.0
  %818 = vmatprep.subr.mxu0 0.0
  %819 = vmatpush1.msra.mxu0 0.0
  %820 = vmatprep.subr.mxu0 0.0
  %821 = vmatpush1.msra.mxu0 0.0
  %822 = vmatprep.subr.mxu0 0.0
  %823 = vmatpush1.msra.mxu0 0.0
  %824 = vmatprep.subr.mxu0 0.0
  %825 = vmatpush1.msra.mxu0 0.0
  %826 = vmatprep.subr.mxu0 0.0
  %827 = vmatpush1.msra.mxu0 0.0
  %828 = vmatprep.subr.mxu0 0.0
  %829 = vmatpush1.msra.mxu0 0.0
  %830 = vmatprep.subr.mxu0 0.0
  %831 = vmatpush1.msra.mxu0 0.0
  %832 = vmatprep.subr.mxu0 0.0
  %833 = vmatpush1.msra.mxu0 0.0
  %834 = vmatprep.subr.mxu0 0.0
  %835 = vmatpush1.msra.mxu0 0.0
  %836 = vmatprep.subr.mxu0 0.0
  %837 = vmatpush1.msra.mxu0 0.0
  %838 = vmatprep.subr.mxu0 0.0
  %839 = vmatpush1.msra.mxu0 0.0
  %840 = vmatprep.subr.mxu0 0.0
  %841 = vmatpush1.msra.mxu0 0.0
  %842 = vmatprep.subr.mxu0 0.0
  %843 = vmatpush1.msra.mxu0 0.0
  %844 = vmatprep.subr.mxu0 0.0
  %845 = vmatpush1.msra.mxu0 0.0
  %846 = vmatprep.subr.mxu0 0.0
  %847 = vmatpush1.msra.mxu0 0.0
  %848 = vmatprep.subr.mxu0 0.0
  %849 = vmatpush1.msra.mxu0 0.0
  %850 = vmatprep.subr.mxu0 0.0
  %851 = vmatpush1.msra.mxu0 0.0
  %852 = vmatprep.subr.mxu0 0.0
  %853 = vmatpush1.msra.mxu0 0.0
  %854 = vmatprep.mubr.f32.mxu0 0.0
  %855 = vmatmul.mubr.f32.gmra.mrb[0].mxu0 %v788
  %v856 = vpop.f32.mrb[0].mxu0
  %v857 = vadd.f32 %v470, %v856
  %v858 = vpop.f32.mrb[0].mxu0
  %859 = vdwg.mxu0
  %s860 = scalar_lea.vmem [#allocation3], 4
  %v861 = vld [vmem:[%s860] sm:$0x3]
  %v862 = vadd.f32 %v861, %v857
  %v863 = vxor.u32 %v862, 2147483648
  %v864 = vmul.f32 %v863, 1.442695
  %v865 = vpow.pop %v864
  %v866 = vadd.f32 %v865, 1.0
  %v867 = vrcp.pop %v866
  %v868 = vmul.f32 1.0, %v867
  %870 = vrot.lane.b32.xlu0 %v857, 96
  %v871 = vpop.permute.xlu0 %870
  %v873 = vmul.f32 %v868, %v871
  %875 = vrot.lane.b32.xlu0 %v873, 32
  %v876 = vpop.permute.xlu0 %875
  %v878 = vadd.f32 %v861, %v876
  %v879 = vtanh.pop %v878
  %881 = vrot.lane.b32.xlu0 %v879, 96
  %v882 = vpop.permute.xlu0 %881
  %v884 = vsub.f32 %v786, %v882
  %886 = vrot.lane.b32.xlu0 %v884, 16
  %v887 = vpop.permute.xlu0 %886
  %v889 = vmul.f32 %v868, %v887
  %891 = vrot.lane.b32.xlu0 %v889, 16
  %v892 = vpop.permute.xlu0 %891
  %v894 = vadd.f32 %v879, %v892
  %s895 = scalar_lea.vmem [#allocation4], 10
  %v896 = vld [vmem:[%s895] sm:$0x3]
  %897 = vrot.lane.b32.xlu0 %v857, 80
  %v898 = vpop.permute.xlu0 %897
  %v900 = vadd.f32 %v896, %v898
  %v901 = vxor.u32 %v900, 2147483648
  %v902 = vmul.f32 %v901, 1.442695
  %v903 = vpow.pop %v902
  %v904 = vadd.f32 %v903, 1.0
  %v905 = vrcp.pop %v904
  %v906 = vmul.f32 1.0, %v905
  %907 = vrot.lane.b32.xlu0 %v857, 48
  %v908 = vpop.permute.xlu0 %907
  %v910 = vmul.f32 %v906, %v908
  %912 = vrot.lane.b32.xlu0 %v910, 32
  %v913 = vpop.permute.xlu0 %912
  %v915 = vadd.f32 %v896, %v913
  %v916 = vtanh.pop %v915
  %918 = vrot.lane.b32.xlu0 %v916, 112
  %v919 = vpop.permute.xlu0 %918
  %v921 = vsub.f32 %v786, %v919
  %v922 = vmul.f32 %v906, %v921
  %924 = vrot.lane.b32.xlu0 %v922, 16
  %v925 = vpop.permute.xlu0 %924
  %v927 = vadd.f32 %v916, %v925
  %929 = vrot.lane.b32.xlu0 %v894, 96
  %v930 = vpop.permute.xlu0 %929
  %s932 = scalar_lea.vmem %s8, 4
  %933 = vst.msk [vmem:[%s932] sm:$0x3] %vm617, %v930
  %935 = vrot.lane.b32.xlu0 %v927, 96
  %v936 = vpop.permute.xlu0 %935
  %s938 = scalar_lea.vmem %s64, 10
  %939 = vst.msk [vmem:[%s938] sm:$0x3] %vm617, %v936
  %940 = vrot.lane.b32.xlu0 %v927, 112
  %v941 = vpop.permute.xlu0 %940
  %v943 = vsel %vm628, %v930, %v941
  %v945 = vsel %vm472, %v943, 0
  %947 = vmatprep.subr.mxu0 0.0
  %948 = vmatpush1.msra.mxu0 %v460
  %949 = vmatprep.subr.mxu0 0.0
  %950 = vmatpush1.msra.mxu0 %v461
  %951 = vmatprep.subr.mxu0 0.0
  %952 = vmatpush1.msra.mxu0 %v462
  %953 = vmatprep.subr.mxu0 0.0
  %954 = vmatpush1.msra.mxu0 %v463
  %955 = vmatprep.subr.mxu0 0.0
  %956 = vmatpush1.msra.mxu0 0.0
  %957 = vmatprep.subr.mxu0 0.0
  %958 = vmatpush1.msra.mxu0 0.0
  %959 = vmatprep.subr.mxu0 0.0
  %960 = vmatpush1.msra.mxu0 0.0
  %961 = vmatprep.subr.mxu0 0.0
  %962 = vmatpush1.msra.mxu0 0.0
  %963 = vmatprep.subr.mxu0 0.0
  %964 = vmatpush1.msra.mxu0 0.0
  %965 = vmatprep.subr.mxu0 0.0
  %966 = vmatpush1.msra.mxu0 0.0
  %967 = vmatprep.subr.mxu0 0.0
  %968 = vmatpush1.msra.mxu0 0.0
  %969 = vmatprep.subr.mxu0 0.0
  %970 = vmatpush1.msra.mxu0 0.0
  %971 = vmatprep.subr.mxu0 0.0
  %972 = vmatpush1.msra.mxu0 0.0
  %973 = vmatprep.subr.mxu0 0.0
  %974 = vmatpush1.msra.mxu0 0.0
  %975 = vmatprep.subr.mxu0 0.0
  %976 = vmatpush1.msra.mxu0 0.0
  %977 = vmatprep.subr.mxu0 0.0
  %978 = vmatpush1.msra.mxu0 0.0
  %979 = vmatprep.subr.mxu0 0.0
  %980 = vmatpush1.msra.mxu0 0.0
  %981 = vmatprep.subr.mxu0 0.0
  %982 = vmatpush1.msra.mxu0 0.0
  %983 = vmatprep.subr.mxu0 0.0
  %984 = vmatpush1.msra.mxu0 0.0
  %985 = vmatprep.subr.mxu0 0.0
  %986 = vmatpush1.msra.mxu0 0.0
  %987 = vmatprep.subr.mxu0 0.0
  %988 = vmatpush1.msra.mxu0 0.0
  %989 = vmatprep.subr.mxu0 0.0
  %990 = vmatpush1.msra.mxu0 0.0
  %991 = vmatprep.subr.mxu0 0.0
  %992 = vmatpush1.msra.mxu0 0.0
  %993 = vmatprep.subr.mxu0 0.0
  %994 = vmatpush1.msra.mxu0 0.0
  %995 = vmatprep.subr.mxu0 0.0
  %996 = vmatpush1.msra.mxu0 0.0
  %997 = vmatprep.subr.mxu0 0.0
  %998 = vmatpush1.msra.mxu0 0.0
  %999 = vmatprep.subr.mxu0 0.0
  %1000 = vmatpush1.msra.mxu0 0.0
  %1001 = vmatprep.subr.mxu0 0.0
  %1002 = vmatpush1.msra.mxu0 0.0
  %1003 = vmatprep.subr.mxu0 0.0
  %1004 = vmatpush1.msra.mxu0 0.0
  %1005 = vmatprep.subr.mxu0 0.0
  %1006 = vmatpush1.msra.mxu0 0.0
  %1007 = vmatprep.subr.mxu0 0.0
  %1008 = vmatpush1.msra.mxu0 0.0
  %1009 = vmatprep.subr.mxu0 0.0
  %1010 = vmatpush1.msra.mxu0 0.0
  %1011 = vmatprep.mubr.f32.mxu0 0.0
  %1012 = vmatmul.mubr.f32.gmra.mrb[0].mxu0 %v945
  %v1013 = vpop.f32.mrb[0].mxu0
  %v1014 = vadd.f32 %v470, %v1013
  %v1015 = vpop.f32.mrb[0].mxu0
  %1016 = vdwg.mxu0
  %s1017 = scalar_lea.vmem [#allocation3], 6
  %v1018 = vld [vmem:[%s1017] sm:$0x3]
  %v1019 = vadd.f32 %v1018, %v1014
  %v1020 = vxor.u32 %v1019, 2147483648
  %v1021 = vmul.f32 %v1020, 1.442695
  %v1022 = vpow.pop %v1021
  %v1023 = vadd.f32 %v1022, 1.0
  %v1024 = vrcp.pop %v1023
  %v1025 = vmul.f32 1.0, %v1024
  %1027 = vrot.lane.b32.xlu0 %v1014, 96
  %v1028 = vpop.permute.xlu0 %1027
  %v1030 = vmul.f32 %v1025, %v1028
  %1032 = vrot.lane.b32.xlu0 %v1030, 32
  %v1033 = vpop.permute.xlu0 %1032
  %v1035 = vadd.f32 %v1018, %v1033
  %v1036 = vtanh.pop %v1035
  %1038 = vrot.lane.b32.xlu0 %v1036, 96
  %v1039 = vpop.permute.xlu0 %1038
  %v1041 = vsub.f32 %v943, %v1039
  %1043 = vrot.lane.b32.xlu0 %v1041, 16
  %v1044 = vpop.permute.xlu0 %1043
  %v1046 = vmul.f32 %v1025, %v1044
  %1048 = vrot.lane.b32.xlu0 %v1046, 16
  %v1049 = vpop.permute.xlu0 %1048
  %v1051 = vadd.f32 %v1036, %v1049
  %s1052 = scalar_lea.vmem [#allocation4], 8
  %v1053 = vld [vmem:[%s1052] sm:$0x3]
  %1054 = vrot.lane.b32.xlu0 %v1014, 80
  %v1055 = vpop.permute.xlu0 %1054
  %v1057 = vadd.f32 %v1053, %v1055
  %v1058 = vxor.u32 %v1057, 2147483648
  %v1059 = vmul.f32 %v1058, 1.442695
  %v1060 = vpow.pop %v1059
  %v1061 = vadd.f32 %v1060, 1.0
  %v1062 = vrcp.pop %v1061
  %v1063 = vmul.f32 1.0, %v1062
  %1064 = vrot.lane.b32.xlu0 %v1014, 48
  %v1065 = vpop.permute.xlu0 %1064
  %v1067 = vmul.f32 %v1063, %v1065
  %1069 = vrot.lane.b32.xlu0 %v1067, 32
  %v1070 = vpop.permute.xlu0 %1069
  %v1072 = vadd.f32 %v1053, %v1070
  %v1073 = vtanh.pop %v1072
  %1075 = vrot.lane.b32.xlu0 %v1073, 112
  %v1076 = vpop.permute.xlu0 %1075
  %v1078 = vsub.f32 %v943, %v1076
  %v1079 = vmul.f32 %v1063, %v1078
  %1081 = vrot.lane.b32.xlu0 %v1079, 16
  %v1082 = vpop.permute.xlu0 %1081
  %v1084 = vadd.f32 %v1073, %v1082
  %1086 = vrot.lane.b32.xlu0 %v1051, 96
  %v1087 = vpop.permute.xlu0 %1086
  %s1089 = scalar_lea.vmem %s8, 6
  %1090 = vst.msk [vmem:[%s1089] sm:$0x3] %vm617, %v1087
  %1092 = vrot.lane.b32.xlu0 %v1084, 96
  %v1093 = vpop.permute.xlu0 %1092
  %s1095 = scalar_lea.vmem %s64, 8
  %1096 = vst.msk [vmem:[%s1095] sm:$0x3] %vm617, %v1093
  %1097 = vrot.lane.b32.xlu0 %v1084, 112
  %v1098 = vpop.permute.xlu0 %1097
  %v1100 = vsel %vm628, %v1087, %v1098
  %v1102 = vsel %vm472, %v1100, 0
  %1104 = vmatprep.subr.mxu0 0.0
  %1105 = vmatpush1.msra.mxu0 %v460
  %1106 = vmatprep.subr.mxu0 0.0
  %1107 = vmatpush1.msra.mxu0 %v461
  %1108 = vmatprep.subr.mxu0 0.0
  %1109 = vmatpush1.msra.mxu0 %v462
  %1110 = vmatprep.subr.mxu0 0.0
  %1111 = vmatpush1.msra.mxu0 %v463
  %1112 = vmatprep.subr.mxu0 0.0
  %1113 = vmatpush1.msra.mxu0 0.0
  %1114 = vmatprep.subr.mxu0 0.0
  %1115 = vmatpush1.msra.mxu0 0.0
  %1116 = vmatprep.subr.mxu0 0.0
  %1117 = vmatpush1.msra.mxu0 0.0
  %1118 = vmatprep.subr.mxu0 0.0
  %1119 = vmatpush1.msra.mxu0 0.0
  %1120 = vmatprep.subr.mxu0 0.0
  %1121 = vmatpush1.msra.mxu0 0.0
  %1122 = vmatprep.subr.mxu0 0.0
  %1123 = vmatpush1.msra.mxu0 0.0
  %1124 = vmatprep.subr.mxu0 0.0
  %1125 = vmatpush1.msra.mxu0 0.0
  %1126 = vmatprep.subr.mxu0 0.0
  %1127 = vmatpush1.msra.mxu0 0.0
  %1128 = vmatprep.subr.mxu0 0.0
  %1129 = vmatpush1.msra.mxu0 0.0
  %1130 = vmatprep.subr.mxu0 0.0
  %1131 = vmatpush1.msra.mxu0 0.0
  %1132 = vmatprep.subr.mxu0 0.0
  %1133 = vmatpush1.msra.mxu0 0.0
  %1134 = vmatprep.subr.mxu0 0.0
  %1135 = vmatpush1.msra.mxu0 0.0
  %1136 = vmatprep.subr.mxu0 0.0
  %1137 = vmatpush1.msra.mxu0 0.0
  %1138 = vmatprep.subr.mxu0 0.0
  %1139 = vmatpush1.msra.mxu0 0.0
  %1140 = vmatprep.subr.mxu0 0.0
  %1141 = vmatpush1.msra.mxu0 0.0
  %1142 = vmatprep.subr.mxu0 0.0
  %1143 = vmatpush1.msra.mxu0 0.0
  %1144 = vmatprep.subr.mxu0 0.0
  %1145 = vmatpush1.msra.mxu0 0.0
  %1146 = vmatprep.subr.mxu0 0.0
  %1147 = vmatpush1.msra.mxu0 0.0
  %1148 = vmatprep.subr.mxu0 0.0
  %1149 = vmatpush1.msra.mxu0 0.0
  %1150 = vmatprep.subr.mxu0 0.0
  %1151 = vmatpush1.msra.mxu0 0.0
  %1152 = vmatprep.subr.mxu0 0.0
  %1153 = vmatpush1.msra.mxu0 0.0
  %1154 = vmatprep.subr.mxu0 0.0
  %1155 = vmatpush1.msra.mxu0 0.0
  %1156 = vmatprep.subr.mxu0 0.0
  %1157 = vmatpush1.msra.mxu0 0.0
  %1158 = vmatprep.subr.mxu0 0.0
  %1159 = vmatpush1.msra.mxu0 0.0
  %1160 = vmatprep.subr.mxu0 0.0
  %1161 = vmatpush1.msra.mxu0 0.0
  %1162 = vmatprep.subr.mxu0 0.0
  %1163 = vmatpush1.msra.mxu0 0.0
  %1164 = vmatprep.subr.mxu0 0.0
  %1165 = vmatpush1.msra.mxu0 0.0
  %1166 = vmatprep.subr.mxu0 0.0
  %1167 = vmatpush1.msra.mxu0 0.0
  %1168 = vmatprep.mubr.f32.mxu0 0.0
  %1169 = vmatmul.mubr.f32.gmra.mrb[0].mxu0 %v1102
  %v1170 = vpop.f32.mrb[0].mxu0
  %v1171 = vadd.f32 %v470, %v1170
  %v1172 = vpop.f32.mrb[0].mxu0
  %1173 = vdwg.mxu0
  %s1174 = scalar_lea.vmem [#allocation3], 8
  %v1175 = vld [vmem:[%s1174] sm:$0x3]
  %v1176 = vadd.f32 %v1175, %v1171
  %v1177 = vxor.u32 %v1176, 2147483648
  %v1178 = vmul.f32 %v1177, 1.442695
  %v1179 = vpow.pop %v1178
  %v1180 = vadd.f32 %v1179, 1.0
  %v1181 = vrcp.pop %v1180
  %v1182 = vmul.f32 1.0, %v1181
  %1184 = vrot.lane.b32.xlu0 %v1171, 96
  %v1185 = vpop.permute.xlu0 %1184
  %v1187 = vmul.f32 %v1182, %v1185
  %1189 = vrot.lane.b32.xlu0 %v1187, 32
  %v1190 = vpop.permute.xlu0 %1189
  %v1192 = vadd.f32 %v1175, %v1190
  %v1193 = vtanh.pop %v1192
  %1195 = vrot.lane.b32.xlu0 %v1193, 96
  %v1196 = vpop.permute.xlu0 %1195
  %v1198 = vsub.f32 %v1100, %v1196
  %1200 = vrot.lane.b32.xlu0 %v1198, 16
  %v1201 = vpop.permute.xlu0 %1200
  %v1203 = vmul.f32 %v1182, %v1201
  %1205 = vrot.lane.b32.xlu0 %v1203, 16
  %v1206 = vpop.permute.xlu0 %1205
  %v1208 = vadd.f32 %v1193, %v1206
  %s1209 = scalar_lea.vmem [#allocation4], 6
  %v1210 = vld [vmem:[%s1209] sm:$0x3]
  %1211 = vrot.lane.b32.xlu0 %v1171, 80
  %v1212 = vpop.permute.xlu0 %1211
  %v1214 = vadd.f32 %v1210, %v1212
  %v1215 = vxor.u32 %v1214, 2147483648
  %v1216 = vmul.f32 %v1215, 1.442695
  %v1217 = vpow.pop %v1216
  %v1218 = vadd.f32 %v1217, 1.0
  %v1219 = vrcp.pop %v1218
  %v1220 = vmul.f32 1.0, %v1219
  %1221 = vrot.lane.b32.xlu0 %v1171, 48
  %v1222 = vpop.permute.xlu0 %1221
  %v1224 = vmul.f32 %v1220, %v1222
  %1226 = vrot.lane.b32.xlu0 %v1224, 32
  %v1227 = vpop.permute.xlu0 %1226
  %v1229 = vadd.f32 %v1210, %v1227
  %v1230 = vtanh.pop %v1229
  %1232 = vrot.lane.b32.xlu0 %v1230, 112
  %v1233 = vpop.permute.xlu0 %1232
  %v1235 = vsub.f32 %v1100, %v1233
  %v1236 = vmul.f32 %v1220, %v1235
  %1238 = vrot.lane.b32.xlu0 %v1236, 16
  %v1239 = vpop.permute.xlu0 %1238
  %v1241 = vadd.f32 %v1230, %v1239
  %1243 = vrot.lane.b32.xlu0 %v1208, 96
  %v1244 = vpop.permute.xlu0 %1243
  %s1246 = scalar_lea.vmem %s8, 8
  %1247 = vst.msk [vmem:[%s1246] sm:$0x3] %vm617, %v1244
  %1249 = vrot.lane.b32.xlu0 %v1241, 96
  %v1250 = vpop.permute.xlu0 %1249
  %s1252 = scalar_lea.vmem %s64, 6
  %1253 = vst.msk [vmem:[%s1252] sm:$0x3] %vm617, %v1250
  %1254 = vrot.lane.b32.xlu0 %v1241, 112
  %v1255 = vpop.permute.xlu0 %1254
  %v1257 = vsel %vm628, %v1244, %v1255
  %v1259 = vsel %vm472, %v1257, 0
  %1261 = vmatprep.subr.mxu0 0.0
  %1262 = vmatpush1.msra.mxu0 %v460
  %1263 = vmatprep.subr.mxu0 0.0
  %1264 = vmatpush1.msra.mxu0 %v461
  %1265 = vmatprep.subr.mxu0 0.0
  %1266 = vmatpush1.msra.mxu0 %v462
  %1267 = vmatprep.subr.mxu0 0.0
  %1268 = vmatpush1.msra.mxu0 %v463
  %1269 = vmatprep.subr.mxu0 0.0
  %1270 = vmatpush1.msra.mxu0 0.0
  %1271 = vmatprep.subr.mxu0 0.0
  %1272 = vmatpush1.msra.mxu0 0.0
  %1273 = vmatprep.subr.mxu0 0.0
  %1274 = vmatpush1.msra.mxu0 0.0
  %1275 = vmatprep.subr.mxu0 0.0
  %1276 = vmatpush1.msra.mxu0 0.0
  %1277 = vmatprep.subr.mxu0 0.0
  %1278 = vmatpush1.msra.mxu0 0.0
  %1279 = vmatprep.subr.mxu0 0.0
  %1280 = vmatpush1.msra.mxu0 0.0
  %1281 = vmatprep.subr.mxu0 0.0
  %1282 = vmatpush1.msra.mxu0 0.0
  %1283 = vmatprep.subr.mxu0 0.0
  %1284 = vmatpush1.msra.mxu0 0.0
  %1285 = vmatprep.subr.mxu0 0.0
  %1286 = vmatpush1.msra.mxu0 0.0
  %1287 = vmatprep.subr.mxu0 0.0
  %1288 = vmatpush1.msra.mxu0 0.0
  %1289 = vmatprep.subr.mxu0 0.0
  %1290 = vmatpush1.msra.mxu0 0.0
  %1291 = vmatprep.subr.mxu0 0.0
  %1292 = vmatpush1.msra.mxu0 0.0
  %1293 = vmatprep.subr.mxu0 0.0
  %1294 = vmatpush1.msra.mxu0 0.0
  %1295 = vmatprep.subr.mxu0 0.0
  %1296 = vmatpush1.msra.mxu0 0.0
  %1297 = vmatprep.subr.mxu0 0.0
  %1298 = vmatpush1.msra.mxu0 0.0
  %1299 = vmatprep.subr.mxu0 0.0
  %1300 = vmatpush1.msra.mxu0 0.0
  %1301 = vmatprep.subr.mxu0 0.0
  %1302 = vmatpush1.msra.mxu0 0.0
  %1303 = vmatprep.subr.mxu0 0.0
  %1304 = vmatpush1.msra.mxu0 0.0
  %1305 = vmatprep.subr.mxu0 0.0
  %1306 = vmatpush1.msra.mxu0 0.0
  %1307 = vmatprep.subr.mxu0 0.0
  %1308 = vmatpush1.msra.mxu0 0.0
  %1309 = vmatprep.subr.mxu0 0.0
  %1310 = vmatpush1.msra.mxu0 0.0
  %1311 = vmatprep.subr.mxu0 0.0
  %1312 = vmatpush1.msra.mxu0 0.0
  %1313 = vmatprep.subr.mxu0 0.0
  %1314 = vmatpush1.msra.mxu0 0.0
  %1315 = vmatprep.subr.mxu0 0.0
  %1316 = vmatpush1.msra.mxu0 0.0
  %1317 = vmatprep.subr.mxu0 0.0
  %1318 = vmatpush1.msra.mxu0 0.0
  %1319 = vmatprep.subr.mxu0 0.0
  %1320 = vmatpush1.msra.mxu0 0.0
  %1321 = vmatprep.subr.mxu0 0.0
  %1322 = vmatpush1.msra.mxu0 0.0
  %1323 = vmatprep.subr.mxu0 0.0
  %1324 = vmatpush1.msra.mxu0 0.0
  %1325 = vmatprep.mubr.f32.mxu0 0.0
  %1326 = vmatmul.mubr.f32.gmra.mrb[0].mxu0 %v1259
  %v1327 = vpop.f32.mrb[0].mxu0
  %v1328 = vadd.f32 %v470, %v1327
  %v1329 = vpop.f32.mrb[0].mxu0
  %1330 = vdwg.mxu0
  %s1331 = scalar_lea.vmem [#allocation3], 10
  %v1332 = vld [vmem:[%s1331] sm:$0x3]
  %v1333 = vadd.f32 %v1332, %v1328
  %v1334 = vxor.u32 %v1333, 2147483648
  %v1335 = vmul.f32 %v1334, 1.442695
  %v1336 = vpow.pop %v1335
  %v1337 = vadd.f32 %v1336, 1.0
  %v1338 = vrcp.pop %v1337
  %v1339 = vmul.f32 1.0, %v1338
  %1341 = vrot.lane.b32.xlu0 %v1328, 96
  %v1342 = vpop.permute.xlu0 %1341
  %v1344 = vmul.f32 %v1339, %v1342
  %1346 = vrot.lane.b32.xlu0 %v1344, 32
  %v1347 = vpop.permute.xlu0 %1346
  %v1349 = vadd.f32 %v1332, %v1347
  %v1350 = vtanh.pop %v1349
  %1352 = vrot.lane.b32.xlu0 %v1350, 96
  %v1353 = vpop.permute.xlu0 %1352
  %v1355 = vsub.f32 %v1257, %v1353
  %1357 = vrot.lane.b32.xlu0 %v1355, 16
  %v1358 = vpop.permute.xlu0 %1357
  %v1360 = vmul.f32 %v1339, %v1358
  %1362 = vrot.lane.b32.xlu0 %v1360, 16
  %v1363 = vpop.permute.xlu0 %1362
  %v1365 = vadd.f32 %v1350, %v1363
  %s1366 = scalar_lea.vmem [#allocation4], 4
  %v1367 = vld [vmem:[%s1366] sm:$0x3]
  %1368 = vrot.lane.b32.xlu0 %v1328, 80
  %v1369 = vpop.permute.xlu0 %1368
  %v1371 = vadd.f32 %v1367, %v1369
  %v1372 = vxor.u32 %v1371, 2147483648
  %v1373 = vmul.f32 %v1372, 1.442695
  %v1374 = vpow.pop %v1373
  %v1375 = vadd.f32 %v1374, 1.0
  %v1376 = vrcp.pop %v1375
  %v1377 = vmul.f32 1.0, %v1376
  %1378 = vrot.lane.b32.xlu0 %v1328, 48
  %v1379 = vpop.permute.xlu0 %1378
  %v1381 = vmul.f32 %v1377, %v1379
  %1383 = vrot.lane.b32.xlu0 %v1381, 32
  %v1384 = vpop.permute.xlu0 %1383
  %v1386 = vadd.f32 %v1367, %v1384
  %v1387 = vtanh.pop %v1386
  %1389 = vrot.lane.b32.xlu0 %v1387, 112
  %v1390 = vpop.permute.xlu0 %1389
  %v1392 = vsub.f32 %v1257, %v1390
  %v1393 = vmul.f32 %v1377, %v1392
  %1395 = vrot.lane.b32.xlu0 %v1393, 16
  %v1396 = vpop.permute.xlu0 %1395
  %v1398 = vadd.f32 %v1387, %v1396
  %1400 = vrot.lane.b32.xlu0 %v1365, 96
  %v1401 = vpop.permute.xlu0 %1400
  %s1403 = scalar_lea.vmem %s8, 10
  %1404 = vst.msk [vmem:[%s1403] sm:$0x3] %vm617, %v1401
  %1406 = vrot.lane.b32.xlu0 %v1398, 96
  %v1407 = vpop.permute.xlu0 %1406
  %s1409 = scalar_lea.vmem %s64, 4
  %1410 = vst.msk [vmem:[%s1409] sm:$0x3] %vm617, %v1407
  %1411 = vrot.lane.b32.xlu0 %v1398, 112
  %v1412 = vpop.permute.xlu0 %1411
  %v1414 = vsel %vm628, %v1401, %v1412
  %v1416 = vsel %vm472, %v1414, 0
  %1418 = vmatprep.subr.mxu0 0.0
  %1419 = vmatpush1.msra.mxu0 %v460
  %1420 = vmatprep.subr.mxu0 0.0
  %1421 = vmatpush1.msra.mxu0 %v461
  %1422 = vmatprep.subr.mxu0 0.0
  %1423 = vmatpush1.msra.mxu0 %v462
  %1424 = vmatprep.subr.mxu0 0.0
  %1425 = vmatpush1.msra.mxu0 %v463
  %1426 = vmatprep.subr.mxu0 0.0
  %1427 = vmatpush1.msra.mxu0 0.0
  %1428 = vmatprep.subr.mxu0 0.0
  %1429 = vmatpush1.msra.mxu0 0.0
  %1430 = vmatprep.subr.mxu0 0.0
  %1431 = vmatpush1.msra.mxu0 0.0
  %1432 = vmatprep.subr.mxu0 0.0
  %1433 = vmatpush1.msra.mxu0 0.0
  %1434 = vmatprep.subr.mxu0 0.0
  %1435 = vmatpush1.msra.mxu0 0.0
  %1436 = vmatprep.subr.mxu0 0.0
  %1437 = vmatpush1.msra.mxu0 0.0
  %1438 = vmatprep.subr.mxu0 0.0
  %1439 = vmatpush1.msra.mxu0 0.0
  %1440 = vmatprep.subr.mxu0 0.0
  %1441 = vmatpush1.msra.mxu0 0.0
  %1442 = vmatprep.subr.mxu0 0.0
  %1443 = vmatpush1.msra.mxu0 0.0
  %1444 = vmatprep.subr.mxu0 0.0
  %1445 = vmatpush1.msra.mxu0 0.0
  %1446 = vmatprep.subr.mxu0 0.0
  %1447 = vmatpush1.msra.mxu0 0.0
  %1448 = vmatprep.subr.mxu0 0.0
  %1449 = vmatpush1.msra.mxu0 0.0
  %1450 = vmatprep.subr.mxu0 0.0
  %1451 = vmatpush1.msra.mxu0 0.0
  %1452 = vmatprep.subr.mxu0 0.0
  %1453 = vmatpush1.msra.mxu0 0.0
  %1454 = vmatprep.subr.mxu0 0.0
  %1455 = vmatpush1.msra.mxu0 0.0
  %1456 = vmatprep.subr.mxu0 0.0
  %1457 = vmatpush1.msra.mxu0 0.0
  %1458 = vmatprep.subr.mxu0 0.0
  %1459 = vmatpush1.msra.mxu0 0.0
  %1460 = vmatprep.subr.mxu0 0.0
  %1461 = vmatpush1.msra.mxu0 0.0
  %1462 = vmatprep.subr.mxu0 0.0
  %1463 = vmatpush1.msra.mxu0 0.0
  %1464 = vmatprep.subr.mxu0 0.0
  %1465 = vmatpush1.msra.mxu0 0.0
  %1466 = vmatprep.subr.mxu0 0.0
  %1467 = vmatpush1.msra.mxu0 0.0
  %1468 = vmatprep.subr.mxu0 0.0
  %1469 = vmatpush1.msra.mxu0 0.0
  %1470 = vmatprep.subr.mxu0 0.0
  %1471 = vmatpush1.msra.mxu0 0.0
  %1472 = vmatprep.subr.mxu0 0.0
  %1473 = vmatpush1.msra.mxu0 0.0
  %1474 = vmatprep.subr.mxu0 0.0
  %1475 = vmatpush1.msra.mxu0 0.0
  %1476 = vmatprep.subr.mxu0 0.0
  %1477 = vmatpush1.msra.mxu0 0.0
  %1478 = vmatprep.subr.mxu0 0.0
  %1479 = vmatpush1.msra.mxu0 0.0
  %1480 = vmatprep.subr.mxu0 0.0
  %1481 = vmatpush1.msra.mxu0 0.0
  %1482 = vmatprep.mubr.f32.mxu0 0.0
  %1483 = vmatmul.mubr.f32.gmra.mrb[0].mxu0 %v1416
  %v1484 = vpop.f32.mrb[0].mxu0
  %v1485 = vadd.f32 %v470, %v1484
  %v1486 = vpop.f32.mrb[0].mxu0
  %1487 = vdwg.mxu0
  %s1488 = scalar_lea.vmem [#allocation3], 12
  %v1489 = vld [vmem:[%s1488] sm:$0x3]
  %v1490 = vadd.f32 %v1489, %v1485
  %v1491 = vxor.u32 %v1490, 2147483648
  %v1492 = vmul.f32 %v1491, 1.442695
  %v1493 = vpow.pop %v1492
  %v1494 = vadd.f32 %v1493, 1.0
  %v1495 = vrcp.pop %v1494
  %v1496 = vmul.f32 1.0, %v1495
  %1498 = vrot.lane.b32.xlu0 %v1485, 96
  %v1499 = vpop.permute.xlu0 %1498
  %v1501 = vmul.f32 %v1496, %v1499
  %1503 = vrot.lane.b32.xlu0 %v1501, 32
  %v1504 = vpop.permute.xlu0 %1503
  %v1506 = vadd.f32 %v1489, %v1504
  %v1507 = vtanh.pop %v1506
  %1509 = vrot.lane.b32.xlu0 %v1507, 96
  %v1510 = vpop.permute.xlu0 %1509
  %v1512 = vsub.f32 %v1414, %v1510
  %1514 = vrot.lane.b32.xlu0 %v1512, 16
  %v1515 = vpop.permute.xlu0 %1514
  %v1517 = vmul.f32 %v1496, %v1515
  %1519 = vrot.lane.b32.xlu0 %v1517, 16
  %v1520 = vpop.permute.xlu0 %1519
  %v1522 = vadd.f32 %v1507, %v1520
  %s1523 = scalar_lea.vmem [#allocation4], 2
  %v1524 = vld [vmem:[%s1523] sm:$0x3]
  %1525 = vrot.lane.b32.xlu0 %v1485, 80
  %v1526 = vpop.permute.xlu0 %1525
  %v1528 = vadd.f32 %v1524, %v1526
  %v1529 = vxor.u32 %v1528, 2147483648
  %v1530 = vmul.f32 %v1529, 1.442695
  %v1531 = vpow.pop %v1530
  %v1532 = vadd.f32 %v1531, 1.0
  %v1533 = vrcp.pop %v1532
  %v1534 = vmul.f32 1.0, %v1533
  %1535 = vrot.lane.b32.xlu0 %v1485, 48
  %v1536 = vpop.permute.xlu0 %1535
  %v1538 = vmul.f32 %v1534, %v1536
  %1540 = vrot.lane.b32.xlu0 %v1538, 32
  %v1541 = vpop.permute.xlu0 %1540
  %v1543 = vadd.f32 %v1524, %v1541
  %v1544 = vtanh.pop %v1543
  %1546 = vrot.lane.b32.xlu0 %v1544, 112
  %v1547 = vpop.permute.xlu0 %1546
  %v1549 = vsub.f32 %v1414, %v1547
  %v1550 = vmul.f32 %v1534, %v1549
  %1552 = vrot.lane.b32.xlu0 %v1550, 16
  %v1553 = vpop.permute.xlu0 %1552
  %v1555 = vadd.f32 %v1544, %v1553
  %1557 = vrot.lane.b32.xlu0 %v1522, 96
  %v1558 = vpop.permute.xlu0 %1557
  %s1560 = scalar_lea.vmem %s8, 12
  %1561 = vst.msk [vmem:[%s1560] sm:$0x3] %vm617, %v1558
  %1563 = vrot.lane.b32.xlu0 %v1555, 96
  %v1564 = vpop.permute.xlu0 %1563
  %s1566 = scalar_lea.vmem %s64, 2
  %1567 = vst.msk [vmem:[%s1566] sm:$0x3] %vm617, %v1564
  %1568 = vrot.lane.b32.xlu0 %v1555, 112
  %v1569 = vpop.permute.xlu0 %1568
  %v1571 = vsel %vm628, %v1558, %v1569
  %v1573 = vsel %vm472, %v1571, 0
  %1575 = vmatprep.subr.mxu0 0.0
  %1576 = vmatpush1.msra.mxu0 %v460
  %1577 = vmatprep.subr.mxu0 0.0
  %1578 = vmatpush1.msra.mxu0 %v461
  %1579 = vmatprep.subr.mxu0 0.0
  %1580 = vmatpush1.msra.mxu0 %v462
  %1581 = vmatprep.subr.mxu0 0.0
  %1582 = vmatpush1.msra.mxu0 %v463
  %1583 = vmatprep.subr.mxu0 0.0
  %1584 = vmatpush1.msra.mxu0 0.0
  %1585 = vmatprep.subr.mxu0 0.0
  %1586 = vmatpush1.msra.mxu0 0.0
  %1587 = vmatprep.subr.mxu0 0.0
  %1588 = vmatpush1.msra.mxu0 0.0
  %1589 = vmatprep.subr.mxu0 0.0
  %1590 = vmatpush1.msra.mxu0 0.0
  %1591 = vmatprep.subr.mxu0 0.0
  %1592 = vmatpush1.msra.mxu0 0.0
  %1593 = vmatprep.subr.mxu0 0.0
  %1594 = vmatpush1.msra.mxu0 0.0
  %1595 = vmatprep.subr.mxu0 0.0
  %1596 = vmatpush1.msra.mxu0 0.0
  %1597 = vmatprep.subr.mxu0 0.0
  %1598 = vmatpush1.msra.mxu0 0.0
  %1599 = vmatprep.subr.mxu0 0.0
  %1600 = vmatpush1.msra.mxu0 0.0
  %1601 = vmatprep.subr.mxu0 0.0
  %1602 = vmatpush1.msra.mxu0 0.0
  %1603 = vmatprep.subr.mxu0 0.0
  %1604 = vmatpush1.msra.mxu0 0.0
  %1605 = vmatprep.subr.mxu0 0.0
  %1606 = vmatpush1.msra.mxu0 0.0
  %1607 = vmatprep.subr.mxu0 0.0
  %1608 = vmatpush1.msra.mxu0 0.0
  %1609 = vmatprep.subr.mxu0 0.0
  %1610 = vmatpush1.msra.mxu0 0.0
  %1611 = vmatprep.subr.mxu0 0.0
  %1612 = vmatpush1.msra.mxu0 0.0
  %1613 = vmatprep.subr.mxu0 0.0
  %1614 = vmatpush1.msra.mxu0 0.0
  %1615 = vmatprep.subr.mxu0 0.0
  %1616 = vmatpush1.msra.mxu0 0.0
  %1617 = vmatprep.subr.mxu0 0.0
  %1618 = vmatpush1.msra.mxu0 0.0
  %1619 = vmatprep.subr.mxu0 0.0
  %1620 = vmatpush1.msra.mxu0 0.0
  %1621 = vmatprep.subr.mxu0 0.0
  %1622 = vmatpush1.msra.mxu0 0.0
  %1623 = vmatprep.subr.mxu0 0.0
  %1624 = vmatpush1.msra.mxu0 0.0
  %1625 = vmatprep.subr.mxu0 0.0
  %1626 = vmatpush1.msra.mxu0 0.0
  %1627 = vmatprep.subr.mxu0 0.0
  %1628 = vmatpush1.msra.mxu0 0.0
  %1629 = vmatprep.subr.mxu0 0.0
  %1630 = vmatpush1.msra.mxu0 0.0
  %1631 = vmatprep.subr.mxu0 0.0
  %1632 = vmatpush1.msra.mxu0 0.0
  %1633 = vmatprep.subr.mxu0 0.0
  %1634 = vmatpush1.msra.mxu0 0.0
  %1635 = vmatprep.subr.mxu0 0.0
  %1636 = vmatpush1.msra.mxu0 0.0
  %1637 = vmatprep.subr.mxu0 0.0
  %1638 = vmatpush1.msra.mxu0 0.0
  %1639 = vmatprep.mubr.f32.mxu0 0.0
  %1640 = vmatmul.mubr.f32.gmra.mrb[0].mxu0 %v1573
  %v1641 = vpop.f32.mrb[0].mxu0
  %v1642 = vadd.f32 %v470, %v1641
  %v1643 = vpop.f32.mrb[0].mxu0
  %1644 = vdwg.mxu0
  %s1645 = scalar_lea.vmem [#allocation3], 14
  %v1646 = vld [vmem:[%s1645] sm:$0x3]
  %v1647 = vadd.f32 %v1646, %v1642
  %v1648 = vxor.u32 %v1647, 2147483648
  %v1649 = vmul.f32 %v1648, 1.442695
  %v1650 = vpow.pop %v1649
  %v1651 = vadd.f32 %v1650, 1.0
  %v1652 = vrcp.pop %v1651
  %v1653 = vmul.f32 1.0, %v1652
  %1655 = vrot.lane.b32.xlu0 %v1642, 96
  %v1656 = vpop.permute.xlu0 %1655
  %v1658 = vmul.f32 %v1653, %v1656
  %1660 = vrot.lane.b32.xlu0 %v1658, 32
  %v1661 = vpop.permute.xlu0 %1660
  %v1663 = vadd.f32 %v1646, %v1661
  %v1664 = vtanh.pop %v1663
  %1666 = vrot.lane.b32.xlu0 %v1664, 96
  %v1667 = vpop.permute.xlu0 %1666
  %v1669 = vsub.f32 %v1571, %v1667
  %1671 = vrot.lane.b32.xlu0 %v1669, 16
  %v1672 = vpop.permute.xlu0 %1671
  %v1674 = vmul.f32 %v1653, %v1672
  %1676 = vrot.lane.b32.xlu0 %v1674, 16
  %v1677 = vpop.permute.xlu0 %1676
  %v1679 = vadd.f32 %v1664, %v1677
  %v1680 = vld [vmem:[#allocation4] sm:$0x3]
  %1681 = vrot.lane.b32.xlu0 %v1642, 80
  %v1682 = vpop.permute.xlu0 %1681
  %v1684 = vadd.f32 %v1680, %v1682
  %v1685 = vxor.u32 %v1684, 2147483648
  %v1686 = vmul.f32 %v1685, 1.442695
  %v1687 = vpow.pop %v1686
  %v1688 = vadd.f32 %v1687, 1.0
  %v1689 = vrcp.pop %v1688
  %v1690 = vmul.f32 1.0, %v1689
  %1691 = vrot.lane.b32.xlu0 %v1642, 48
  %v1692 = vpop.permute.xlu0 %1691
  %v1694 = vmul.f32 %v1690, %v1692
  %1696 = vrot.lane.b32.xlu0 %v1694, 32
  %v1697 = vpop.permute.xlu0 %1696
  %v1699 = vadd.f32 %v1680, %v1697
  %v1700 = vtanh.pop %v1699
  %1702 = vrot.lane.b32.xlu0 %v1700, 112
  %v1703 = vpop.permute.xlu0 %1702
  %v1705 = vsub.f32 %v1571, %v1703
  %v1706 = vmul.f32 %v1690, %v1705
  %1708 = vrot.lane.b32.xlu0 %v1706, 16
  %v1709 = vpop.permute.xlu0 %1708
  %v1711 = vadd.f32 %v1700, %v1709
  %1713 = vrot.lane.b32.xlu0 %v1679, 96
  %v1714 = vpop.permute.xlu0 %1713
  %s1716 = scalar_lea.vmem %s8, 14
  %1717 = vst.msk [vmem:[%s1716] sm:$0x3] %vm617, %v1714
  %1719 = vrot.lane.b32.xlu0 %v1711, 96
  %v1720 = vpop.permute.xlu0 %1719
  %1722 = vst.msk [vmem:[%s64] sm:$0x3] %vm617, %v1720
  %1723 = vrot.lane.b32.xlu0 %v1711, 112
  %v1724 = vpop.permute.xlu0 %1723
  %v1726 = vsel %vm628, %v1714, %v1724
  %vm1727 = vcmask 254976
  %1728 = vst.msk [vmem:[#allocation2] sm:$0x3] %vm1727, %v1726
  %s1729 = ssub.s32 0, 0
  %s1730 = smul.u32 8, %s1729
  %p1731 = scmp.lt.s32.totalorder %s1730, 7
  %s1732 = scalar_select %p1731, %s1730, 7
  %s1733 = smul.addr %s1732, 2
  %s1734 = scalar_lea.vmem %s9, %s1733
  // Predicated region
  $region38: #{generic_rnn_forward.2} parent=0 // pred_check
    _
  $region39: #{generic_rnn_forward.2} parent=0 // pred_check_branch
    %1736 = sbr.rel (0) target = $region41
  $region40: #{generic_rnn_forward.2} parent=0 // pred_region
    _
  $region41: #{generic_rnn_forward.2} parent=0 // pred_fallthru
    _
  // Predicated region
  $region42: #{generic_rnn_forward.2} parent=0 // pred_check
    _
  $region43: #{generic_rnn_forward.2} parent=0 // pred_check_branch
    %1738 = sbr.rel (0) target = $region45
  $region44: #{generic_rnn_forward.2} parent=0 // pred_region
    %s1739 = ssub.s32 0, 0
    %s1740 = smul.u32 8, %s1739
  $region45: #{generic_rnn_forward.2} parent=0 // pred_fallthru
    _
  // Predicated region
  $region46: #{generic_rnn_forward.2} parent=0 // pred_check
    _
  $region47: #{generic_rnn_forward.2} parent=0 // pred_check_branch
    %1742 = sbr.rel (0) target = $region49
  $region48: #{generic_rnn_forward.2} parent=0 // pred_region
    _
  $region49: #{generic_rnn_forward.2} parent=0 // pred_fallthru
    _
  // Predicated region
  $region50: #{generic_rnn_forward.2} parent=0 // pred_check
    _
  $region51: #{generic_rnn_forward.2} parent=0 // pred_check_branch
    %1744 = sbr.rel (0) target = $region53
  $region52: #{generic_rnn_forward.2} parent=0 // pred_region
    %s1745 = ssub.s32 0, 0
    %s1746 = smul.u32 8, %s1745
    %p1747 = scmp.lt.s32.totalorder %s1746, 7
    %s1748 = scalar_select %p1747, %s1746, 7
    %s1749 = smul.addr %s1748, 2
    %s1750 = scalar_lea.vmem %s9, %s1749
  $region53: #{generic_rnn_forward.2} parent=0 // pred_fallthru
    _

</llo_original>
